<compile_context>
chip_gen: v5e
topology: v5e:2x2
jax: 0.10.0
libtpu: 0.0.40
codegen_flags: <defaults>
</compile_context>

<pallas_src>
import functools

import jax
import jax.numpy as jnp
from jax.experimental import pallas as pl
from jax.experimental.pallas import tpu as pltpu

_VMEM_LIMIT = 48 * 1024 * 1024  # above the 16/32 MiB scoped defaults, below v7x 64 MiB


def _round_up(v, m):
    return (v + m - 1) // m * m


# ----------------------------------------------------------------------------- #
# Generic row-tiled linear kernels (bf16 operands, f32 accumulation)
# ----------------------------------------------------------------------------- #
def _linear_kernel(x_ref, w_ref, b_ref, o_ref):
    o_ref[...] = (
        jnp.dot(x_ref[...], w_ref[...], preferred_element_type=jnp.float32)
        + b_ref[...]
    )


def pallas_linear(x, w, b, *, tile_rows=256):
    """y = x @ w + b, gridded over rows (double-buffered DMA, megacore parallel)."""
    lead = x.shape[:-1]
    din, dout = w.shape
    x2 = x.reshape(-1, din)
    r = x2.shape[0]
    tr = min(tile_rows, _round_up(r, 8))
    rp = _round_up(r, tr)
    if rp != r:
        x2 = jnp.pad(x2, ((0, rp - r), (0, 0)))
    out = pl.pallas_call(
        _linear_kernel,
        grid=(rp // tr,),
        in_specs=[
            pl.BlockSpec((tr, din), lambda i: (i, 0)),
            pl.BlockSpec((din, dout), lambda i: (0, 0)),
            pl.BlockSpec((1, dout), lambda i: (0, 0)),
        ],
        out_specs=pl.BlockSpec((tr, dout), lambda i: (i, 0)),
        out_shape=jax.ShapeDtypeStruct((rp, dout), jnp.float32),
        compiler_params=pltpu.CompilerParams(
            dimension_semantics=("parallel",), vmem_limit_bytes=_VMEM_LIMIT),
    )(x2.astype(jnp.bfloat16), w.astype(jnp.bfloat16),
      b.reshape(1, -1).astype(jnp.float32))
    return out[:r].reshape(*lead, dout)


def _dual_linear_kernel(x1_ref, w1_ref, b1_ref, x2_ref, w2_ref, b2_ref,
                        o1_ref, o2_ref):
    o1_ref[...] = (jnp.dot(x1_ref[...], w1_ref[...],
                           preferred_element_type=jnp.float32) + b1_ref[...])
    o2_ref[...] = (jnp.dot(x2_ref[...], w2_ref[...],
                           preferred_element_type=jnp.float32) + b2_ref[...])


def pallas_dual_linear(x1, w1, b1, x2, w2, b2, *, tile_rows=256):
    """Two row-aligned linears fused into one pallas_call (q and k|v projections)."""
    lead = x1.shape[:-1]
    d1i, d1o = w1.shape
    d2i, d2o = w2.shape
    a1 = x1.reshape(-1, d1i)
    a2 = x2.reshape(-1, d2i)
    r = a1.shape[0]
    tr = min(tile_rows, _round_up(r, 8))
    rp = _round_up(r, tr)
    if rp != r:
        a1 = jnp.pad(a1, ((0, rp - r), (0, 0)))
        a2 = jnp.pad(a2, ((0, rp - r), (0, 0)))
    o1, o2 = pl.pallas_call(
        _dual_linear_kernel,
        grid=(rp // tr,),
        in_specs=[
            pl.BlockSpec((tr, d1i), lambda i: (i, 0)),
            pl.BlockSpec((d1i, d1o), lambda i: (0, 0)),
            pl.BlockSpec((1, d1o), lambda i: (0, 0)),
            pl.BlockSpec((tr, d2i), lambda i: (i, 0)),
            pl.BlockSpec((d2i, d2o), lambda i: (0, 0)),
            pl.BlockSpec((1, d2o), lambda i: (0, 0)),
        ],
        out_specs=[pl.BlockSpec((tr, d1o), lambda i: (i, 0)),
                   pl.BlockSpec((tr, d2o), lambda i: (i, 0))],
        out_shape=(jax.ShapeDtypeStruct((rp, d1o), jnp.float32),
                   jax.ShapeDtypeStruct((rp, d2o), jnp.float32)),
        compiler_params=pltpu.CompilerParams(
            dimension_semantics=("parallel",), vmem_limit_bytes=_VMEM_LIMIT),
    )(a1.astype(jnp.bfloat16), w1.astype(jnp.bfloat16), b1.reshape(1, -1).astype(jnp.float32),
      a2.astype(jnp.bfloat16), w2.astype(jnp.bfloat16), b2.reshape(1, -1).astype(jnp.float32))
    return o1[:r].reshape(*lead, d1o), o2[:r].reshape(*lead, d2o)


# ----------------------------------------------------------------------------- #
# Fused attention: two BN-stats passes + one apply pass, all gridded over M tiles
# ----------------------------------------------------------------------------- #
def _row_mask(i, tm, kn, m_rows):
    rid = jax.lax.broadcasted_iota(jnp.int32, (tm * kn, 1), 0) + i * (tm * kn)
    return rid < (m_rows * kn)


def _pos_hidden(rp_ref, pw1_ref, pb1_ref):
    # (rows, 3) bf16 @ (3, Hp) bf16 -> f32
    return (jnp.dot(rp_ref[...], pw1_ref[...],
                    preferred_element_type=jnp.float32) + pb1_ref[...])


def _pos_mlp(rp_ref, pw1_ref, pb1_ref, pss_ref, pw2_ref, pb2_ref):
    # pos_fc: Linear(3,Hp) -> BN (folded scale/shift) -> ReLU -> Linear(Hp,dim)
    h1 = _pos_hidden(rp_ref, pw1_ref, pb1_ref)
    h1 = jnp.maximum(h1 * pss_ref[0:1, :] + pss_ref[1:2, :], 0.0)
    return (jnp.dot(h1.astype(jnp.bfloat16), pw2_ref[...],
                    preferred_element_type=jnp.float32) + pb2_ref[...])


def _attn_hidden(rp_ref, q_ref, k_ref, pw1_ref, pb1_ref, pss_ref, pw2_ref, pb2_ref,
                 aw1_ref, ab1_ref, tm, kn):
    d = q_ref.shape[-1]
    pos = _pos_mlp(rp_ref, pw1_ref, pb1_ref, pss_ref, pw2_ref, pb2_ref)   # (tm*kn, d)
    pos3 = pos.reshape(tm, kn, d)
    # q broadcast along K happens here, inside the kernel (no q_rep in HBM).
    a3 = k_ref[...].astype(jnp.float32).reshape(tm, kn, d) - q_ref[...] + pos3
    h2 = (jnp.dot(a3.reshape(tm * kn, d).astype(jnp.bfloat16), aw1_ref[...],
                  preferred_element_type=jnp.float32) + ab1_ref[...])
    return h2, pos3


def _pos_stats_kernel(rp_ref, pw1_ref, pb1_ref, pg_ref, pbe_ref, out_ref, acc_ref,
                      *, tm, kn, m_rows, eps):
    i = pl.program_id(0)

    @pl.when(i == 0)
    def _init():
        acc_ref[...] = jnp.zeros_like(acc_ref)

    h1 = _pos_hidden(rp_ref, pw1_ref, pb1_ref)
    h1 = jnp.where(_row_mask(i, tm, kn, m_rows), h1, 0.0)   # ignore padded rows
    acc_ref[0:1, :] += jnp.sum(h1, axis=0, keepdims=True)
    acc_ref[1:2, :] += jnp.sum(h1 * h1, axis=0, keepdims=True)

    @pl.when(i == pl.num_programs(0) - 1)
    def _fin():
        cnt = jnp.float32(m_rows * kn)
        mean = acc_ref[0:1, :] / cnt
        var = acc_ref[1:2, :] / cnt - mean * mean            # biased, like torch BN
        scale = pg_ref[...] * jax.lax.rsqrt(var + eps)
        out_ref[0:1, :] = scale
        out_ref[1:2, :] = pbe_ref[...] - mean * scale


def _attn_stats_kernel(rp_ref, q_ref, k_ref, pw1_ref, pb1_ref, pss_ref, pw2_ref,
                       pb2_ref, aw1_ref, ab1_ref, ag_ref, abe_ref, out_ref, acc_ref,
                       *, tm, kn, m_rows, eps):
    i = pl.program_id(0)

    @pl.when(i == 0)
    def _init():
        acc_ref[...] = jnp.zeros_like(acc_ref)

    h2, _ = _attn_hidden(rp_ref, q_ref, k_ref, pw1_ref, pb1_ref, pss_ref,
                         pw2_ref, pb2_ref, aw1_ref, ab1_ref, tm, kn)
    h2 = jnp.where(_row_mask(i, tm, kn, m_rows), h2, 0.0)
    acc_ref[0:1, :] += jnp.sum(h2, axis=0, keepdims=True)
    acc_ref[1:2, :] += jnp.sum(h2 * h2, axis=0, keepdims=True)

    @pl.when(i == pl.num_programs(0) - 1)
    def _fin():
        cnt = jnp.float32(m_rows * kn)
        mean = acc_ref[0:1, :] / cnt
        var = acc_ref[1:2, :] / cnt - mean * mean
        scale = ag_ref[...] * jax.lax.rsqrt(var + eps)
        out_ref[0:1, :] = scale
        out_ref[1:2, :] = abe_ref[...] - mean * scale


def _attn_apply_kernel(rp_ref, q_ref, k_ref, v_ref, res_ref,
                       pw1_ref, pb1_ref, pss_ref, pw2_ref, pb2_ref,
                       aw1_ref, ab1_ref, ass_ref, aw2_ref, ab2_ref,
                       wd_ref, bd_ref, we_ref, be_ref,
                       dec_ref, enc_ref, *, tm, kn):
    d = q_ref.shape[-1]
    h2, pos3 = _attn_hidden(rp_ref, q_ref, k_ref, pw1_ref, pb1_ref, pss_ref,
                            pw2_ref, pb2_ref, aw1_ref, ab1_ref, tm, kn)
    h2 = jnp.maximum(h2 * ass_ref[0:1, :] + ass_ref[1:2, :], 0.0)
    logits = (jnp.dot(h2.astype(jnp.bfloat16), aw2_ref[...],
                      preferred_element_type=jnp.float32) + ab2_ref[...])
    logits3 = logits.reshape(tm, kn, d)

    # numerically-stable softmax over the neighbour (K) axis, f32 on the VPU/EUP
    lmax = jnp.max(logits3, axis=1, keepdims=True)
    ex = jnp.exp(logits3 - lmax)
    attn = ex * pl.reciprocal(jnp.sum(ex, axis=1, keepdims=True), approx=True)

    v3 = v_ref[...].reshape(tm, kn, d)
    xo = jnp.sum((v3 + pos3) * attn, axis=1)                 # (tm, d) f32

    # fused post_fc1 (+ residual) / post_fc2 — no (M, dim) HBM round trip
    xo_b = xo.astype(jnp.bfloat16)
    dec_ref[...] = (jnp.dot(xo_b, wd_ref[...], preferred_element_type=jnp.float32)
                    + bd_ref[...] + res_ref[...])
    enc_ref[...] = (jnp.dot(xo_b, we_ref[...], preferred_element_type=jnp.float32)
                    + be_ref[...])


def fused_attention(q, knn_k, knn_v, rel_pos, residue, pp, ap, post1, post2,
                    *, eps=1e-5, tile_m=128):
    B, N, Kn, D = knn_k.shape
    M = B * N
    Hp = pp["w1"].shape[1]
    Ha = ap["w1"].shape[1]
    in1 = post1[0].shape[1]
    in2 = post2[0].shape[1]

    # NOTE: halve tile_m for v7x (64 MiB VMEM) at very large N*K if needed.
    tm = min(tile_m, _round_up(M, 8))
    Mp = _round_up(M, tm)
    pad = Mp - M
    grid = (Mp // tm,)

    q3 = q.reshape(M, 1, D).astype(jnp.float32)               # broadcast along K in-kernel
    k2 = knn_k.reshape(M * Kn, D).astype(jnp.bfloat16)        # matmul-only operand -> bf16
    v2 = knn_v.reshape(M * Kn, D).astype(jnp.float32)         # elementwise path stays f32
    rp2 = rel_pos.reshape(M * Kn, 3).astype(jnp.bfloat16)
    res2 = residue.reshape(M, in1).astype(jnp.float32)
    if pad:
        q3 = jnp.pad(q3, ((0, pad), (0, 0), (0, 0)))
        k2 = jnp.pad(k2, ((0, pad * Kn), (0, 0)))
        v2 = jnp.pad(v2, ((0, pad * Kn), (0, 0)))
        rp2 = jnp.pad(rp2, ((0, pad * Kn), (0, 0)))
        res2 = jnp.pad(res2, ((0, pad), (0, 0)))

    bf = lambda a: a.astype(jnp.bfloat16)
    f32r = lambda a: a.reshape(1, -1).astype(jnp.float32)
    pw1, pb1 = bf(pp["w1"]), f32r(pp["b1"])
    pg, pbe = f32r(pp["gamma"]), f32r(pp["beta"])
    pw2, pb2 = bf(pp["w2"]), f32r(pp["b2"])
    aw1, ab1 = bf(ap["w1"]), f32r(ap["b1"])
    ag, abe = f32r(ap["gamma"]), f32r(ap["beta"])
    aw2, ab2 = bf(ap["w2"]), f32r(ap["b2"])
    wd, bd = bf(post1[0]), f32r(post1[1])
    we, be = bf(post2[0]), f32r(post2[1])

    full = lambda shape: pl.BlockSpec(shape, lambda i: (0,) * len(shape))
    rows2 = lambda c: pl.BlockSpec((tm * Kn, c), lambda i: (i, 0))
    qspec = pl.BlockSpec((tm, 1, D), lambda i: (i, 0, 0))

    cp_acc = pltpu.CompilerParams(dimension_semantics=("arbitrary",),
                                  vmem_limit_bytes=_VMEM_LIMIT)
    cp_par = pltpu.CompilerParams(dimension_semantics=("parallel",),
                                  vmem_limit_bytes=_VMEM_LIMIT)

    # pass 1: pos-BN batch statistics -> folded (scale, shift)
    pss = pl.pallas_call(
        functools.partial(_pos_stats_kernel, tm=tm, kn=Kn, m_rows=M, eps=eps),
        grid=grid,
        in_specs=[rows2(3), full((3, Hp)), full((1, Hp)), full((1, Hp)), full((1, Hp))],
        out_specs=full((2, Hp)),
        out_shape=jax.ShapeDtypeStruct((2, Hp), jnp.float32),
        scratch_shapes=[pltpu.VMEM((2, Hp), jnp.float32)],
        compiler_params=cp_acc,
    )(rp2, pw1, pb1, pg, pbe)

    # pass 2: attn-BN batch statistics -> folded (scale, shift)
    ass = pl.pallas_call(
        functools.partial(_attn_stats_kernel, tm=tm, kn=Kn, m_rows=M, eps=eps),
        grid=grid,
        in_specs=[rows2(3), qspec, rows2(D),
                  full((3, Hp)), full((1, Hp)), full((2, Hp)), full((Hp, D)), full((1, D)),
                  full((D, Ha)), full((1, Ha)), full((1, Ha)), full((1, Ha))],
        out_specs=full((2, Ha)),
        out_shape=jax.ShapeDtypeStruct((2, Ha), jnp.float32),
        scratch_shapes=[pltpu.VMEM((2, Ha), jnp.float32)],
        compiler_params=cp_acc,
    )(rp2, q3, k2, pw1, pb1, pss, pw2, pb2, aw1, ab1, ag, abe)

    # pass 3: apply (softmax over K, weighted sum, fused post projections + residual)
    flops = 2 * Mp * Kn * (3 * Hp + Hp * D + D * Ha + Ha * D) + 2 * Mp * D * (in1 + in2)
    bytes_accessed = int(rp2.size * 2 + k2.size * 2 + v2.size * 4 + q3.size * 4
                         + res2.size * 4 + Mp * (in1 + in2) * 4
                         + (pw1.size + pw2.size + aw1.size + aw2.size
                            + wd.size + we.size) * 2)
    cost = pl.CostEstimate(flops=int(flops), transcendentals=int(Mp * Kn * D),
                           bytes_accessed=bytes_accessed)

    # TODO(synk): dec/enc outputs are 16/24 lanes wide (masked partial stores);
    # lane-dense repacking (4 rows per 128 lanes) is not applied at these widths.
    dec_o, enc_o = pl.pallas_call(
        functools.partial(_attn_apply_kernel, tm=tm, kn=Kn),
        grid=grid,
        in_specs=[rows2(3), qspec, rows2(D), rows2(D),
                  pl.BlockSpec((tm, in1), lambda i: (i, 0)),
                  full((3, Hp)), full((1, Hp)), full((2, Hp)), full((Hp, D)), full((1, D)),
                  full((D, Ha)), full((1, Ha)), full((2, Ha)), full((Ha, D)), full((1, D)),
                  full((D, in1)), full((1, in1)), full((D, in2)), full((1, in2))],
        out_specs=[pl.BlockSpec((tm, in1), lambda i: (i, 0)),
                   pl.BlockSpec((tm, in2), lambda i: (i, 0))],
        out_shape=(jax.ShapeDtypeStruct((Mp, in1), jnp.float32),
                   jax.ShapeDtypeStruct((Mp, in2), jnp.float32)),
        scratch_shapes=[],
        compiler_params=cp_par,
        cost_estimate=cost,
    )(rp2, q3, k2, v2, res2, pw1, pb1, pss, pw2, pb2,
      aw1, ab1, ass, aw2, ab2, wd, bd, we, be)

    return dec_o[:M].reshape(B, N, in1), enc_o[:M].reshape(B, N, in2)


# ----------------------------------------------------------------------------- #
# Plain-JAX glue: fps / index / dist_mat / knn selection
# TODO(synk): FPS and kNN top-k + gathers are data-dependent; kept in plain JAX.
# ----------------------------------------------------------------------------- #
def dist_mat(p1, p2):
    return (jnp.sum(p1 ** 2, -1)[:, :, None]
            + jnp.sum(p2 ** 2, -1)[:, None, :]
            - 2.0 * jnp.einsum("bnd,bmd->bnm", p1, p2))


def index(x, idx):
    if idx.ndim == 2:
        return jnp.take_along_axis(x, idx[..., None], axis=1)
    B, S, K = idx.shape
    out = jnp.take_along_axis(x, idx.reshape(B, S * K)[..., None], axis=1)
    return out.reshape(B, S, K, x.shape[-1])


def fps(pc, npoint):
    B, N, _ = pc.shape
    indices0 = jnp.zeros((B, npoint), dtype=jnp.int32)
    dist0 = jnp.full((B, N), jnp.inf, dtype=jnp.float32)
    last0 = jnp.zeros((B,), dtype=jnp.int32)

    def body(i, carry):
        indices, dist, last = carry
        last_pt = jnp.take_along_axis(pc, last[:, None, None], axis=1)
        d = jnp.sum((pc - last_pt) ** 2, axis=-1)
        dist = jnp.minimum(dist, d)
        nxt = jnp.argmax(dist, axis=-1).astype(jnp.int32)
        indices = indices.at[:, i].set(nxt)
        return indices, dist, nxt

    indices, _, _ = jax.lax.fori_loop(1, npoint, body, (indices0, dist0, last0))
    return indices


def query_group_idx(dec_pc, pc, grp_size):
    mat = dist_mat(dec_pc, pc)
    _, knn_idx = jax.lax.top_k(-mat, grp_size)
    return knn_idx


# ----------------------------------------------------------------------------- #
# DecoderAttn forward (Pallas-backed)
# ----------------------------------------------------------------------------- #
def decoder_attn_forward(params, dec_x, dec_pc, enc_x, enc_pc, knn_size):
    residue = dec_x
    dec_xp = pallas_linear(dec_x, *params["pre_fc1"])
    enc_xp = pallas_linear(enc_x, *params["pre_fc2"])

    pc = jnp.concatenate([dec_pc, enc_pc], axis=1)
    feat = jnp.concatenate([dec_xp, enc_xp], axis=1)
    fps_idx = fps(pc, dec_pc.shape[1])
    pc_s = index(pc, fps_idx)
    x_s = index(feat, fps_idx)

    # fused q + (k|v) projections (one pallas_call, concatenated k/v weight)
    wq, bq = params["q"]
    wk, bk = params["k"]
    wv, bv = params["v"]
    wkv = jnp.concatenate([wk, wv], axis=1)
    bkv = jnp.concatenate([bk, bv], axis=0)
    q, kv = pallas_dual_linear(dec_xp, wq, bq, x_s, wkv, bkv)

    knn_idx = query_group_idx(dec_pc, pc_s, knn_size)
    rel_pos = index(pc_s, knn_idx) - dec_pc[:, :, None, :]    # (B,N,K,3)
    knn_kv = index(kv, knn_idx)                               # single gather (B,N,K,2*dim)
    dim = wq.shape[1]
    knn_k = knn_kv[..., :dim]
    knn_v = knn_kv[..., dim:]

    dec_out, enc_out = fused_attention(
        q, knn_k, knn_v, rel_pos, residue,
        params["pos_fc"], params["attn_fc"],
        params["post_fc1"], params["post_fc2"])
    return dec_out, dec_pc, enc_out, enc_pc


# ----------------------------------------------------------------------------- #
# Pure-JAX reference (matmuls use the same bf16-operand / f32-accumulate policy)
# ----------------------------------------------------------------------------- #
def _bdot(a, b):
    return jnp.dot(a.astype(jnp.bfloat16), b.astype(jnp.bfloat16),
                   preferred_element_type=jnp.float32)


def ref_forward(params, dec_x, dec_pc, enc_x, enc_pc, knn_size, eps=1e-5):
    lin = lambda t, wb: _bdot(t, wb[0]) + wb[1]
    residue = dec_x
    dec_xp = lin(dec_x, params["pre_fc1"])
    enc_xp = lin(enc_x, params["pre_fc2"])
    pc = jnp.concatenate([dec_pc, enc_pc], 1)
    x = jnp.concatenate([dec_xp, enc_xp], 1)
    fi = fps(pc, dec_pc.shape[1])
    pc = index(pc, fi)
    x = index(x, fi)
    q, k, v = lin(dec_xp, params["q"]), lin(x, params["k"]), lin(x, params["v"])
    ki = query_group_idx(dec_pc, pc, knn_size)
    knn_pc = index(pc, ki) - dec_pc[:, :, None, :]
    knn_k, knn_v = index(k, ki), index(v, ki)
    pp, ap = params["pos_fc"], params["attn_fc"]

    def bn(h, g, b):
        m = h.mean(axis=(0, 1, 2), keepdims=True)
        va = ((h - m) ** 2).mean(axis=(0, 1, 2), keepdims=True)
        return (h - m) / jnp.sqrt(va + eps) * g + b

    pos = _bdot(knn_pc, pp["w1"]) + pp["b1"]
    pos = _bdot(jnp.maximum(bn(pos, pp["gamma"], pp["beta"]), 0.0), pp["w2"]) + pp["b2"]
    # match the kernel's bf16 storage of the gathered k
    knn_k = knn_k.astype(jnp.bfloat16).astype(jnp.float32)
    attn = knn_k - q[:, :, None, :] + pos
    attn = _bdot(attn, ap["w1"]) + ap["b1"]
    attn = _bdot(jnp.maximum(bn(attn, ap["gamma"], ap["beta"]), 0.0), ap["w2"]) + ap["b2"]
    attn = jax.nn.softmax(attn, axis=-2)
    xo = ((knn_v + pos) * attn).sum(2)
    dec_out = lin(xo, params["post_fc1"]) + residue
    enc_out = lin(xo, params["post_fc2"])
    return dec_out, dec_pc, enc_out, enc_pc


# ----------------------------------------------------------------------------- #
# Deterministic parameter init (shapes from DecoderAttn.__init__)
# ----------------------------------------------------------------------------- #
def init_params(key, in_dim1, in_dim2, dim, pos_hid, attn_hid):
    keys = jax.random.split(key, 11)

    def lin(k, fi, fo):
        kw, kb = jax.random.split(k)
        bound = 1.0 / (fi ** 0.5)
        w = jax.random.uniform(kw, (fi, fo), jnp.float32, -bound, bound)
        b = jax.random.uniform(kb, (fo,), jnp.float32, -bound, bound)
        return w, b

    p = {
        "pre_fc1": lin(keys[0], in_dim1, dim),
        "pre_fc2": lin(keys[1], in_dim2, dim),
        "q": lin(keys[2], dim, dim),
        "k": lin(keys[3], dim, dim),
        "v": lin(keys[4], dim, dim),
        "post_fc1": lin(keys[5], dim, in_dim1),
        "post_fc2": lin(keys[6], dim, in_dim2),   # last=False
    }
    pw1, pb1 = lin(keys[7], 3, pos_hid)
    pw2, pb2 = lin(keys[8], pos_hid, dim)
    p["pos_fc"] = dict(w1=pw1, b1=pb1, w2=pw2, b2=pb2,
                       gamma=jnp.ones((pos_hid,), jnp.float32),
                       beta=jnp.zeros((pos_hid,), jnp.float32))
    aw1, ab1 = lin(keys[9], dim, attn_hid)
    aw2, ab2 = lin(keys[10], attn_hid, dim)
    p["attn_fc"] = dict(w1=aw1, b1=ab1, w2=aw2, b2=ab2,
                        gamma=jnp.ones((attn_hid,), jnp.float32),
                        beta=jnp.zeros((attn_hid,), jnp.float32))
    return p


# ----------------------------------------------------------------------------- #
if __name__ == "__main__":
    B, N_dec, N_enc = 2, 16, 32
    in_dim1, in_dim2, dim = 16, 24, 32
    pos_hid, attn_hid, knn_size = 16, 32, 8

    root = jax.random.PRNGKey(0)
    kp, k1, k2, k3, k4 = jax.random.split(root, 5)
    params = init_params(kp, in_dim1, in_dim2, dim, pos_hid, attn_hid)

    dec_x = jax.random.normal(k1, (B, N_dec, in_dim1), jnp.float32)
    dec_pc = jax.random.normal(k2, (B, N_dec, 3), jnp.float32)
    enc_x = jax.random.normal(k3, (B, N_enc, in_dim2), jnp.float32)
    enc_pc = jax.random.normal(k4, (B, N_enc, 3), jnp.float32)

    fwd = jax.jit(lambda p, a, b, c, d: decoder_attn_forward(p, a, b, c, d, knn_size))
    out = fwd(params, dec_x, dec_pc, enc_x, enc_pc)
    out = jax.block_until_ready(out)
    dec_out, dec_pc_out, enc_out, enc_pc_out = out

    ref = ref_forward(params, dec_x, dec_pc, enc_x, enc_pc, knn_size)

    assert dec_out.shape == (B, N_dec, in_dim1)
    assert enc_out.shape == (B, N_dec, in_dim2)
    assert bool(jnp.all(jnp.isfinite(dec_out))) and bool(jnp.all(jnp.isfinite(enc_out)))
    assert jnp.allclose(dec_out, ref[0], rtol=2e-2, atol=2e-2)
    assert jnp.allclose(enc_out, ref[2], rtol=2e-2, atol=2e-2)

    print("KERNEL_OK")
</pallas_src>

<mosaic_0001>
module attributes {stable_mosaic.version = 11 : i64} {
  func.func @_linear_kernel(%arg0: i32, %arg1: memref<32x16xbf16, #tpu.memory_space<vmem>>, %arg2: memref<16x32xbf16, #tpu.memory_space<vmem>>, %arg3: memref<1x32xf32, #tpu.memory_space<vmem>>, %arg4: memref<32x32xf32, #tpu.memory_space<vmem>>) attributes {dimension_semantics = [#tpu.dimension_semantics<parallel>], iteration_bounds = array<i64: 1>, scalar_prefetch = 0 : i64, scratch_operands = 0 : i64, tpu.core_type = #tpu.core_type<tc>, window_params = [{transform_indices = @transform_0, window_bounds = array<i64: 32, 16>}, {pipeline_mode = #tpu.pipeline_mode<synchronous>, transform_indices = @transform_1, window_bounds = array<i64: 16, 32>}, {pipeline_mode = #tpu.pipeline_mode<synchronous>, transform_indices = @transform_2, window_bounds = array<i64: 1, 32>}, {transform_indices = @transform_3, window_bounds = array<i64: 32, 32>}]} {
    %c0 = arith.constant 0 : index
    %c0_0 = arith.constant 0 : index
    %0 = vector.load %arg1[%c0, %c0_0] : memref<32x16xbf16, #tpu.memory_space<vmem>>, vector<32x16xbf16>
    %c0_1 = arith.constant 0 : index
    %c0_2 = arith.constant 0 : index
    %1 = vector.load %arg2[%c0_1, %c0_2] : memref<16x32xbf16, #tpu.memory_space<vmem>>, vector<16x32xbf16>
    %cst = arith.constant dense<0.000000e+00> : vector<32x32xf32>
    %2 = tpu.matmul %0, %1, %cst {dimension_numbers = #tpu.dot_dimension_numbers<[1], [0], [0], [1], [0, 0, 1, 1], [], []>} : vector<32x16xbf16>, vector<16x32xbf16>, vector<32x32xf32> -> vector<32x32xf32>
    %c0_3 = arith.constant 0 : index
    %c0_4 = arith.constant 0 : index
    %3 = vector.load %arg3[%c0_3, %c0_4] : memref<1x32xf32, #tpu.memory_space<vmem>>, vector<1x32xf32>
    %4 = vector.broadcast %3 : vector<1x32xf32> to vector<32x32xf32>
    %5 = arith.addf %2, %4 : vector<32x32xf32>
    %c0_5 = arith.constant 0 : index
    %c0_6 = arith.constant 0 : index
    %6 = vector.load %arg4[%c0_5, %c0_6] : memref<32x32xf32, #tpu.memory_space<vmem>>, vector<32x32xf32>
    tpu.vector_store %arg4[%c0_5, %c0_6], %5 {strides = array<i32>} : memref<32x32xf32, #tpu.memory_space<vmem>>, vector<32x32xf32>,
    return
  }
  func.func @transform_0(%arg0: i32) -> (i32, i32) {
    %c0_i32 = arith.constant 0 : i32
    %c0_i32_0 = arith.constant 0 : i32
    return %arg0, %c0_i32 : i32, i32
  }
  func.func @transform_1(%arg0: i32) -> (i32, i32) {
    %c0_i32 = arith.constant 0 : i32
    %c0_i32_0 = arith.constant 0 : i32
    %c0_i32_1 = arith.constant 0 : i32
    return %c0_i32, %c0_i32_0 : i32, i32
  }
  func.func @transform_2(%arg0: i32) -> (i32, i32) {
    %c0_i32 = arith.constant 0 : i32
    %c0_i32_0 = arith.constant 0 : i32
    %c0_i32_1 = arith.constant 0 : i32
    return %c0_i32, %c0_i32_0 : i32, i32
  }
  func.func @transform_3(%arg0: i32) -> (i32, i32) {
    %c0_i32 = arith.constant 0 : i32
    %c0_i32_0 = arith.constant 0 : i32
    return %arg0, %c0_i32 : i32, i32
  }
}

module attributes {stable_mosaic.version = 11 : i64} {
  func.func @_linear_kernel(%arg0: i32, %arg1: memref<64x24xbf16, #tpu.memory_space<vmem>>, %arg2: memref<24x32xbf16, #tpu.memory_space<vmem>>, %arg3: memref<1x32xf32, #tpu.memory_space<vmem>>, %arg4: memref<64x32xf32, #tpu.memory_space<vmem>>) attributes {dimension_semantics = [#tpu.dimension_semantics<parallel>], iteration_bounds = array<i64: 1>, scalar_prefetch = 0 : i64, scratch_operands = 0 : i64, tpu.core_type = #tpu.core_type<tc>, window_params = [{transform_indices = @transform_0, window_bounds = array<i64: 64, 24>}, {pipeline_mode = #tpu.pipeline_mode<synchronous>, transform_indices = @transform_1, window_bounds = array<i64: 24, 32>}, {pipeline_mode = #tpu.pipeline_mode<synchronous>, transform_indices = @transform_2, window_bounds = array<i64: 1, 32>}, {transform_indices = @transform_3, window_bounds = array<i64: 64, 32>}]} {
    %c0 = arith.constant 0 : index
    %c0_0 = arith.constant 0 : index
    %0 = vector.load %arg1[%c0, %c0_0] : memref<64x24xbf16, #tpu.memory_space<vmem>>, vector<64x24xbf16>
    %c0_1 = arith.constant 0 : index
    %c0_2 = arith.constant 0 : index
    %1 = vector.load %arg2[%c0_1, %c0_2] : memref<24x32xbf16, #tpu.memory_space<vmem>>, vector<24x32xbf16>
    %cst = arith.constant dense<0.000000e+00> : vector<64x32xf32>
    %2 = tpu.matmul %0, %1, %cst {dimension_numbers = #tpu.dot_dimension_numbers<[1], [0], [0], [1], [0, 0, 1, 1], [], []>} : vector<64x24xbf16>, vector<24x32xbf16>, vector<64x32xf32> -> vector<64x32xf32>
    %c0_3 = arith.constant 0 : index
    %c0_4 = arith.constant 0 : index
    %3 = vector.load %arg3[%c0_3, %c0_4] : memref<1x32xf32, #tpu.memory_space<vmem>>, vector<1x32xf32>
    %4 = vector.broadcast %3 : vector<1x32xf32> to vector<64x32xf32>
    %5 = arith.addf %2, %4 : vector<64x32xf32>
    %c0_5 = arith.constant 0 : index
    %c0_6 = arith.constant 0 : index
    %6 = vector.load %arg4[%c0_5, %c0_6] : memref<64x32xf32, #tpu.memory_space<vmem>>, vector<64x32xf32>
    tpu.vector_store %arg4[%c0_5, %c0_6], %5 {strides = array<i32>} : memref<64x32xf32, #tpu.memory_space<vmem>>, vector<64x32xf32>,
    return
  }
  func.func @transform_0(%arg0: i32) -> (i32, i32) {
    %c0_i32 = arith.constant 0 : i32
    %c0_i32_0 = arith.constant 0 : i32
    return %arg0, %c0_i32 : i32, i32
  }
  func.func @transform_1(%arg0: i32) -> (i32, i32) {
    %c0_i32 = arith.constant 0 : i32
    %c0_i32_0 = arith.constant 0 : i32
    %c0_i32_1 = arith.constant 0 : i32
    return %c0_i32, %c0_i32_0 : i32, i32
  }
  func.func @transform_2(%arg0: i32) -> (i32, i32) {
    %c0_i32 = arith.constant 0 : i32
    %c0_i32_0 = arith.constant 0 : i32
    %c0_i32_1 = arith.constant 0 : i32
    return %c0_i32, %c0_i32_0 : i32, i32
  }
  func.func @transform_3(%arg0: i32) -> (i32, i32) {
    %c0_i32 = arith.constant 0 : i32
    %c0_i32_0 = arith.constant 0 : i32
    return %arg0, %c0_i32 : i32, i32
  }
}

module attributes {stable_mosaic.version = 11 : i64} {
  func.func @_dual_linear_kernel(%arg0: i32, %arg1: memref<32x32xbf16, #tpu.memory_space<vmem>>, %arg2: memref<32x32xbf16, #tpu.memory_space<vmem>>, %arg3: memref<1x32xf32, #tpu.memory_space<vmem>>, %arg4: memref<32x32xbf16, #tpu.memory_space<vmem>>, %arg5: memref<32x64xbf16, #tpu.memory_space<vmem>>, %arg6: memref<1x64xf32, #tpu.memory_space<vmem>>, %arg7: memref<32x32xf32, #tpu.memory_space<vmem>>, %arg8: memref<32x64xf32, #tpu.memory_space<vmem>>) attributes {dimension_semantics = [#tpu.dimension_semantics<parallel>], iteration_bounds = array<i64: 1>, scalar_prefetch = 0 : i64, scratch_operands = 0 : i64, tpu.core_type = #tpu.core_type<tc>, window_params = [{transform_indices = @transform_0, window_bounds = array<i64: 32, 32>}, {pipeline_mode = #tpu.pipeline_mode<synchronous>, transform_indices = @transform_1, window_bounds = array<i64: 32, 32>}, {pipeline_mode = #tpu.pipeline_mode<synchronous>, transform_indices = @transform_2, window_bounds = array<i64: 1, 32>}, {transform_indices = @transform_3, window_bounds = array<i64: 32, 32>}, {pipeline_mode = #tpu.pipeline_mode<synchronous>, transform_indices = @transform_4, window_bounds = array<i64: 32, 64>}, {pipeline_mode = #tpu.pipeline_mode<synchronous>, transform_indices = @transform_5, window_bounds = array<i64: 1, 64>}, {transform_indices = @transform_6, window_bounds = array<i64: 32, 32>}, {transform_indices = @transform_7, window_bounds = array<i64: 32, 64>}]} {
    %c0 = arith.constant 0 : index
    %c0_0 = arith.constant 0 : index
    %0 = vector.load %arg1[%c0, %c0_0] : memref<32x32xbf16, #tpu.memory_space<vmem>>, vector<32x32xbf16>
    %c0_1 = arith.constant 0 : index
    %c0_2 = arith.constant 0 : index
    %1 = vector.load %arg2[%c0_1, %c0_2] : memref<32x32xbf16, #tpu.memory_space<vmem>>, vector<32x32xbf16>
    %cst = arith.constant dense<0.000000e+00> : vector<32x32xf32>
    %2 = tpu.matmul %0, %1, %cst {dimension_numbers = #tpu.dot_dimension_numbers<[1], [0], [0], [1], [0, 0, 1, 1], [], []>} : vector<32x32xbf16>, vector<32x32xbf16>, vector<32x32xf32> -> vector<32x32xf32>
    %c0_3 = arith.constant 0 : index
    %c0_4 = arith.constant 0 : index
    %3 = vector.load %arg3[%c0_3, %c0_4] : memref<1x32xf32, #tpu.memory_space<vmem>>, vector<1x32xf32>
    %4 = vector.broadcast %3 : vector<1x32xf32> to vector<32x32xf32>
    %5 = arith.addf %2, %4 : vector<32x32xf32>
    %c0_5 = arith.constant 0 : index
    %c0_6 = arith.constant 0 : index
    %6 = vector.load %arg7[%c0_5, %c0_6] : memref<32x32xf32, #tpu.memory_space<vmem>>, vector<32x32xf32>
    tpu.vector_store %arg7[%c0_5, %c0_6], %5 {strides = array<i32>} : memref<32x32xf32, #tpu.memory_space<vmem>>, vector<32x32xf32>,
    %c0_7 = arith.constant 0 : index
    %c0_8 = arith.constant 0 : index
    %7 = vector.load %arg4[%c0_7, %c0_8] : memref<32x32xbf16, #tpu.memory_space<vmem>>, vector<32x32xbf16>
    %c0_9 = arith.constant 0 : index
    %c0_10 = arith.constant 0 : index
    %8 = vector.load %arg5[%c0_9, %c0_10] : memref<32x64xbf16, #tpu.memory_space<vmem>>, vector<32x64xbf16>
    %cst_11 = arith.constant dense<0.000000e+00> : vector<32x64xf32>
    %9 = tpu.matmul %7, %8, %cst_11 {dimension_numbers = #tpu.dot_dimension_numbers<[1], [0], [0], [1], [0, 0, 1, 1], [], []>} : vector<32x32xbf16>, vector<32x64xbf16>, vector<32x64xf32> -> vector<32x64xf32>
    %c0_12 = arith.constant 0 : index
    %c0_13 = arith.constant 0 : index
    %10 = vector.load %arg6[%c0_12, %c0_13] : memref<1x64xf32, #tpu.memory_space<vmem>>, vector<1x64xf32>
    %11 = vector.broadcast %10 : vector<1x64xf32> to vector<32x64xf32>
    %12 = arith.addf %9, %11 : vector<32x64xf32>
    %c0_14 = arith.constant 0 : index
    %c0_15 = arith.constant 0 : index
    %13 = vector.load %arg8[%c0_14, %c0_15] : memref<32x64xf32, #tpu.memory_space<vmem>>, vector<32x64xf32>
    tpu.vector_store %arg8[%c0_14, %c0_15], %12 {strides = array<i32>} : memref<32x64xf32, #tpu.memory_space<vmem>>, vector<32x64xf32>,
    return
  }
  func.func @transform_0(%arg0: i32) -> (i32, i32) {
    %c0_i32 = arith.constant 0 : i32
    %c0_i32_0 = arith.constant 0 : i32
    return %arg0, %c0_i32 : i32, i32
  }
  func.func @transform_1(%arg0: i32) -> (i32, i32) {
    %c0_i32 = arith.constant 0 : i32
    %c0_i32_0 = arith.constant 0 : i32
    %c0_i32_1 = arith.constant 0 : i32
    return %c0_i32, %c0_i32_0 : i32, i32
  }
  func.func @transform_2(%arg0: i32) -> (i32, i32) {
    %c0_i32 = arith.constant 0 : i32
    %c0_i32_0 = arith.constant 0 : i32
    %c0_i32_1 = arith.constant 0 : i32
    return %c0_i32, %c0_i32_0 : i32, i32
  }
  func.func @transform_3(%arg0: i32) -> (i32, i32) {
    %c0_i32 = arith.constant 0 : i32
    %c0_i32_0 = arith.constant 0 : i32
    return %arg0, %c0_i32 : i32, i32
  }
  func.func @transform_4(%arg0: i32) -> (i32, i32) {
    %c0_i32 = arith.constant 0 : i32
    %c0_i32_0 = arith.constant 0 : i32
    %c0_i32_1 = arith.constant 0 : i32
    return %c0_i32, %c0_i32_0 : i32, i32
  }
  func.func @transform_5(%arg0: i32) -> (i32, i32) {
    %c0_i32 = arith.constant 0 : i32
    %c0_i32_0 = arith.constant 0 : i32
    %c0_i32_1 = arith.constant 0 : i32
    return %c0_i32, %c0_i32_0 : i32, i32
  }
  func.func @transform_6(%arg0: i32) -> (i32, i32) {
    %c0_i32 = arith.constant 0 : i32
    %c0_i32_0 = arith.constant 0 : i32
    return %arg0, %c0_i32 : i32, i32
  }
  func.func @transform_7(%arg0: i32) -> (i32, i32) {
    %c0_i32 = arith.constant 0 : i32
    %c0_i32_0 = arith.constant 0 : i32
    return %arg0, %c0_i32 : i32, i32
  }
}

module attributes {stable_mosaic.version = 11 : i64} {
  func.func @_pos_stats_kernel(%arg0: i32, %arg1: memref<256x3xbf16, #tpu.memory_space<vmem>>, %arg2: memref<3x16xbf16, #tpu.memory_space<vmem>>, %arg3: memref<1x16xf32, #tpu.memory_space<vmem>>, %arg4: memref<1x16xf32, #tpu.memory_space<vmem>>, %arg5: memref<1x16xf32, #tpu.memory_space<vmem>>, %arg6: memref<2x16xf32, #tpu.memory_space<vmem>>, %arg7: memref<2x16xf32, #tpu.memory_space<vmem>>) attributes {dimension_semantics = [#tpu.dimension_semantics<arbitrary>], iteration_bounds = array<i64: 1>, scalar_prefetch = 0 : i64, scratch_operands = 1 : i64, tpu.core_type = #tpu.core_type<tc>, window_params = [{transform_indices = @transform_0, window_bounds = array<i64: 256, 3>}, {pipeline_mode = #tpu.pipeline_mode<synchronous>, transform_indices = @transform_1, window_bounds = array<i64: 3, 16>}, {pipeline_mode = #tpu.pipeline_mode<synchronous>, transform_indices = @transform_2, window_bounds = array<i64: 1, 16>}, {pipeline_mode = #tpu.pipeline_mode<synchronous>, transform_indices = @transform_3, window_bounds = array<i64: 1, 16>}, {pipeline_mode = #tpu.pipeline_mode<synchronous>, transform_indices = @transform_4, window_bounds = array<i64: 1, 16>}, {pipeline_mode = #tpu.pipeline_mode<synchronous>, transform_indices = @transform_5, window_bounds = array<i64: 2, 16>}]} {
    %c0_i32 = arith.constant 0 : i32
    %0 = arith.cmpi eq, %arg0, %c0_i32 : i32
    %1 = arith.extui %0 : i1 to i32
    %c0_i32_0 = arith.constant 0 : i32
    %2 = arith.cmpi ne, %1, %c0_i32_0 : i32
    scf.if %2 {
      %cst_19 = arith.constant 0.000000e+00 : f32
      %33 = vector.broadcast %cst_19 : f32 to vector<2x16xf32>
      %c0_20 = arith.constant 0 : index
      %c0_21 = arith.constant 0 : index
      %34 = vector.load %arg7[%c0_20, %c0_21] : memref<2x16xf32, #tpu.memory_space<vmem>>, vector<2x16xf32>
      tpu.vector_store %arg7[%c0_20, %c0_21], %33 {strides = array<i32>} : memref<2x16xf32, #tpu.memory_space<vmem>>, vector<2x16xf32>,
    } else {
    }
    %c0 = arith.constant 0 : index
    %c0_1 = arith.constant 0 : index
    %3 = vector.load %arg1[%c0, %c0_1] : memref<256x3xbf16, #tpu.memory_space<vmem>>, vector<256x3xbf16>
    %c0_2 = arith.constant 0 : index
    %c0_3 = arith.constant 0 : index
    %4 = vector.load %arg2[%c0_2, %c0_3] : memref<3x16xbf16, #tpu.memory_space<vmem>>, vector<3x16xbf16>
    %cst = arith.constant dense<0.000000e+00> : vector<256x16xf32>
    %5 = tpu.matmul %3, %4, %cst {dimension_numbers = #tpu.dot_dimension_numbers<[1], [0], [0], [1], [0, 0, 1, 1], [], []>} : vector<256x3xbf16>, vector<3x16xbf16>, vector<256x16xf32> -> vector<256x16xf32>
    %c0_4 = arith.constant 0 : index
    %c0_5 = arith.constant 0 : index
    %6 = vector.load %arg3[%c0_4, %c0_5] : memref<1x16xf32, #tpu.memory_space<vmem>>, vector<1x16xf32>
    %7 = vector.broadcast %6 : vector<1x16xf32> to vector<256x16xf32>
    %8 = arith.addf %5, %7 : vector<256x16xf32>
    %9 = tpu.iota {dimensions = array<i32: 0>} : vector<256x1xi32>
    %c256_i32 = arith.constant 256 : i32
    %10 = arith.muli %arg0, %c256_i32 : i32
    %11 = vector.broadcast %10 : i32 to vector<256x1xi32>
    %12 = arith.addi %9, %11 : vector<256x1xi32>
    %c256_i32_6 = arith.constant 256 : i32
    %13 = vector.broadcast %c256_i32_6 : i32 to vector<256x1xi32>
    %14 = arith.cmpi slt, %12, %13 : vector<256x1xi32>
    %cst_7 = arith.constant 0.000000e+00 : f32
    %15 = vector.shape_cast %14 : vector<256x1xi1> to vector<256x1xi1>
    %16 = vector.broadcast %15 : vector<256x1xi1> to vector<256x16xi1>
    %17 = vector.broadcast %cst_7 : f32 to vector<256x16xf32>
    %18 = arith.select %16, %8, %17 : vector<256x16xi1>, vector<256x16xf32>
    %c0_8 = arith.constant 0 : index
    %c0_9 = arith.constant 0 : index
    %19 = vector.load %arg7[%c0_8, %c0_9] : memref<2x16xf32, #tpu.memory_space<vmem>>, vector<1x16xf32>
    %cst_10 = arith.constant dense<0.000000e+00> : vector<16xf32>
    %20 = vector.multi_reduction <add>, %18, %cst_10 [0] : vector<256x16xf32> to vector<16xf32>
    %21 = vector.shape_cast %20 : vector<16xf32> to vector<1x16xf32>
    %22 = arith.addf %19, %21 : vector<1x16xf32>
    %c0_11 = arith.constant 0 : index
    %c0_12 = arith.constant 0 : index
    %23 = vector.load %arg7[%c0_11, %c0_12] : memref<2x16xf32, #tpu.memory_space<vmem>>, vector<1x16xf32>
    tpu.vector_store %arg7[%c0_11, %c0_12], %22 {strides = array<i32>} : memref<2x16xf32, #tpu.memory_space<vmem>>, vector<1x16xf32>,
    %c1 = arith.constant 1 : index
    %c0_13 = arith.constant 0 : index
    %24 = vector.load %arg7[%c1, %c0_13] : memref<2x16xf32, #tpu.memory_space<vmem>>, vector<1x16xf32>
    %25 = arith.mulf %18, %18 : vector<256x16xf32>
    %cst_14 = arith.constant dense<0.000000e+00> : vector<16xf32>
    %26 = vector.multi_reduction <add>, %25, %cst_14 [0] : vector<256x16xf32> to vector<16xf32>
    %27 = vector.shape_cast %26 : vector<16xf32> to vector<1x16xf32>
    %28 = arith.addf %24, %27 : vector<1x16xf32>
    %c1_15 = arith.constant 1 : index
    %c0_16 = arith.constant 0 : index
    %29 = vector.load %arg7[%c1_15, %c0_16] : memref<2x16xf32, #tpu.memory_space<vmem>>, vector<1x16xf32>
    tpu.vector_store %arg7[%c1_15, %c0_16], %28 {strides = array<i32>} : memref<2x16xf32, #tpu.memory_space<vmem>>, vector<1x16xf32>,
    %c0_i32_17 = arith.constant 0 : i32
    %30 = arith.cmpi eq, %arg0, %c0_i32_17 : i32
    %31 = arith.extui %30 : i1 to i32
    %c0_i32_18 = arith.constant 0 : i32
    %32 = arith.cmpi ne, %31, %c0_i32_18 : i32
    scf.if %32 {
      %c0_19 = arith.constant 0 : index
      %c0_20 = arith.constant 0 : index
      %33 = vector.load %arg7[%c0_19, %c0_20] : memref<2x16xf32, #tpu.memory_space<vmem>>, vector<1x16xf32>
      %cst_21 = arith.constant 2.560000e+02 : f32
      %34 = vector.broadcast %cst_21 : f32 to vector<1x16xf32>
      %35 = arith.divf %33, %34 : vector<1x16xf32>
      %c1_22 = arith.constant 1 : index
      %c0_23 = arith.constant 0 : index
      %36 = vector.load %arg7[%c1_22, %c0_23] : memref<2x16xf32, #tpu.memory_space<vmem>>, vector<1x16xf32>
      %cst_24 = arith.constant 2.560000e+02 : f32
      %37 = vector.broadcast %cst_24 : f32 to vector<1x16xf32>
      %38 = arith.divf %36, %37 : vector<1x16xf32>
      %39 = arith.mulf %35, %35 : vector<1x16xf32>
      %40 = arith.subf %38, %39 : vector<1x16xf32>
      %c0_25 = arith.constant 0 : index
      %c0_26 = arith.constant 0 : index
      %41 = vector.load %arg4[%c0_25, %c0_26] : memref<1x16xf32, #tpu.memory_space<vmem>>, vector<1x16xf32>
      %cst_27 = arith.constant 9.99999974E-6 : f32
      %42 = vector.broadcast %cst_27 : f32 to vector<1x16xf32>
      %43 = arith.addf %40, %42 : vector<1x16xf32>
      %44 = math.rsqrt %43 : vector<1x16xf32>
      %45 = arith.mulf %41, %44 : vector<1x16xf32>
      %c0_28 = arith.constant 0 : index
      %c0_29 = arith.constant 0 : index
      %46 = vector.load %arg6[%c0_28, %c0_29] : memref<2x16xf32, #tpu.memory_space<vmem>>, vector<1x16xf32>
      tpu.vector_store %arg6[%c0_28, %c0_29], %45 {strides = array<i32>} : memref<2x16xf32, #tpu.memory_space<vmem>>, vector<1x16xf32>,
      %c0_30 = arith.constant 0 : index
      %c0_31 = arith.constant 0 : index
      %47 = vector.load %arg5[%c0_30, %c0_31] : memref<1x16xf32, #tpu.memory_space<vmem>>, vector<1x16xf32>
      %48 = arith.mulf %35, %45 : vector<1x16xf32>
      %49 = arith.subf %47, %48 : vector<1x16xf32>
      %c1_32 = arith.constant 1 : index
      %c0_33 = arith.constant 0 : index
      %50 = vector.load %arg6[%c1_32, %c0_33] : memref<2x16xf32, #tpu.memory_space<vmem>>, vector<1x16xf32>
      tpu.vector_store %arg6[%c1_32, %c0_33], %49 {strides = array<i32>} : memref<2x16xf32, #tpu.memory_space<vmem>>, vector<1x16xf32>,
    } else {
    }
    return
  }
  func.func @transform_0(%arg0: i32) -> (i32, i32) {
    %c0_i32 = arith.constant 0 : i32
    %c0_i32_0 = arith.constant 0 : i32
    return %arg0, %c0_i32 : i32, i32
  }
  func.func @transform_1(%arg0: i32) -> (i32, i32) {
    %c0_i32 = arith.constant 0 : i32
    %c0_i32_0 = arith.constant 0 : i32
    %c0_i32_1 = arith.constant 0 : i32
    return %c0_i32, %c0_i32_0 : i32, i32
  }
  func.func @transform_2(%arg0: i32) -> (i32, i32) {
    %c0_i32 = arith.constant 0 : i32
    %c0_i32_0 = arith.constant 0 : i32
    %c0_i32_1 = arith.constant 0 : i32
    return %c0_i32, %c0_i32_0 : i32, i32
  }
  func.func @transform_3(%arg0: i32) -> (i32, i32) {
    %c0_i32 = arith.constant 0 : i32
    %c0_i32_0 = arith.constant 0 : i32
    %c0_i32_1 = arith.constant 0 : i32
    return %c0_i32, %c0_i32_0 : i32, i32
  }
  func.func @transform_4(%arg0: i32) -> (i32, i32) {
    %c0_i32 = arith.constant 0 : i32
    %c0_i32_0 = arith.constant 0 : i32
    %c0_i32_1 = arith.constant 0 : i32
    return %c0_i32, %c0_i32_0 : i32, i32
  }
  func.func @transform_5(%arg0: i32) -> (i32, i32) {
    %c0_i32 = arith.constant 0 : i32
    %c0_i32_0 = arith.constant 0 : i32
    %c0_i32_1 = arith.constant 0 : i32
    return %c0_i32, %c0_i32_0 : i32, i32
  }
}

module attributes {stable_mosaic.version = 11 : i64} {
  func.func @_attn_stats_kernel(%arg0: i32, %arg1: memref<256x3xbf16, #tpu.memory_space<vmem>>, %arg2: memref<32x1x32xf32, #tpu.memory_space<vmem>>, %arg3: memref<256x32xbf16, #tpu.memory_space<vmem>>, %arg4: memref<3x16xbf16, #tpu.memory_space<vmem>>, %arg5: memref<1x16xf32, #tpu.memory_space<vmem>>, %arg6: memref<2x16xf32, #tpu.memory_space<vmem>>, %arg7: memref<16x32xbf16, #tpu.memory_space<vmem>>, %arg8: memref<1x32xf32, #tpu.memory_space<vmem>>, %arg9: memref<32x32xbf16, #tpu.memory_space<vmem>>, %arg10: memref<1x32xf32, #tpu.memory_space<vmem>>, %arg11: memref<1x32xf32, #tpu.memory_space<vmem>>, %arg12: memref<1x32xf32, #tpu.memory_space<vmem>>, %arg13: memref<2x32xf32, #tpu.memory_space<vmem>>, %arg14: memref<2x32xf32, #tpu.memory_space<vmem>>) attributes {dimension_semantics = [#tpu.dimension_semantics<arbitrary>], iteration_bounds = array<i64: 1>, scalar_prefetch = 0 : i64, scratch_operands = 1 : i64, tpu.core_type = #tpu.core_type<tc>, window_params = [{transform_indices = @transform_0, window_bounds = array<i64: 256, 3>}, {transform_indices = @transform_1, window_bounds = array<i64: 32, 1, 32>}, {transform_indices = @transform_2, window_bounds = array<i64: 256, 32>}, {pipeline_mode = #tpu.pipeline_mode<synchronous>, transform_indices = @transform_3, window_bounds = array<i64: 3, 16>}, {pipeline_mode = #tpu.pipeline_mode<synchronous>, transform_indices = @transform_4, window_bounds = array<i64: 1, 16>}, {pipeline_mode = #tpu.pipeline_mode<synchronous>, transform_indices = @transform_5, window_bounds = array<i64: 2, 16>}, {pipeline_mode = #tpu.pipeline_mode<synchronous>, transform_indices = @transform_6, window_bounds = array<i64: 16, 32>}, {pipeline_mode = #tpu.pipeline_mode<synchronous>, transform_indices = @transform_7, window_bounds = array<i64: 1, 32>}, {pipeline_mode = #tpu.pipeline_mode<synchronous>, transform_indices = @transform_8, window_bounds = array<i64: 32, 32>}, {pipeline_mode = #tpu.pipeline_mode<synchronous>, transform_indices = @transform_9, window_bounds = array<i64: 1, 32>}, {pipeline_mode = #tpu.pipeline_mode<synchronous>, transform_indices = @transform_10, window_bounds = array<i64: 1, 32>}, {pipeline_mode = #tpu.pipeline_mode<synchronous>, transform_indices = @transform_11, window_bounds = array<i64: 1, 32>}, {pipeline_mode = #tpu.pipeline_mode<synchronous>, transform_indices = @transform_12, window_bounds = array<i64: 2, 32>}]} {
    %c0_i32 = arith.constant 0 : i32
    %0 = arith.cmpi eq, %arg0, %c0_i32 : i32
    %1 = arith.extui %0 : i1 to i32
    %c0_i32_0 = arith.constant 0 : i32
    %2 = arith.cmpi ne, %1, %c0_i32_0 : i32
    scf.if %2 {
      %cst_39 = arith.constant 0.000000e+00 : f32
      %62 = vector.broadcast %cst_39 : f32 to vector<2x32xf32>
      %c0_40 = arith.constant 0 : index
      %c0_41 = arith.constant 0 : index
      %63 = vector.load %arg14[%c0_40, %c0_41] : memref<2x32xf32, #tpu.memory_space<vmem>>, vector<2x32xf32>
      tpu.vector_store %arg14[%c0_40, %c0_41], %62 {strides = array<i32>} : memref<2x32xf32, #tpu.memory_space<vmem>>, vector<2x32xf32>,
    } else {
    }
    %c0 = arith.constant 0 : index
    %c0_1 = arith.constant 0 : index
    %3 = vector.load %arg1[%c0, %c0_1] : memref<256x3xbf16, #tpu.memory_space<vmem>>, vector<256x3xbf16>
    %c0_2 = arith.constant 0 : index
    %c0_3 = arith.constant 0 : index
    %4 = vector.load %arg4[%c0_2, %c0_3] : memref<3x16xbf16, #tpu.memory_space<vmem>>, vector<3x16xbf16>
    %cst = arith.constant dense<0.000000e+00> : vector<256x16xf32>
    %5 = tpu.matmul %3, %4, %cst {dimension_numbers = #tpu.dot_dimension_numbers<[1], [0], [0], [1], [0, 0, 1, 1], [], []>} : vector<256x3xbf16>, vector<3x16xbf16>, vector<256x16xf32> -> vector<256x16xf32>
    %c0_4 = arith.constant 0 : index
    %c0_5 = arith.constant 0 : index
    %6 = vector.load %arg5[%c0_4, %c0_5] : memref<1x16xf32, #tpu.memory_space<vmem>>, vector<1x16xf32>
    %7 = vector.broadcast %6 : vector<1x16xf32> to vector<256x16xf32>
    %8 = arith.addf %5, %7 : vector<256x16xf32>
    %c0_6 = arith.constant 0 : index
    %c0_7 = arith.constant 0 : index
    %9 = vector.load %arg6[%c0_6, %c0_7] : memref<2x16xf32, #tpu.memory_space<vmem>>, vector<1x16xf32>
    %10 = vector.broadcast %9 : vector<1x16xf32> to vector<256x16xf32>
    %11 = arith.mulf %8, %10 : vector<256x16xf32>
    %c1 = arith.constant 1 : index
    %c0_8 = arith.constant 0 : index
    %12 = vector.load %arg6[%c1, %c0_8] : memref<2x16xf32, #tpu.memory_space<vmem>>, vector<1x16xf32>
    %13 = vector.broadcast %12 : vector<1x16xf32> to vector<256x16xf32>
    %14 = arith.addf %11, %13 : vector<256x16xf32>
    %cst_9 = arith.constant 0.000000e+00 : f32
    %15 = vector.broadcast %cst_9 : f32 to vector<256x16xf32>
    %16 = arith.maximumf %14, %15 : vector<256x16xf32>
    %17 = arith.truncf %16 : vector<256x16xf32> to vector<256x16xbf16>
    %c0_10 = arith.constant 0 : index
    %c0_11 = arith.constant 0 : index
    %18 = vector.load %arg7[%c0_10, %c0_11] : memref<16x32xbf16, #tpu.memory_space<vmem>>, vector<16x32xbf16>
    %cst_12 = arith.constant dense<0.000000e+00> : vector<256x32xf32>
    %19 = tpu.matmul %17, %18, %cst_12 {dimension_numbers = #tpu.dot_dimension_numbers<[1], [0], [0], [1], [0, 0, 1, 1], [], []>} : vector<256x16xbf16>, vector<16x32xbf16>, vector<256x32xf32> -> vector<256x32xf32>
    %c0_13 = arith.constant 0 : index
    %c0_14 = arith.constant 0 : index
    %20 = vector.load %arg8[%c0_13, %c0_14] : memref<1x32xf32, #tpu.memory_space<vmem>>, vector<1x32xf32>
    %21 = vector.broadcast %20 : vector<1x32xf32> to vector<256x32xf32>
    %22 = arith.addf %19, %21 : vector<256x32xf32>
    %23 = vector.shape_cast %22 : vector<256x32xf32> to vector<32x8x32xf32>
    %c0_15 = arith.constant 0 : index
    %c0_16 = arith.constant 0 : index
    %24 = vector.load %arg3[%c0_15, %c0_16] : memref<256x32xbf16, #tpu.memory_space<vmem>>, vector<256x32xbf16>
    %25 = arith.extf %24 : vector<256x32xbf16> to vector<256x32xf32>
    %26 = vector.shape_cast %25 : vector<256x32xf32> to vector<32x8x32xf32>
    %c0_17 = arith.constant 0 : index
    %c0_18 = arith.constant 0 : index
    %c0_19 = arith.constant 0 : index
    %27 = vector.load %arg2[%c0_17, %c0_18, %c0_19] : memref<32x1x32xf32, #tpu.memory_space<vmem>>, vector<32x1x32xf32>
    %28 = vector.broadcast %27 : vector<32x1x32xf32> to vector<32x8x32xf32>
    %29 = arith.subf %26, %28 : vector<32x8x32xf32>
    %30 = arith.addf %29, %23 : vector<32x8x32xf32>
    %31 = vector.shape_cast %30 : vector<32x8x32xf32> to vector<256x32xf32>
    %32 = arith.truncf %31 : vector<256x32xf32> to vector<256x32xbf16>
    %c0_20 = arith.constant 0 : index
    %c0_21 = arith.constant 0 : index
    %33 = vector.load %arg9[%c0_20, %c0_21] : memref<32x32xbf16, #tpu.memory_space<vmem>>, vector<32x32xbf16>
    %cst_22 = arith.constant dense<0.000000e+00> : vector<256x32xf32>
    %34 = tpu.matmul %32, %33, %cst_22 {dimension_numbers = #tpu.dot_dimension_numbers<[1], [0], [0], [1], [0, 0, 1, 1], [], []>} : vector<256x32xbf16>, vector<32x32xbf16>, vector<256x32xf32> -> vector<256x32xf32>
    %c0_23 = arith.constant 0 : index
    %c0_24 = arith.constant 0 : index
    %35 = vector.load %arg10[%c0_23, %c0_24] : memref<1x32xf32, #tpu.memory_space<vmem>>, vector<1x32xf32>
    %36 = vector.broadcast %35 : vector<1x32xf32> to vector<256x32xf32>
    %37 = arith.addf %34, %36 : vector<256x32xf32>
    %38 = tpu.iota {dimensions = array<i32: 0>} : vector<256x1xi32>
    %c256_i32 = arith.constant 256 : i32
    %39 = arith.muli %arg0, %c256_i32 : i32
    %40 = vector.broadcast %39 : i32 to vector<256x1xi32>
    %41 = arith.addi %38, %40 : vector<256x1xi32>
    %c256_i32_25 = arith.constant 256 : i32
    %42 = vector.broadcast %c256_i32_25 : i32 to vector<256x1xi32>
    %43 = arith.cmpi slt, %41, %42 : vector<256x1xi32>
    %cst_26 = arith.constant 0.000000e+00 : f32
    %44 = vector.shape_cast %43 : vector<256x1xi1> to vector<256x1xi1>
    %45 = vector.broadcast %44 : vector<256x1xi1> to vector<256x32xi1>
    %46 = vector.broadcast %cst_26 : f32 to vector<256x32xf32>
    %47 = arith.select %45, %37, %46 : vector<256x32xi1>, vector<256x32xf32>
    %c0_27 = arith.constant 0 : index
    %c0_28 = arith.constant 0 : index
    %48 = vector.load %arg14[%c0_27, %c0_28] : memref<2x32xf32, #tpu.memory_space<vmem>>, vector<1x32xf32>
    %cst_29 = arith.constant dense<0.000000e+00> : vector<32xf32>
    %49 = vector.multi_reduction <add>, %47, %cst_29 [0] : vector<256x32xf32> to vector<32xf32>
    %50 = vector.shape_cast %49 : vector<32xf32> to vector<1x32xf32>
    %51 = arith.addf %48, %50 : vector<1x32xf32>
    %c0_30 = arith.constant 0 : index
    %c0_31 = arith.constant 0 : index
    %52 = vector.load %arg14[%c0_30, %c0_31] : memref<2x32xf32, #tpu.memory_space<vmem>>, vector<1x32xf32>
    tpu.vector_store %arg14[%c0_30, %c0_31], %51 {strides = array<i32>} : memref<2x32xf32, #tpu.memory_space<vmem>>, vector<1x32xf32>,
    %c1_32 = arith.constant 1 : index
    %c0_33 = arith.constant 0 : index
    %53 = vector.load %arg14[%c1_32, %c0_33] : memref<2x32xf32, #tpu.memory_space<vmem>>, vector<1x32xf32>
    %54 = arith.mulf %47, %47 : vector<256x32xf32>
    %cst_34 = arith.constant dense<0.000000e+00> : vector<32xf32>
    %55 = vector.multi_reduction <add>, %54, %cst_34 [0] : vector<256x32xf32> to vector<32xf32>
    %56 = vector.shape_cast %55 : vector<32xf32> to vector<1x32xf32>
    %57 = arith.addf %53, %56 : vector<1x32xf32>
    %c1_35 = arith.constant 1 : index
    %c0_36 = arith.constant 0 : index
    %58 = vector.load %arg14[%c1_35, %c0_36] : memref<2x32xf32, #tpu.memory_space<vmem>>, vector<1x32xf32>
    tpu.vector_store %arg14[%c1_35, %c0_36], %57 {strides = array<i32>} : memref<2x32xf32, #tpu.memory_space<vmem>>, vector<1x32xf32>,
    %c0_i32_37 = arith.constant 0 : i32
    %59 = arith.cmpi eq, %arg0, %c0_i32_37 : i32
    %60 = arith.extui %59 : i1 to i32
    %c0_i32_38 = arith.constant 0 : i32
    %61 = arith.cmpi ne, %60, %c0_i32_38 : i32
    scf.if %61 {
      %c0_39 = arith.constant 0 : index
      %c0_40 = arith.constant 0 : index
      %62 = vector.load %arg14[%c0_39, %c0_40] : memref<2x32xf32, #tpu.memory_space<vmem>>, vector<1x32xf32>
      %cst_41 = arith.constant 2.560000e+02 : f32
      %63 = vector.broadcast %cst_41 : f32 to vector<1x32xf32>
      %64 = arith.divf %62, %63 : vector<1x32xf32>
      %c1_42 = arith.constant 1 : index
      %c0_43 = arith.constant 0 : index
      %65 = vector.load %arg14[%c1_42, %c0_43] : memref<2x32xf32, #tpu.memory_space<vmem>>, vector<1x32xf32>
      %cst_44 = arith.constant 2.560000e+02 : f32
      %66 = vector.broadcast %cst_44 : f32 to vector<1x32xf32>
      %67 = arith.divf %65, %66 : vector<1x32xf32>
      %68 = arith.mulf %64, %64 : vector<1x32xf32>
      %69 = arith.subf %67, %68 : vector<1x32xf32>
      %c0_45 = arith.constant 0 : index
      %c0_46 = arith.constant 0 : index
      %70 = vector.load %arg11[%c0_45, %c0_46] : memref<1x32xf32, #tpu.memory_space<vmem>>, vector<1x32xf32>
      %cst_47 = arith.constant 9.99999974E-6 : f32
      %71 = vector.broadcast %cst_47 : f32 to vector<1x32xf32>
      %72 = arith.addf %69, %71 : vector<1x32xf32>
      %73 = math.rsqrt %72 : vector<1x32xf32>
      %74 = arith.mulf %70, %73 : vector<1x32xf32>
      %c0_48 = arith.constant 0 : index
      %c0_49 = arith.constant 0 : index
      %75 = vector.load %arg13[%c0_48, %c0_49] : memref<2x32xf32, #tpu.memory_space<vmem>>, vector<1x32xf32>
      tpu.vector_store %arg13[%c0_48, %c0_49], %74 {strides = array<i32>} : memref<2x32xf32, #tpu.memory_space<vmem>>, vector<1x32xf32>,
      %c0_50 = arith.constant 0 : index
      %c0_51 = arith.constant 0 : index
      %76 = vector.load %arg12[%c0_50, %c0_51] : memref<1x32xf32, #tpu.memory_space<vmem>>, vector<1x32xf32>
      %77 = arith.mulf %64, %74 : vector<1x32xf32>
      %78 = arith.subf %76, %77 : vector<1x32xf32>
      %c1_52 = arith.constant 1 : index
      %c0_53 = arith.constant 0 : index
      %79 = vector.load %arg13[%c1_52, %c0_53] : memref<2x32xf32, #tpu.memory_space<vmem>>, vector<1x32xf32>
      tpu.vector_store %arg13[%c1_52, %c0_53], %78 {strides = array<i32>} : memref<2x32xf32, #tpu.memory_space<vmem>>, vector<1x32xf32>,
    } else {
    }
    return
  }
  func.func @transform_0(%arg0: i32) -> (i32, i32) {
    %c0_i32 = arith.constant 0 : i32
    %c0_i32_0 = arith.constant 0 : i32
    return %arg0, %c0_i32 : i32, i32
  }
  func.func @transform_1(%arg0: i32) -> (i32, i32, i32) {
    %c0_i32 = arith.constant 0 : i32
    %c0_i32_0 = arith.constant 0 : i32
    %c0_i32_1 = arith.constant 0 : i32
    return %arg0, %c0_i32, %c0_i32_0 : i32, i32, i32
  }
  func.func @transform_2(%arg0: i32) -> (i32, i32) {
    %c0_i32 = arith.constant 0 : i32
    %c0_i32_0 = arith.constant 0 : i32
    return %arg0, %c0_i32 : i32, i32
  }
  func.func @transform_3(%arg0: i32) -> (i32, i32) {
    %c0_i32 = arith.constant 0 : i32
    %c0_i32_0 = arith.constant 0 : i32
    %c0_i32_1 = arith.constant 0 : i32
    return %c0_i32, %c0_i32_0 : i32, i32
  }
  func.func @transform_4(%arg0: i32) -> (i32, i32) {
    %c0_i32 = arith.constant 0 : i32
    %c0_i32_0 = arith.constant 0 : i32
    %c0_i32_1 = arith.constant 0 : i32
    return %c0_i32, %c0_i32_0 : i32, i32
  }
  func.func @transform_5(%arg0: i32) -> (i32, i32) {
    %c0_i32 = arith.constant 0 : i32
    %c0_i32_0 = arith.constant 0 : i32
    %c0_i32_1 = arith.constant 0 : i32
    return %c0_i32, %c0_i32_0 : i32, i32
  }
  func.func @transform_6(%arg0: i32) -> (i32, i32) {
    %c0_i32 = arith.constant 0 : i32
    %c0_i32_0 = arith.constant 0 : i32
    %c0_i32_1 = arith.constant 0 : i32
    return %c0_i32, %c0_i32_0 : i32, i32
  }
  func.func @transform_7(%arg0: i32) -> (i32, i32) {
    %c0_i32 = arith.constant 0 : i32
    %c0_i32_0 = arith.constant 0 : i32
    %c0_i32_1 = arith.constant 0 : i32
    return %c0_i32, %c0_i32_0 : i32, i32
  }
  func.func @transform_8(%arg0: i32) -> (i32, i32) {
    %c0_i32 = arith.constant 0 : i32
    %c0_i32_0 = arith.constant 0 : i32
    %c0_i32_1 = arith.constant 0 : i32
    return %c0_i32, %c0_i32_0 : i32, i32
  }
  func.func @transform_9(%arg0: i32) -> (i32, i32) {
    %c0_i32 = arith.constant 0 : i32
    %c0_i32_0 = arith.constant 0 : i32
    %c0_i32_1 = arith.constant 0 : i32
    return %c0_i32, %c0_i32_0 : i32, i32
  }
  func.func @transform_10(%arg0: i32) -> (i32, i32) {
    %c0_i32 = arith.constant 0 : i32
    %c0_i32_0 = arith.constant 0 : i32
    %c0_i32_1 = arith.constant 0 : i32
    return %c0_i32, %c0_i32_0 : i32, i32
  }
  func.func @transform_11(%arg0: i32) -> (i32, i32) {
    %c0_i32 = arith.constant 0 : i32
    %c0_i32_0 = arith.constant 0 : i32
    %c0_i32_1 = arith.constant 0 : i32
    return %c0_i32, %c0_i32_0 : i32, i32
  }
  func.func @transform_12(%arg0: i32) -> (i32, i32) {
    %c0_i32 = arith.constant 0 : i32
    %c0_i32_0 = arith.constant 0 : i32
    %c0_i32_1 = arith.constant 0 : i32
    return %c0_i32, %c0_i32_0 : i32, i32
  }
}

module attributes {stable_mosaic.version = 11 : i64} {
  func.func @_attn_apply_kernel(%arg0: i32, %arg1: memref<256x3xbf16, #tpu.memory_space<vmem>>, %arg2: memref<32x1x32xf32, #tpu.memory_space<vmem>>, %arg3: memref<256x32xbf16, #tpu.memory_space<vmem>>, %arg4: memref<256x32xf32, #tpu.memory_space<vmem>>, %arg5: memref<32x16xf32, #tpu.memory_space<vmem>>, %arg6: memref<3x16xbf16, #tpu.memory_space<vmem>>, %arg7: memref<1x16xf32, #tpu.memory_space<vmem>>, %arg8: memref<2x16xf32, #tpu.memory_space<vmem>>, %arg9: memref<16x32xbf16, #tpu.memory_space<vmem>>, %arg10: memref<1x32xf32, #tpu.memory_space<vmem>>, %arg11: memref<32x32xbf16, #tpu.memory_space<vmem>>, %arg12: memref<1x32xf32, #tpu.memory_space<vmem>>, %arg13: memref<2x32xf32, #tpu.memory_space<vmem>>, %arg14: memref<32x32xbf16, #tpu.memory_space<vmem>>, %arg15: memref<1x32xf32, #tpu.memory_space<vmem>>, %arg16: memref<32x16xbf16, #tpu.memory_space<vmem>>, %arg17: memref<1x16xf32, #tpu.memory_space<vmem>>, %arg18: memref<32x24xbf16, #tpu.memory_space<vmem>>, %arg19: memref<1x24xf32, #tpu.memory_space<vmem>>, %arg20: memref<32x16xf32, #tpu.memory_space<vmem>>, %arg21: memref<32x24xf32, #tpu.memory_space<vmem>>) attributes {dimension_semantics = [#tpu.dimension_semantics<parallel>], iteration_bounds = array<i64: 1>, scalar_prefetch = 0 : i64, scratch_operands = 0 : i64, tpu.core_type = #tpu.core_type<tc>, window_params = [{transform_indices = @transform_0, window_bounds = array<i64: 256, 3>}, {transform_indices = @transform_1, window_bounds = array<i64: 32, 1, 32>}, {transform_indices = @transform_2, window_bounds = array<i64: 256, 32>}, {transform_indices = @transform_3, window_bounds = array<i64: 256, 32>}, {transform_indices = @transform_4, window_bounds = array<i64: 32, 16>}, {pipeline_mode = #tpu.pipeline_mode<synchronous>, transform_indices = @transform_5, window_bounds = array<i64: 3, 16>}, {pipeline_mode = #tpu.pipeline_mode<synchronous>, transform_indices = @transform_6, window_bounds = array<i64: 1, 16>}, {pipeline_mode = #tpu.pipeline_mode<synchronous>, transform_indices = @transform_7, window_bounds = array<i64: 2, 16>}, {pipeline_mode = #tpu.pipeline_mode<synchronous>, transform_indices = @transform_8, window_bounds = array<i64: 16, 32>}, {pipeline_mode = #tpu.pipeline_mode<synchronous>, transform_indices = @transform_9, window_bounds = array<i64: 1, 32>}, {pipeline_mode = #tpu.pipeline_mode<synchronous>, transform_indices = @transform_10, window_bounds = array<i64: 32, 32>}, {pipeline_mode = #tpu.pipeline_mode<synchronous>, transform_indices = @transform_11, window_bounds = array<i64: 1, 32>}, {pipeline_mode = #tpu.pipeline_mode<synchronous>, transform_indices = @transform_12, window_bounds = array<i64: 2, 32>}, {pipeline_mode = #tpu.pipeline_mode<synchronous>, transform_indices = @transform_13, window_bounds = array<i64: 32, 32>}, {pipeline_mode = #tpu.pipeline_mode<synchronous>, transform_indices = @transform_14, window_bounds = array<i64: 1, 32>}, {pipeline_mode = #tpu.pipeline_mode<synchronous>, transform_indices = @transform_15, window_bounds = array<i64: 32, 16>}, {pipeline_mode = #tpu.pipeline_mode<synchronous>, transform_indices = @transform_16, window_bounds = array<i64: 1, 16>}, {pipeline_mode = #tpu.pipeline_mode<synchronous>, transform_indices = @transform_17, window_bounds = array<i64: 32, 24>}, {pipeline_mode = #tpu.pipeline_mode<synchronous>, transform_indices = @transform_18, window_bounds = array<i64: 1, 24>}, {transform_indices = @transform_19, window_bounds = array<i64: 32, 16>}, {transform_indices = @transform_20, window_bounds = array<i64: 32, 24>}]} {
    %c0 = arith.constant 0 : index
    %c0_0 = arith.constant 0 : index
    %0 = vector.load %arg1[%c0, %c0_0] : memref<256x3xbf16, #tpu.memory_space<vmem>>, vector<256x3xbf16>
    %c0_1 = arith.constant 0 : index
    %c0_2 = arith.constant 0 : index
    %1 = vector.load %arg6[%c0_1, %c0_2] : memref<3x16xbf16, #tpu.memory_space<vmem>>, vector<3x16xbf16>
    %cst = arith.constant dense<0.000000e+00> : vector<256x16xf32>
    %2 = tpu.matmul %0, %1, %cst {dimension_numbers = #tpu.dot_dimension_numbers<[1], [0], [0], [1], [0, 0, 1, 1], [], []>} : vector<256x3xbf16>, vector<3x16xbf16>, vector<256x16xf32> -> vector<256x16xf32>
    %c0_3 = arith.constant 0 : index
    %c0_4 = arith.constant 0 : index
    %3 = vector.load %arg7[%c0_3, %c0_4] : memref<1x16xf32, #tpu.memory_space<vmem>>, vector<1x16xf32>
    %4 = vector.broadcast %3 : vector<1x16xf32> to vector<256x16xf32>
    %5 = arith.addf %2, %4 : vector<256x16xf32>
    %c0_5 = arith.constant 0 : index
    %c0_6 = arith.constant 0 : index
    %6 = vector.load %arg8[%c0_5, %c0_6] : memref<2x16xf32, #tpu.memory_space<vmem>>, vector<1x16xf32>
    %7 = vector.broadcast %6 : vector<1x16xf32> to vector<256x16xf32>
    %8 = arith.mulf %5, %7 : vector<256x16xf32>
    %c1 = arith.constant 1 : index
    %c0_7 = arith.constant 0 : index
    %9 = vector.load %arg8[%c1, %c0_7] : memref<2x16xf32, #tpu.memory_space<vmem>>, vector<1x16xf32>
    %10 = vector.broadcast %9 : vector<1x16xf32> to vector<256x16xf32>
    %11 = arith.addf %8, %10 : vector<256x16xf32>
    %cst_8 = arith.constant 0.000000e+00 : f32
    %12 = vector.broadcast %cst_8 : f32 to vector<256x16xf32>
    %13 = arith.maximumf %11, %12 : vector<256x16xf32>
    %14 = arith.truncf %13 : vector<256x16xf32> to vector<256x16xbf16>
    %c0_9 = arith.constant 0 : index
    %c0_10 = arith.constant 0 : index
    %15 = vector.load %arg9[%c0_9, %c0_10] : memref<16x32xbf16, #tpu.memory_space<vmem>>, vector<16x32xbf16>
    %cst_11 = arith.constant dense<0.000000e+00> : vector<256x32xf32>
    %16 = tpu.matmul %14, %15, %cst_11 {dimension_numbers = #tpu.dot_dimension_numbers<[1], [0], [0], [1], [0, 0, 1, 1], [], []>} : vector<256x16xbf16>, vector<16x32xbf16>, vector<256x32xf32> -> vector<256x32xf32>
    %c0_12 = arith.constant 0 : index
    %c0_13 = arith.constant 0 : index
    %17 = vector.load %arg10[%c0_12, %c0_13] : memref<1x32xf32, #tpu.memory_space<vmem>>, vector<1x32xf32>
    %18 = vector.broadcast %17 : vector<1x32xf32> to vector<256x32xf32>
    %19 = arith.addf %16, %18 : vector<256x32xf32>
    %20 = vector.shape_cast %19 : vector<256x32xf32> to vector<32x8x32xf32>
    %c0_14 = arith.constant 0 : index
    %c0_15 = arith.constant 0 : index
    %21 = vector.load %arg3[%c0_14, %c0_15] : memref<256x32xbf16, #tpu.memory_space<vmem>>, vector<256x32xbf16>
    %22 = arith.extf %21 : vector<256x32xbf16> to vector<256x32xf32>
    %23 = vector.shape_cast %22 : vector<256x32xf32> to vector<32x8x32xf32>
    %c0_16 = arith.constant 0 : index
    %c0_17 = arith.constant 0 : index
    %c0_18 = arith.constant 0 : index
    %24 = vector.load %arg2[%c0_16, %c0_17, %c0_18] : memref<32x1x32xf32, #tpu.memory_space<vmem>>, vector<32x1x32xf32>
    %25 = vector.broadcast %24 : vector<32x1x32xf32> to vector<32x8x32xf32>
    %26 = arith.subf %23, %25 : vector<32x8x32xf32>
    %27 = arith.addf %26, %20 : vector<32x8x32xf32>
    %28 = vector.shape_cast %27 : vector<32x8x32xf32> to vector<256x32xf32>
    %29 = arith.truncf %28 : vector<256x32xf32> to vector<256x32xbf16>
    %c0_19 = arith.constant 0 : index
    %c0_20 = arith.constant 0 : index
    %30 = vector.load %arg11[%c0_19, %c0_20] : memref<32x32xbf16, #tpu.memory_space<vmem>>, vector<32x32xbf16>
    %cst_21 = arith.constant dense<0.000000e+00> : vector<256x32xf32>
    %31 = tpu.matmul %29, %30, %cst_21 {dimension_numbers = #tpu.dot_dimension_numbers<[1], [0], [0], [1], [0, 0, 1, 1], [], []>} : vector<256x32xbf16>, vector<32x32xbf16>, vector<256x32xf32> -> vector<256x32xf32>
    %c0_22 = arith.constant 0 : index
    %c0_23 = arith.constant 0 : index
    %32 = vector.load %arg12[%c0_22, %c0_23] : memref<1x32xf32, #tpu.memory_space<vmem>>, vector<1x32xf32>
    %33 = vector.broadcast %32 : vector<1x32xf32> to vector<256x32xf32>
    %34 = arith.addf %31, %33 : vector<256x32xf32>
    %c0_24 = arith.constant 0 : index
    %c0_25 = arith.constant 0 : index
    %35 = vector.load %arg13[%c0_24, %c0_25] : memref<2x32xf32, #tpu.memory_space<vmem>>, vector<1x32xf32>
    %36 = vector.broadcast %35 : vector<1x32xf32> to vector<256x32xf32>
    %37 = arith.mulf %34, %36 : vector<256x32xf32>
    %c1_26 = arith.constant 1 : index
    %c0_27 = arith.constant 0 : index
    %38 = vector.load %arg13[%c1_26, %c0_27] : memref<2x32xf32, #tpu.memory_space<vmem>>, vector<1x32xf32>
    %39 = vector.broadcast %38 : vector<1x32xf32> to vector<256x32xf32>
    %40 = arith.addf %37, %39 : vector<256x32xf32>
    %cst_28 = arith.constant 0.000000e+00 : f32
    %41 = vector.broadcast %cst_28 : f32 to vector<256x32xf32>
    %42 = arith.maximumf %40, %41 : vector<256x32xf32>
    %43 = arith.truncf %42 : vector<256x32xf32> to vector<256x32xbf16>
    %c0_29 = arith.constant 0 : index
    %c0_30 = arith.constant 0 : index
    %44 = vector.load %arg14[%c0_29, %c0_30] : memref<32x32xbf16, #tpu.memory_space<vmem>>, vector<32x32xbf16>
    %cst_31 = arith.constant dense<0.000000e+00> : vector<256x32xf32>
    %45 = tpu.matmul %43, %44, %cst_31 {dimension_numbers = #tpu.dot_dimension_numbers<[1], [0], [0], [1], [0, 0, 1, 1], [], []>} : vector<256x32xbf16>, vector<32x32xbf16>, vector<256x32xf32> -> vector<256x32xf32>
    %c0_32 = arith.constant 0 : index
    %c0_33 = arith.constant 0 : index
    %46 = vector.load %arg15[%c0_32, %c0_33] : memref<1x32xf32, #tpu.memory_space<vmem>>, vector<1x32xf32>
    %47 = vector.broadcast %46 : vector<1x32xf32> to vector<256x32xf32>
    %48 = arith.addf %45, %47 : vector<256x32xf32>
    %49 = vector.shape_cast %48 : vector<256x32xf32> to vector<32x8x32xf32>
    %cst_34 = arith.constant dense<0xFF800000> : vector<32x32xf32>
    %50 = vector.multi_reduction <maximumf>, %49, %cst_34 [1] : vector<32x8x32xf32> to vector<32x32xf32>
    %51 = vector.shape_cast %50 : vector<32x32xf32> to vector<32x1x32xf32>
    %52 = vector.broadcast %51 : vector<32x1x32xf32> to vector<32x8x32xf32>
    %53 = arith.subf %49, %52 : vector<32x8x32xf32>
    %54 = math.exp %53 : vector<32x8x32xf32>
    %cst_35 = arith.constant dense<0.000000e+00> : vector<32x32xf32>
    %55 = vector.multi_reduction <add>, %54, %cst_35 [1] : vector<32x8x32xf32> to vector<32x32xf32>
    %56 = vector.shape_cast %55 : vector<32x32xf32> to vector<32x1x32xf32>
    %57 = tpu.reciprocal %56 {approx = true} : vector<32x1x32xf32> -> vector<32x1x32xf32>
    %58 = vector.broadcast %57 : vector<32x1x32xf32> to vector<32x8x32xf32>
    %59 = arith.mulf %54, %58 : vector<32x8x32xf32>
    %c0_36 = arith.constant 0 : index
    %c0_37 = arith.constant 0 : index
    %60 = vector.load %arg4[%c0_36, %c0_37] : memref<256x32xf32, #tpu.memory_space<vmem>>, vector<256x32xf32>
    %61 = vector.shape_cast %60 : vector<256x32xf32> to vector<32x8x32xf32>
    %62 = arith.addf %61, %20 : vector<32x8x32xf32>
    %63 = arith.mulf %62, %59 : vector<32x8x32xf32>
    %cst_38 = arith.constant dense<0.000000e+00> : vector<32x32xf32>
    %64 = vector.multi_reduction <add>, %63, %cst_38 [1] : vector<32x8x32xf32> to vector<32x32xf32>
    %65 = arith.truncf %64 : vector<32x32xf32> to vector<32x32xbf16>
    %c0_39 = arith.constant 0 : index
    %c0_40 = arith.constant 0 : index
    %66 = vector.load %arg16[%c0_39, %c0_40] : memref<32x16xbf16, #tpu.memory_space<vmem>>, vector<32x16xbf16>
    %cst_41 = arith.constant dense<0.000000e+00> : vector<32x16xf32>
    %67 = tpu.matmul %65, %66, %cst_41 {dimension_numbers = #tpu.dot_dimension_numbers<[1], [0], [0], [1], [0, 0, 1, 1], [], []>} : vector<32x32xbf16>, vector<32x16xbf16>, vector<32x16xf32> -> vector<32x16xf32>
    %c0_42 = arith.constant 0 : index
    %c0_43 = arith.constant 0 : index
    %68 = vector.load %arg17[%c0_42, %c0_43] : memref<1x16xf32, #tpu.memory_space<vmem>>, vector<1x16xf32>
    %69 = vector.broadcast %68 : vector<1x16xf32> to vector<32x16xf32>
    %70 = arith.addf %67, %69 : vector<32x16xf32>
    %c0_44 = arith.constant 0 : index
    %c0_45 = arith.constant 0 : index
    %71 = vector.load %arg5[%c0_44, %c0_45] : memref<32x16xf32, #tpu.memory_space<vmem>>, vector<32x16xf32>
    %72 = arith.addf %70, %71 : vector<32x16xf32>
    %c0_46 = arith.constant 0 : index
    %c0_47 = arith.constant 0 : index
    %73 = vector.load %arg20[%c0_46, %c0_47] : memref<32x16xf32, #tpu.memory_space<vmem>>, vector<32x16xf32>
    tpu.vector_store %arg20[%c0_46, %c0_47], %72 {strides = array<i32>} : memref<32x16xf32, #tpu.memory_space<vmem>>, vector<32x16xf32>,
    %c0_48 = arith.constant 0 : index
    %c0_49 = arith.constant 0 : index
    %74 = vector.load %arg18[%c0_48, %c0_49] : memref<32x24xbf16, #tpu.memory_space<vmem>>, vector<32x24xbf16>
    %cst_50 = arith.constant dense<0.000000e+00> : vector<32x24xf32>
    %75 = tpu.matmul %65, %74, %cst_50 {dimension_numbers = #tpu.dot_dimension_numbers<[1], [0], [0], [1], [0, 0, 1, 1], [], []>} : vector<32x32xbf16>, vector<32x24xbf16>, vector<32x24xf32> -> vector<32x24xf32>
    %c0_51 = arith.constant 0 : index
    %c0_52 = arith.constant 0 : index
    %76 = vector.load %arg19[%c0_51, %c0_52] : memref<1x24xf32, #tpu.memory_space<vmem>>, vector<1x24xf32>
    %77 = vector.broadcast %76 : vector<1x24xf32> to vector<32x24xf32>
    %78 = arith.addf %75, %77 : vector<32x24xf32>
    %c0_53 = arith.constant 0 : index
    %c0_54 = arith.constant 0 : index
    %79 = vector.load %arg21[%c0_53, %c0_54] : memref<32x24xf32, #tpu.memory_space<vmem>>, vector<32x24xf32>
    tpu.vector_store %arg21[%c0_53, %c0_54], %78 {strides = array<i32>} : memref<32x24xf32, #tpu.memory_space<vmem>>, vector<32x24xf32>,
    return
  }
  func.func @transform_0(%arg0: i32) -> (i32, i32) {
    %c0_i32 = arith.constant 0 : i32
    %c0_i32_0 = arith.constant 0 : i32
    return %arg0, %c0_i32 : i32, i32
  }
  func.func @transform_1(%arg0: i32) -> (i32, i32, i32) {
    %c0_i32 = arith.constant 0 : i32
    %c0_i32_0 = arith.constant 0 : i32
    %c0_i32_1 = arith.constant 0 : i32
    return %arg0, %c0_i32, %c0_i32_0 : i32, i32, i32
  }
  func.func @transform_2(%arg0: i32) -> (i32, i32) {
    %c0_i32 = arith.constant 0 : i32
    %c0_i32_0 = arith.constant 0 : i32
    return %arg0, %c0_i32 : i32, i32
  }
  func.func @transform_3(%arg0: i32) -> (i32, i32) {
    %c0_i32 = arith.constant 0 : i32
    %c0_i32_0 = arith.constant 0 : i32
    return %arg0, %c0_i32 : i32, i32
  }
  func.func @transform_4(%arg0: i32) -> (i32, i32) {
    %c0_i32 = arith.constant 0 : i32
    %c0_i32_0 = arith.constant 0 : i32
    return %arg0, %c0_i32 : i32, i32
  }
  func.func @transform_5(%arg0: i32) -> (i32, i32) {
    %c0_i32 = arith.constant 0 : i32
    %c0_i32_0 = arith.constant 0 : i32
    %c0_i32_1 = arith.constant 0 : i32
    return %c0_i32, %c0_i32_0 : i32, i32
  }
  func.func @transform_6(%arg0: i32) -> (i32, i32) {
    %c0_i32 = arith.constant 0 : i32
    %c0_i32_0 = arith.constant 0 : i32
    %c0_i32_1 = arith.constant 0 : i32
    return %c0_i32, %c0_i32_0 : i32, i32
  }
  func.func @transform_7(%arg0: i32) -> (i32, i32) {
    %c0_i32 = arith.constant 0 : i32
    %c0_i32_0 = arith.constant 0 : i32
    %c0_i32_1 = arith.constant 0 : i32
    return %c0_i32, %c0_i32_0 : i32, i32
  }
  func.func @transform_8(%arg0: i32) -> (i32, i32) {
    %c0_i32 = arith.constant 0 : i32
    %c0_i32_0 = arith.constant 0 : i32
    %c0_i32_1 = arith.constant 0 : i32
    return %c0_i32, %c0_i32_0 : i32, i32
  }
  func.func @transform_9(%arg0: i32) -> (i32, i32) {
    %c0_i32 = arith.constant 0 : i32
    %c0_i32_0 = arith.constant 0 : i32
    %c0_i32_1 = arith.constant 0 : i32
    return %c0_i32, %c0_i32_0 : i32, i32
  }
  func.func @transform_10(%arg0: i32) -> (i32, i32) {
    %c0_i32 = arith.constant 0 : i32
    %c0_i32_0 = arith.constant 0 : i32
    %c0_i32_1 = arith.constant 0 : i32
    return %c0_i32, %c0_i32_0 : i32, i32
  }
  func.func @transform_11(%arg0: i32) -> (i32, i32) {
    %c0_i32 = arith.constant 0 : i32
    %c0_i32_0 = arith.constant 0 : i32
    %c0_i32_1 = arith.constant 0 : i32
    return %c0_i32, %c0_i32_0 : i32, i32
  }
  func.func @transform_12(%arg0: i32) -> (i32, i32) {
    %c0_i32 = arith.constant 0 : i32
    %c0_i32_0 = arith.constant 0 : i32
    %c0_i32_1 = arith.constant 0 : i32
    return %c0_i32, %c0_i32_0 : i32, i32
  }
  func.func @transform_13(%arg0: i32) -> (i32, i32) {
    %c0_i32 = arith.constant 0 : i32
    %c0_i32_0 = arith.constant 0 : i32
    %c0_i32_1 = arith.constant 0 : i32
    return %c0_i32, %c0_i32_0 : i32, i32
  }
  func.func @transform_14(%arg0: i32) -> (i32, i32) {
    %c0_i32 = arith.constant 0 : i32
    %c0_i32_0 = arith.constant 0 : i32
    %c0_i32_1 = arith.constant 0 : i32
    return %c0_i32, %c0_i32_0 : i32, i32
  }
  func.func @transform_15(%arg0: i32) -> (i32, i32) {
    %c0_i32 = arith.constant 0 : i32
    %c0_i32_0 = arith.constant 0 : i32
    %c0_i32_1 = arith.constant 0 : i32
    return %c0_i32, %c0_i32_0 : i32, i32
  }
  func.func @transform_16(%arg0: i32) -> (i32, i32) {
    %c0_i32 = arith.constant 0 : i32
    %c0_i32_0 = arith.constant 0 : i32
    %c0_i32_1 = arith.constant 0 : i32
    return %c0_i32, %c0_i32_0 : i32, i32
  }
  func.func @transform_17(%arg0: i32) -> (i32, i32) {
    %c0_i32 = arith.constant 0 : i32
    %c0_i32_0 = arith.constant 0 : i32
    %c0_i32_1 = arith.constant 0 : i32
    return %c0_i32, %c0_i32_0 : i32, i32
  }
  func.func @transform_18(%arg0: i32) -> (i32, i32) {
    %c0_i32 = arith.constant 0 : i32
    %c0_i32_0 = arith.constant 0 : i32
    %c0_i32_1 = arith.constant 0 : i32
    return %c0_i32, %c0_i32_0 : i32, i32
  }
  func.func @transform_19(%arg0: i32) -> (i32, i32) {
    %c0_i32 = arith.constant 0 : i32
    %c0_i32_0 = arith.constant 0 : i32
    return %arg0, %c0_i32 : i32, i32
  }
  func.func @transform_20(%arg0: i32) -> (i32, i32) {
    %c0_i32 = arith.constant 0 : i32
    %c0_i32_0 = arith.constant 0 : i32
    return %arg0, %c0_i32 : i32, i32
  }
}

</mosaic_0001>

<llo_original>
// kernel: custom-call.10
$region0: #{custom-call.10}
  %s0 = inlined_call_operand.vmem [shape: f32[2,48], index: 0, kind: output, shape index: {}]

// kernel: _lambda_.6
$region0: #{_lambda_.6}
  #allocation0 [shape = 'u32[]', space=smem, size = 0x4, offset = 0x4, fixed_abs, tag = 'smem constant byte address 0x4 - core index']
  #allocation1 [shape = 'u32[72,128]{1,0:T(1,128)}', space=vmem, size = 0x9000, scoped, tag = 'internal scratch']
  %s0 = inlined_call_operand.vmem [shape: bf16[32,16], index: 0, kind: input, shape index: {}]
  %s1 = inlined_call_operand.vmem [shape: bf16[16,32], index: 1, kind: input, shape index: {}]
  %s2 = inlined_call_operand.vmem [shape: f32[1,32], index: 2, kind: input, shape index: {}]
  %s3 = inlined_call_operand.vmem [shape: f32[32,32], index: 3, kind: output, shape index: {}]
  %s4 = sld [smem:[#allocation0]]
  $region22: #{_lambda_.6} parent=0
    _
  %s6 = ssub.s32 1, %s4
  %s7 = scalar_select 0, %s6, %s4
  // Predicated region
  $region2: #{_lambda_.6} parent=0 // pred_check
    _
  $region3: #{_lambda_.6} parent=0 // pred_check_branch
    %9 = sbr.rel (0) target = $region5
  $region4: #{_lambda_.6} parent=0 // pred_region
    _
  $region5: #{_lambda_.6} parent=0 // pred_fallthru
    _
  // Predicated region
  $region6: #{_lambda_.6} parent=0 // pred_check
    _
  $region7: #{_lambda_.6} parent=0 // pred_check_branch
    %11 = sbr.rel (0) target = $region9
  $region8: #{_lambda_.6} parent=0 // pred_region
    _
  $region9: #{_lambda_.6} parent=0 // pred_fallthru
    _
  // Predicated region
  $region10: #{_lambda_.6} parent=0 // pred_check
    _
  $region11: #{_lambda_.6} parent=0 // pred_check_branch
    %13 = sbr.rel (0) target = $region13
  $region12: #{_lambda_.6} parent=0 // pred_region
    _
  $region13: #{_lambda_.6} parent=0 // pred_fallthru
    _
  %v15 = vld [vmem:[%s0] sm:$0xf]
  %v16 = vld [vmem:[%s0 + $0x4] sm:$0xf]
  %v17 = vld [vmem:[%s0 + $0x8] sm:$0xf]
  %v18 = vld [vmem:[%s0 + $0xc] sm:$0xf]
  %v19 = vld [vmem:[%s1] sm:$0xf]
  %v20 = vld [vmem:[%s1 + $0x4] sm:$0xf]
  %v21 = vld [vmem:[%s2] sm:$0x1]
  %v23 = vperm.slane %v21, 0
  %v29 = vunpack.c.l.b16 %v15
  %v30 = vunpack.c.l.b16 %v16
  %v31 = vunpack.c.l.b16 %v17
  %v32 = vunpack.c.l.b16 %v18
  %v33 = vpack.c.b16 %v30, %v29
  %v34 = vpack.c.b16 %v32, %v31
  %v37 = vunpack.c.l.b16 %v19
  %v38 = vunpack.c.l.b16 %v20
  %v39 = vpack.c.b16 %v38, %v37
  %vm41 = vcmask 130048
  %v43 = vsel %vm41, %v33, 0
  %v46 = vsel %vm41, %v34, 0
  %48 = vmatpush.bf16.msra.mxu0 0
  %49 = vmatpush.bf16.msra.mxu0 0
  %50 = vmatpush.bf16.msra.mxu0 0
  %51 = vmatpush.bf16.msra.mxu0 0
  %52 = vmatpush.bf16.msra.mxu0 0
  %53 = vmatpush.bf16.msra.mxu0 0
  %54 = vmatpush.bf16.msra.mxu0 0
  %55 = vmatpush.bf16.msra.mxu0 %v39
  %56 = vmatmul.bf16.gmra.mxu0 %v43
  %v57 = vpop.f32.mrf.mxu0
  %v58 = vadd.f32 %v23, %v57
  %v59 = vpop.f32.mrf.mxu0
  %v60 = vadd.f32 %v23, %v59
  %61 = vmatmul.bf16.gmra.mxu0 %v46
  %v62 = vpop.f32.mrf.mxu0
  %v63 = vadd.f32 %v23, %v62
  %v64 = vpop.f32.mrf.mxu0
  %v65 = vadd.f32 %v23, %v64
  %66 = vdwg.mxu0
  %vm67 = vcmask 261120
  %68 = vst.msk [vmem:[%s3] sm:$0xff] %vm67, %v58
  %69 = vst.msk [vmem:[%s3 + $0x8] sm:$0xff] %vm67, %v60
  %70 = vst.msk [vmem:[%s3 + $0x10] sm:$0xff] %vm67, %v63
  %71 = vst.msk [vmem:[%s3 + $0x18] sm:$0xff] %vm67, %v65
  // Predicated region
  $region14: #{_lambda_.6} parent=0 // pred_check
    _
  $region15: #{_lambda_.6} parent=0 // pred_check_branch
    %73 = sbr.rel (0) target = $region17
  $region16: #{_lambda_.6} parent=0 // pred_region
    _
  $region17: #{_lambda_.6} parent=0 // pred_fallthru
    _
  // Predicated region
  $region18: #{_lambda_.6} parent=0 // pred_check
    _
  $region19: #{_lambda_.6} parent=0 // pred_check_branch
    %75 = sbr.rel (0) target = $region21
  $region20: #{_lambda_.6} parent=0 // pred_region
    _
  $region21: #{_lambda_.6} parent=0 // pred_fallthru
    _

// kernel: _lambda_.7
$region0: #{_lambda_.7}
  #allocation0 [shape = 'u32[]', space=smem, size = 0x4, offset = 0x4, fixed_abs, tag = 'smem constant byte address 0x4 - core index']
  #allocation1 [shape = 'u32[72,128]{1,0:T(1,128)}', space=vmem, size = 0x9000, scoped, tag = 'internal scratch']
  %s0 = inlined_call_operand.vmem [shape: bf16[64,24], index: 0, kind: input, shape index: {}]
  %s1 = inlined_call_operand.vmem [shape: bf16[24,32], index: 1, kind: input, shape index: {}]
  %s2 = inlined_call_operand.vmem [shape: f32[1,32], index: 2, kind: input, shape index: {}]
  %s3 = inlined_call_operand.vmem [shape: f32[64,32], index: 3, kind: output, shape index: {}]
  %s4 = sld [smem:[#allocation0]]
  $region22: #{_lambda_.7} parent=0
    _
  %s6 = ssub.s32 1, %s4
  %s7 = scalar_select 0, %s6, %s4
  // Predicated region
  $region2: #{_lambda_.7} parent=0 // pred_check
    _
  $region3: #{_lambda_.7} parent=0 // pred_check_branch
    %9 = sbr.rel (0) target = $region5
  $region4: #{_lambda_.7} parent=0 // pred_region
    _
  $region5: #{_lambda_.7} parent=0 // pred_fallthru
    _
  // Predicated region
  $region6: #{_lambda_.7} parent=0 // pred_check
    _
  $region7: #{_lambda_.7} parent=0 // pred_check_branch
    %11 = sbr.rel (0) target = $region9
  $region8: #{_lambda_.7} parent=0 // pred_region
    _
  $region9: #{_lambda_.7} parent=0 // pred_fallthru
    _
  // Predicated region
  $region10: #{_lambda_.7} parent=0 // pred_check
    _
  $region11: #{_lambda_.7} parent=0 // pred_check_branch
    %13 = sbr.rel (0) target = $region13
  $region12: #{_lambda_.7} parent=0 // pred_region
    _
  $region13: #{_lambda_.7} parent=0 // pred_fallthru
    _
  %v15 = vld [vmem:[%s0] sm:$0xf]
  %v16 = vld [vmem:[%s0 + $0x4] sm:$0xf]
  %v17 = vld [vmem:[%s0 + $0x8] sm:$0xf]
  %v18 = vld [vmem:[%s0 + $0xc] sm:$0xf]
  %v19 = vld [vmem:[%s0 + $0x10] sm:$0xf]
  %v20 = vld [vmem:[%s0 + $0x14] sm:$0xf]
  %v21 = vld [vmem:[%s0 + $0x18] sm:$0xf]
  %v22 = vld [vmem:[%s0 + $0x1c] sm:$0xf]
  %v23 = vld [vmem:[%s1] sm:$0xf]
  %v24 = vld [vmem:[%s1 + $0x4] sm:$0xf]
  %v25 = vld [vmem:[%s1 + $0x8] sm:$0xf]
  %v26 = vld [vmem:[%s2] sm:$0x1]
  %v28 = vperm.slane %v26, 0
  %v38 = vunpack.c.l.b16 %v15
  %v39 = vunpack.c.l.b16 %v16
  %v40 = vunpack.c.l.b16 %v17
  %v41 = vunpack.c.l.b16 %v18
  %v42 = vunpack.c.l.b16 %v19
  %v43 = vunpack.c.l.b16 %v20
  %v44 = vunpack.c.l.b16 %v21
  %v45 = vunpack.c.l.b16 %v22
  %v46 = vpack.c.b16 %v39, %v38
  %v47 = vpack.c.b16 %v41, %v40
  %v48 = vpack.c.b16 %v43, %v42
  %v49 = vpack.c.b16 %v45, %v44
  %v53 = vunpack.c.l.b16 %v23
  %v54 = vunpack.c.l.b16 %v24
  %v55 = vunpack.c.l.b16 %v25
  %v56 = vpack.c.b16 %v54, %v53
  %v57 = vpack.c.b16 %v55, %v55
  %vm59 = vcmask 195584
  %v61 = vsel %vm59, %v46, 0
  %v64 = vsel %vm59, %v47, 0
  %v67 = vsel %vm59, %v48, 0
  %v70 = vsel %vm59, %v49, 0
  %vm72 = vcmask 1043456
  %v74 = vsel %vm72, %v57, 0
  %76 = vmatpush.bf16.msra.mxu0 0
  %77 = vmatpush.bf16.msra.mxu0 0
  %78 = vmatpush.bf16.msra.mxu0 0
  %79 = vmatpush.bf16.msra.mxu0 0
  %80 = vmatpush.bf16.msra.mxu0 0
  %81 = vmatpush.bf16.msra.mxu0 0
  %82 = vmatpush.bf16.msra.mxu0 %v74
  %83 = vmatpush.bf16.msra.mxu0 %v56
  %84 = vmatmul.bf16.gmra.mxu0 %v61
  %v85 = vpop.f32.mrf.mxu0
  %v86 = vadd.f32 %v28, %v85
  %v87 = vpop.f32.mrf.mxu0
  %v88 = vadd.f32 %v28, %v87
  %89 = vmatmul.bf16.gmra.mxu0 %v64
  %v90 = vpop.f32.mrf.mxu0
  %v91 = vadd.f32 %v28, %v90
  %v92 = vpop.f32.mrf.mxu0
  %v93 = vadd.f32 %v28, %v92
  %94 = vmatmul.bf16.gmra.mxu0 %v67
  %v95 = vpop.f32.mrf.mxu0
  %v96 = vadd.f32 %v28, %v95
  %v97 = vpop.f32.mrf.mxu0
  %v98 = vadd.f32 %v28, %v97
  %99 = vmatmul.bf16.gmra.mxu0 %v70
  %v100 = vpop.f32.mrf.mxu0
  %v101 = vadd.f32 %v28, %v100
  %v102 = vpop.f32.mrf.mxu0
  %v103 = vadd.f32 %v28, %v102
  %104 = vdwg.mxu0
  %vm105 = vcmask 261120
  %106 = vst.msk [vmem:[%s3] sm:$0xff] %vm105, %v86
  %107 = vst.msk [vmem:[%s3 + $0x8] sm:$0xff] %vm105, %v88
  %108 = vst.msk [vmem:[%s3 + $0x10] sm:$0xff] %vm105, %v91
  %109 = vst.msk [vmem:[%s3 + $0x18] sm:$0xff] %vm105, %v93
  %110 = vst.msk [vmem:[%s3 + $0x20] sm:$0xff] %vm105, %v96
  %111 = vst.msk [vmem:[%s3 + $0x28] sm:$0xff] %vm105, %v98
  %112 = vst.msk [vmem:[%s3 + $0x30] sm:$0xff] %vm105, %v101
  %113 = vst.msk [vmem:[%s3 + $0x38] sm:$0xff] %vm105, %v103
  // Predicated region
  $region14: #{_lambda_.7} parent=0 // pred_check
    _
  $region15: #{_lambda_.7} parent=0 // pred_check_branch
    %115 = sbr.rel (0) target = $region17
  $region16: #{_lambda_.7} parent=0 // pred_region
    _
  $region17: #{_lambda_.7} parent=0 // pred_fallthru
    _
  // Predicated region
  $region18: #{_lambda_.7} parent=0 // pred_check
    _
  $region19: #{_lambda_.7} parent=0 // pred_check_branch
    %117 = sbr.rel (0) target = $region21
  $region20: #{_lambda_.7} parent=0 // pred_region
    _
  $region21: #{_lambda_.7} parent=0 // pred_fallthru
    _

// kernel: _lambda_.8
$region0: #{_lambda_.8}
  #allocation0 [shape = 'u32[]', space=smem, size = 0x4, offset = 0x4, fixed_abs, tag = 'smem constant byte address 0x4 - core index']
  #allocation1 [shape = 'u32[72,128]{1,0:T(1,128)}', space=vmem, size = 0x9000, scoped, tag = 'internal scratch']
  %s0 = inlined_call_operand.vmem [shape: bf16[32,32], index: 0, kind: input, shape index: {}]
  %s1 = inlined_call_operand.vmem [shape: bf16[32,32], index: 1, kind: input, shape index: {}]
  %s2 = inlined_call_operand.vmem [shape: f32[1,32], index: 2, kind: input, shape index: {}]
  %s3 = inlined_call_operand.vmem [shape: bf16[32,32], index: 3, kind: input, shape index: {}]
  %s4 = inlined_call_operand.vmem [shape: bf16[32,64], index: 4, kind: input, shape index: {}]
  %s5 = inlined_call_operand.vmem [shape: f32[1,64], index: 5, kind: input, shape index: {}]
  %s6 = inlined_call_operand.vmem [shape: f32[32,32], index: 6, kind: output, shape index: {0}]
  %s7 = inlined_call_operand.vmem [shape: f32[32,64], index: 7, kind: output, shape index: {1}]
  %8 = xla_tuple %s6, %s7
  %s9 = sld [smem:[#allocation0]]
  $region42: #{_lambda_.8} parent=0
    _
  %s11 = ssub.s32 1, %s9
  %s12 = scalar_select 0, %s11, %s9
  // Predicated region
  $region2: #{_lambda_.8} parent=0 // pred_check
    _
  $region3: #{_lambda_.8} parent=0 // pred_check_branch
    %14 = sbr.rel (0) target = $region5
  $region4: #{_lambda_.8} parent=0 // pred_region
    _
  $region5: #{_lambda_.8} parent=0 // pred_fallthru
    _
  // Predicated region
  $region6: #{_lambda_.8} parent=0 // pred_check
    _
  $region7: #{_lambda_.8} parent=0 // pred_check_branch
    %16 = sbr.rel (0) target = $region9
  $region8: #{_lambda_.8} parent=0 // pred_region
    _
  $region9: #{_lambda_.8} parent=0 // pred_fallthru
    _
  // Predicated region
  $region10: #{_lambda_.8} parent=0 // pred_check
    _
  $region11: #{_lambda_.8} parent=0 // pred_check_branch
    %18 = sbr.rel (0) target = $region13
  $region12: #{_lambda_.8} parent=0 // pred_region
    _
  $region13: #{_lambda_.8} parent=0 // pred_fallthru
    _
  // Predicated region
  $region14: #{_lambda_.8} parent=0 // pred_check
    _
  $region15: #{_lambda_.8} parent=0 // pred_check_branch
    %20 = sbr.rel (0) target = $region17
  $region16: #{_lambda_.8} parent=0 // pred_region
    _
  $region17: #{_lambda_.8} parent=0 // pred_fallthru
    _
  // Predicated region
  $region18: #{_lambda_.8} parent=0 // pred_check
    _
  $region19: #{_lambda_.8} parent=0 // pred_check_branch
    %22 = sbr.rel (0) target = $region21
  $region20: #{_lambda_.8} parent=0 // pred_region
    _
  $region21: #{_lambda_.8} parent=0 // pred_fallthru
    _
  // Predicated region
  $region22: #{_lambda_.8} parent=0 // pred_check
    _
  $region23: #{_lambda_.8} parent=0 // pred_check_branch
    %24 = sbr.rel (0) target = $region25
  $region24: #{_lambda_.8} parent=0 // pred_region
    _
  $region25: #{_lambda_.8} parent=0 // pred_fallthru
    _
  %v26 = vld [vmem:[%s0] sm:$0xf]
  %v27 = vld [vmem:[%s0 + $0x4] sm:$0xf]
  %v28 = vld [vmem:[%s0 + $0x8] sm:$0xf]
  %v29 = vld [vmem:[%s0 + $0xc] sm:$0xf]
  %v30 = vld [vmem:[%s1] sm:$0xf]
  %v31 = vld [vmem:[%s1 + $0x4] sm:$0xf]
  %v32 = vld [vmem:[%s1 + $0x8] sm:$0xf]
  %v33 = vld [vmem:[%s1 + $0xc] sm:$0xf]
  %v34 = vld [vmem:[%s2] sm:$0x1]
  %v36 = vperm.slane %v34, 0
  %v42 = vunpack.c.l.b16 %v26
  %v43 = vunpack.c.l.b16 %v27
  %v44 = vunpack.c.l.b16 %v28
  %v45 = vunpack.c.l.b16 %v29
  %v46 = vpack.c.b16 %v43, %v42
  %v47 = vpack.c.b16 %v45, %v44
  %v52 = vunpack.c.l.b16 %v30
  %v53 = vunpack.c.l.b16 %v31
  %v54 = vunpack.c.l.b16 %v32
  %v55 = vunpack.c.l.b16 %v33
  %v56 = vpack.c.b16 %v53, %v52
  %v57 = vpack.c.b16 %v55, %v54
  %vm60 = vcmask 261120
  %v62 = vsel %vm60, %v46, 0
  %v65 = vsel %vm60, %v47, 0
  %67 = vmatpush.bf16.msra.mxu0 0
  %68 = vmatpush.bf16.msra.mxu0 0
  %69 = vmatpush.bf16.msra.mxu0 0
  %70 = vmatpush.bf16.msra.mxu0 0
  %71 = vmatpush.bf16.msra.mxu0 0
  %72 = vmatpush.bf16.msra.mxu0 0
  %73 = vmatpush.bf16.msra.mxu0 %v57
  %74 = vmatpush.bf16.msra.mxu0 %v56
  %75 = vmatmul.bf16.gmra.mxu0 %v62
  %v76 = vpop.f32.mrf.mxu0
  %v77 = vadd.f32 %v36, %v76
  %v78 = vpop.f32.mrf.mxu0
  %v79 = vadd.f32 %v36, %v78
  %80 = vmatmul.bf16.gmra.mxu0 %v65
  %v81 = vpop.f32.mrf.mxu0
  %v82 = vadd.f32 %v36, %v81
  %v83 = vpop.f32.mrf.mxu0
  %v84 = vadd.f32 %v36, %v83
  %85 = vdwg.mxu0
  %86 = vst.msk [vmem:[%s6] sm:$0xff] %vm60, %v77
  %87 = vst.msk [vmem:[%s6 + $0x8] sm:$0xff] %vm60, %v79
  %88 = vst.msk [vmem:[%s6 + $0x10] sm:$0xff] %vm60, %v82
  %89 = vst.msk [vmem:[%s6 + $0x18] sm:$0xff] %vm60, %v84
  %v90 = vld [vmem:[%s3] sm:$0xf]
  %v91 = vld [vmem:[%s3 + $0x4] sm:$0xf]
  %v92 = vld [vmem:[%s3 + $0x8] sm:$0xf]
  %v93 = vld [vmem:[%s3 + $0xc] sm:$0xf]
  %v94 = vld [vmem:[%s4] sm:$0xf]
  %v95 = vld [vmem:[%s4 + $0x4] sm:$0xf]
  %v96 = vld [vmem:[%s4 + $0x8] sm:$0xf]
  %v97 = vld [vmem:[%s4 + $0xc] sm:$0xf]
  %v98 = vld [vmem:[%s5] sm:$0x1]
  %v100 = vperm.slane %v98, 0
  %v106 = vunpack.c.l.b16 %v90
  %v107 = vunpack.c.l.b16 %v91
  %v108 = vunpack.c.l.b16 %v92
  %v109 = vunpack.c.l.b16 %v93
  %v110 = vpack.c.b16 %v107, %v106
  %v111 = vpack.c.b16 %v109, %v108
  %v116 = vunpack.c.l.b16 %v94
  %v117 = vunpack.c.l.b16 %v95
  %v118 = vunpack.c.l.b16 %v96
  %v119 = vunpack.c.l.b16 %v97
  %v120 = vpack.c.b16 %v117, %v116
  %v121 = vpack.c.b16 %v119, %v118
  %v125 = vsel %vm60, %v110, 0
  %v128 = vsel %vm60, %v111, 0
  %130 = vmatpush.bf16.msra.mxu0 0
  %131 = vmatpush.bf16.msra.mxu0 0
  %132 = vmatpush.bf16.msra.mxu0 0
  %133 = vmatpush.bf16.msra.mxu0 0
  %134 = vmatpush.bf16.msra.mxu0 0
  %135 = vmatpush.bf16.msra.mxu0 0
  %136 = vmatpush.bf16.msra.mxu0 %v121
  %137 = vmatpush.bf16.msra.mxu0 %v120
  %138 = vmatmul.bf16.gmra.mxu0 %v125
  %v139 = vpop.f32.mrf.mxu0
  %v140 = vadd.f32 %v100, %v139
  %v141 = vpop.f32.mrf.mxu0
  %v142 = vadd.f32 %v100, %v141
  %143 = vmatmul.bf16.gmra.mxu0 %v128
  %v144 = vpop.f32.mrf.mxu0
  %v145 = vadd.f32 %v100, %v144
  %v146 = vpop.f32.mrf.mxu0
  %v147 = vadd.f32 %v100, %v146
  %148 = vdwg.mxu0
  %vm149 = vcmask 523264
  %150 = vst.msk [vmem:[%s7] sm:$0xff] %vm149, %v140
  %151 = vst.msk [vmem:[%s7 + $0x8] sm:$0xff] %vm149, %v142
  %152 = vst.msk [vmem:[%s7 + $0x10] sm:$0xff] %vm149, %v145
  %153 = vst.msk [vmem:[%s7 + $0x18] sm:$0xff] %vm149, %v147
  // Predicated region
  $region26: #{_lambda_.8} parent=0 // pred_check
    _
  $region27: #{_lambda_.8} parent=0 // pred_check_branch
    %155 = sbr.rel (0) target = $region29
  $region28: #{_lambda_.8} parent=0 // pred_region
    _
  $region29: #{_lambda_.8} parent=0 // pred_fallthru
    _
  // Predicated region
  $region30: #{_lambda_.8} parent=0 // pred_check
    _
  $region31: #{_lambda_.8} parent=0 // pred_check_branch
    %157 = sbr.rel (0) target = $region33
  $region32: #{_lambda_.8} parent=0 // pred_region
    _
  $region33: #{_lambda_.8} parent=0 // pred_fallthru
    _
  // Predicated region
  $region34: #{_lambda_.8} parent=0 // pred_check
    _
  $region35: #{_lambda_.8} parent=0 // pred_check_branch
    %159 = sbr.rel (0) target = $region37
  $region36: #{_lambda_.8} parent=0 // pred_region
    _
  $region37: #{_lambda_.8} parent=0 // pred_fallthru
    _
  // Predicated region
  $region38: #{_lambda_.8} parent=0 // pred_check
    _
  $region39: #{_lambda_.8} parent=0 // pred_check_branch
    %161 = sbr.rel (0) target = $region41
  $region40: #{_lambda_.8} parent=0 // pred_region
    _
  $region41: #{_lambda_.8} parent=0 // pred_fallthru
    _

// kernel: _lambda_.9
$region0: #{_lambda_.9}
  #allocation0 [shape = 'u32[]', space=smem, size = 0x4, offset = 0x4, fixed_abs, tag = 'smem constant byte address 0x4 - core index']
  #allocation1 [shape = 'u32[72,128]{1,0:T(1,128)}', space=vmem, size = 0x9000, scoped, tag = 'internal scratch']
  #allocation2 [shape = 'f32[2,16]{1,0:T(2,128)}', space=vmem, size = 0x400, scoped, tag = 'scratch operand']
  %s0 = inlined_call_operand.vmem [shape: bf16[256,3], index: 0, kind: input, shape index: {}]
  %s1 = inlined_call_operand.vmem [shape: bf16[3,16], index: 1, kind: input, shape index: {}]
  %s2 = inlined_call_operand.vmem [shape: f32[1,16], index: 2, kind: input, shape index: {}]
  %s3 = inlined_call_operand.vmem [shape: f32[1,16], index: 3, kind: input, shape index: {}]
  %s4 = inlined_call_operand.vmem [shape: f32[1,16], index: 4, kind: input, shape index: {}]
  %s5 = inlined_call_operand.vmem [shape: f32[2,16], index: 5, kind: output, shape index: {}]
  %s6 = sld [smem:[#allocation0]]
  $region38: #{_lambda_.9} parent=0
    _
  %s8 = ssub.s32 1, %s6
  %s9 = scalar_select 0, %s8, %s6
  // Predicated region
  $region2: #{_lambda_.9} parent=0 // pred_check
    _
  $region3: #{_lambda_.9} parent=0 // pred_check_branch
    %11 = sbr.rel (0) target = $region5
  $region4: #{_lambda_.9} parent=0 // pred_region
    _
  $region5: #{_lambda_.9} parent=0 // pred_fallthru
    _
  // Predicated region
  $region6: #{_lambda_.9} parent=0 // pred_check
    _
  $region7: #{_lambda_.9} parent=0 // pred_check_branch
    %13 = sbr.rel (0) target = $region9
  $region8: #{_lambda_.9} parent=0 // pred_region
    _
  $region9: #{_lambda_.9} parent=0 // pred_fallthru
    _
  // Predicated region
  $region10: #{_lambda_.9} parent=0 // pred_check
    _
  $region11: #{_lambda_.9} parent=0 // pred_check_branch
    %15 = sbr.rel (0) target = $region13
  $region12: #{_lambda_.9} parent=0 // pred_region
    _
  $region13: #{_lambda_.9} parent=0 // pred_fallthru
    _
  // Predicated region
  $region14: #{_lambda_.9} parent=0 // pred_check
    _
  $region15: #{_lambda_.9} parent=0 // pred_check_branch
    %17 = sbr.rel (0) target = $region17
  $region16: #{_lambda_.9} parent=0 // pred_region
    _
  $region17: #{_lambda_.9} parent=0 // pred_fallthru
    _
  // Predicated region
  $region18: #{_lambda_.9} parent=0 // pred_check
    _
  $region19: #{_lambda_.9} parent=0 // pred_check_branch
    %19 = sbr.rel (0) target = $region21
  $region20: #{_lambda_.9} parent=0 // pred_region
    _
  $region21: #{_lambda_.9} parent=0 // pred_fallthru
    _
  %p21 = scmp.eq.s32.totalorder 0, 0
  // Predicated region
  $region22: #{_lambda_.9} parent=0 // pred_check
    %p22 = pneg %p21
  $region23: #{_lambda_.9} parent=0 // pred_check_branch
    %24 = sbr.rel (%p22) target = $region25
  $region24: #{_lambda_.9} parent=0 // pred_region
    %vm25 = vcmask 123904
    %26 = vst.msk [vmem:[#allocation2] sm:$0x3] %vm25, 0.0
  $region25: #{_lambda_.9} parent=0 // pred_fallthru
    _
  %v27 = vld [vmem:[%s0] sm:$0xf]
  %v28 = vld [vmem:[%s0 + $0x4] sm:$0xf]
  %v29 = vld [vmem:[%s0 + $0x8] sm:$0xf]
  %v30 = vld [vmem:[%s0 + $0xc] sm:$0xf]
  %v31 = vld [vmem:[%s0 + $0x10] sm:$0xf]
  %v32 = vld [vmem:[%s0 + $0x14] sm:$0xf]
  %v33 = vld [vmem:[%s0 + $0x18] sm:$0xf]
  %v34 = vld [vmem:[%s0 + $0x1c] sm:$0xf]
  %v35 = vld [vmem:[%s0 + $0x20] sm:$0xf]
  %v36 = vld [vmem:[%s0 + $0x24] sm:$0xf]
  %v37 = vld [vmem:[%s0 + $0x28] sm:$0xf]
  %v38 = vld [vmem:[%s0 + $0x2c] sm:$0xf]
  %v39 = vld [vmem:[%s0 + $0x30] sm:$0xf]
  %v40 = vld [vmem:[%s0 + $0x34] sm:$0xf]
  %v41 = vld [vmem:[%s0 + $0x38] sm:$0xf]
  %v42 = vld [vmem:[%s0 + $0x3c] sm:$0xf]
  %v43 = vld [vmem:[%s0 + $0x40] sm:$0xf]
  %v44 = vld [vmem:[%s0 + $0x44] sm:$0xf]
  %v45 = vld [vmem:[%s0 + $0x48] sm:$0xf]
  %v46 = vld [vmem:[%s0 + $0x4c] sm:$0xf]
  %v47 = vld [vmem:[%s0 + $0x50] sm:$0xf]
  %v48 = vld [vmem:[%s0 + $0x54] sm:$0xf]
  %v49 = vld [vmem:[%s0 + $0x58] sm:$0xf]
  %v50 = vld [vmem:[%s0 + $0x5c] sm:$0xf]
  %v51 = vld [vmem:[%s0 + $0x60] sm:$0xf]
  %v52 = vld [vmem:[%s0 + $0x64] sm:$0xf]
  %v53 = vld [vmem:[%s0 + $0x68] sm:$0xf]
  %v54 = vld [vmem:[%s0 + $0x6c] sm:$0xf]
  %v55 = vld [vmem:[%s0 + $0x70] sm:$0xf]
  %v56 = vld [vmem:[%s0 + $0x74] sm:$0xf]
  %v57 = vld [vmem:[%s0 + $0x78] sm:$0xf]
  %v58 = vld [vmem:[%s0 + $0x7c] sm:$0xf]
  %v59 = vld [vmem:[%s1] sm:$0x3]
  %v60 = vld [vmem:[%s2] sm:$0x1]
  %v62 = vperm.slane %v60, 0
  %v96 = vunpack.c.l.b16 %v27
  %v97 = vunpack.c.l.b16 %v28
  %v98 = vunpack.c.l.b16 %v29
  %v99 = vunpack.c.l.b16 %v30
  %v100 = vunpack.c.l.b16 %v31
  %v101 = vunpack.c.l.b16 %v32
  %v102 = vunpack.c.l.b16 %v33
  %v103 = vunpack.c.l.b16 %v34
  %v104 = vunpack.c.l.b16 %v35
  %v105 = vunpack.c.l.b16 %v36
  %v106 = vunpack.c.l.b16 %v37
  %v107 = vunpack.c.l.b16 %v38
  %v108 = vunpack.c.l.b16 %v39
  %v109 = vunpack.c.l.b16 %v40
  %v110 = vunpack.c.l.b16 %v41
  %v111 = vunpack.c.l.b16 %v42
  %v112 = vunpack.c.l.b16 %v43
  %v113 = vunpack.c.l.b16 %v44
  %v114 = vunpack.c.l.b16 %v45
  %v115 = vunpack.c.l.b16 %v46
  %v116 = vunpack.c.l.b16 %v47
  %v117 = vunpack.c.l.b16 %v48
  %v118 = vunpack.c.l.b16 %v49
  %v119 = vunpack.c.l.b16 %v50
  %v120 = vunpack.c.l.b16 %v51
  %v121 = vunpack.c.l.b16 %v52
  %v122 = vunpack.c.l.b16 %v53
  %v123 = vunpack.c.l.b16 %v54
  %v124 = vunpack.c.l.b16 %v55
  %v125 = vunpack.c.l.b16 %v56
  %v126 = vunpack.c.l.b16 %v57
  %v127 = vunpack.c.l.b16 %v58
  %v128 = vpack.c.b16 %v97, %v96
  %v129 = vpack.c.b16 %v99, %v98
  %v130 = vpack.c.b16 %v101, %v100
  %v131 = vpack.c.b16 %v103, %v102
  %v132 = vpack.c.b16 %v105, %v104
  %v133 = vpack.c.b16 %v107, %v106
  %v134 = vpack.c.b16 %v109, %v108
  %v135 = vpack.c.b16 %v111, %v110
  %v136 = vpack.c.b16 %v113, %v112
  %v137 = vpack.c.b16 %v115, %v114
  %v138 = vpack.c.b16 %v117, %v116
  %v139 = vpack.c.b16 %v119, %v118
  %v140 = vpack.c.b16 %v121, %v120
  %v141 = vpack.c.b16 %v123, %v122
  %v142 = vpack.c.b16 %v125, %v124
  %v143 = vpack.c.b16 %v127, %v126
  %vm144 = vcmask 23552
  %v146 = vsel %vm144, %v128, 0
  %v149 = vsel %vm144, %v129, 0
  %v152 = vsel %vm144, %v130, 0
  %v155 = vsel %vm144, %v131, 0
  %v158 = vsel %vm144, %v132, 0
  %v161 = vsel %vm144, %v133, 0
  %v164 = vsel %vm144, %v134, 0
  %v167 = vsel %vm144, %v135, 0
  %v170 = vsel %vm144, %v136, 0
  %v173 = vsel %vm144, %v137, 0
  %v176 = vsel %vm144, %v138, 0
  %v179 = vsel %vm144, %v139, 0
  %v182 = vsel %vm144, %v140, 0
  %v185 = vsel %vm144, %v141, 0
  %v188 = vsel %vm144, %v142, 0
  %v191 = vsel %vm144, %v143, 0
  %vm193 = vcmask 1040384
  %vm194 = vcmask 1041408
  %v195 = vsel %vm193, 4294967295, 65535
  %v196 = vsel %vm194, %v195, 0
  %v198 = vand.u32 %v59, %v196
  %200 = vmatpush.bf16.msra.mxu0 0
  %201 = vmatpush.bf16.msra.mxu0 0
  %202 = vmatpush.bf16.msra.mxu0 0
  %203 = vmatpush.bf16.msra.mxu0 0
  %204 = vmatpush.bf16.msra.mxu0 0
  %205 = vmatpush.bf16.msra.mxu0 0
  %206 = vmatpush.bf16.msra.mxu0 0
  %207 = vmatpush.bf16.msra.mxu0 %v198
  %208 = vmatmul.bf16.gmra.mxu0 %v146
  %v209 = vpop.f32.mrf.mxu0
  %v210 = vadd.f32 %v62, %v209
  %v211 = vpop.f32.mrf.mxu0
  %v212 = vadd.f32 %v62, %v211
  %213 = vmatmul.bf16.gmra.mxu0 %v149
  %v214 = vpop.f32.mrf.mxu0
  %v215 = vadd.f32 %v62, %v214
  %v216 = vpop.f32.mrf.mxu0
  %v217 = vadd.f32 %v62, %v216
  %218 = vmatmul.bf16.gmra.mxu0 %v152
  %v219 = vpop.f32.mrf.mxu0
  %v220 = vadd.f32 %v62, %v219
  %v221 = vpop.f32.mrf.mxu0
  %v222 = vadd.f32 %v62, %v221
  %223 = vmatmul.bf16.gmra.mxu0 %v155
  %v224 = vpop.f32.mrf.mxu0
  %v225 = vadd.f32 %v62, %v224
  %v226 = vpop.f32.mrf.mxu0
  %v227 = vadd.f32 %v62, %v226
  %228 = vmatmul.bf16.gmra.mxu0 %v158
  %v229 = vpop.f32.mrf.mxu0
  %v230 = vadd.f32 %v62, %v229
  %v231 = vpop.f32.mrf.mxu0
  %v232 = vadd.f32 %v62, %v231
  %233 = vmatmul.bf16.gmra.mxu0 %v161
  %v234 = vpop.f32.mrf.mxu0
  %v235 = vadd.f32 %v62, %v234
  %v236 = vpop.f32.mrf.mxu0
  %v237 = vadd.f32 %v62, %v236
  %238 = vmatmul.bf16.gmra.mxu0 %v164
  %v239 = vpop.f32.mrf.mxu0
  %v240 = vadd.f32 %v62, %v239
  %v241 = vpop.f32.mrf.mxu0
  %v242 = vadd.f32 %v62, %v241
  %243 = vmatmul.bf16.gmra.mxu0 %v167
  %v244 = vpop.f32.mrf.mxu0
  %v245 = vadd.f32 %v62, %v244
  %v246 = vpop.f32.mrf.mxu0
  %v247 = vadd.f32 %v62, %v246
  %248 = vmatmul.bf16.gmra.mxu0 %v170
  %v249 = vpop.f32.mrf.mxu0
  %v250 = vadd.f32 %v62, %v249
  %v251 = vpop.f32.mrf.mxu0
  %v252 = vadd.f32 %v62, %v251
  %253 = vmatmul.bf16.gmra.mxu0 %v173
  %v254 = vpop.f32.mrf.mxu0
  %v255 = vadd.f32 %v62, %v254
  %v256 = vpop.f32.mrf.mxu0
  %v257 = vadd.f32 %v62, %v256
  %258 = vmatmul.bf16.gmra.mxu0 %v176
  %v259 = vpop.f32.mrf.mxu0
  %v260 = vadd.f32 %v62, %v259
  %v261 = vpop.f32.mrf.mxu0
  %v262 = vadd.f32 %v62, %v261
  %263 = vmatmul.bf16.gmra.mxu0 %v179
  %v264 = vpop.f32.mrf.mxu0
  %v265 = vadd.f32 %v62, %v264
  %v266 = vpop.f32.mrf.mxu0
  %v267 = vadd.f32 %v62, %v266
  %268 = vmatmul.bf16.gmra.mxu0 %v182
  %v269 = vpop.f32.mrf.mxu0
  %v270 = vadd.f32 %v62, %v269
  %v271 = vpop.f32.mrf.mxu0
  %v272 = vadd.f32 %v62, %v271
  %273 = vmatmul.bf16.gmra.mxu0 %v185
  %v274 = vpop.f32.mrf.mxu0
  %v275 = vadd.f32 %v62, %v274
  %v276 = vpop.f32.mrf.mxu0
  %v277 = vadd.f32 %v62, %v276
  %278 = vmatmul.bf16.gmra.mxu0 %v188
  %v279 = vpop.f32.mrf.mxu0
  %v280 = vadd.f32 %v62, %v279
  %v281 = vpop.f32.mrf.mxu0
  %v282 = vadd.f32 %v62, %v281
  %283 = vmatmul.bf16.gmra.mxu0 %v191
  %v284 = vpop.f32.mrf.mxu0
  %v285 = vadd.f32 %v62, %v284
  %v286 = vpop.f32.mrf.mxu0
  %v287 = vadd.f32 %v62, %v286
  %288 = vdwg.mxu0
  %v289 = vlaneseq
  %v290 = vshrl.u32 %v289, 7
  %v291 = vadd.s32 %v290, 8
  %v292 = vadd.s32 %v290, 16
  %v293 = vadd.s32 %v290, 24
  %v294 = vadd.s32 %v290, 32
  %v295 = vadd.s32 %v290, 40
  %v296 = vadd.s32 %v290, 48
  %v297 = vadd.s32 %v290, 56
  %v298 = vadd.s32 %v290, 64
  %v299 = vadd.s32 %v290, 72
  %v300 = vadd.s32 %v290, 80
  %v301 = vadd.s32 %v290, 88
  %v302 = vadd.s32 %v290, 96
  %v303 = vadd.s32 %v290, 104
  %v304 = vadd.s32 %v290, 112
  %v305 = vadd.s32 %v290, 120
  %v306 = vadd.s32 %v290, 128
  %v307 = vadd.s32 %v290, 136
  %v308 = vadd.s32 %v290, 144
  %v309 = vadd.s32 %v290, 152
  %v310 = vadd.s32 %v290, 160
  %v311 = vadd.s32 %v290, 168
  %v312 = vadd.s32 %v290, 176
  %v313 = vadd.s32 %v290, 184
  %v314 = vadd.s32 %v290, 192
  %v315 = vadd.s32 %v290, 200
  %v316 = vadd.s32 %v290, 208
  %v317 = vadd.s32 %v290, 216
  %v318 = vadd.s32 %v290, 224
  %v319 = vadd.s32 %v290, 232
  %v320 = vadd.s32 %v290, 240
  %v321 = vadd.s32 %v290, 248
  %s322 = smul.u32 0, 256
  %v323 = vstv %s322
  %v324 = vadd.s32 %v290, %v323
  %v325 = vadd.s32 %v291, %v323
  %v326 = vadd.s32 %v292, %v323
  %v327 = vadd.s32 %v293, %v323
  %v328 = vadd.s32 %v294, %v323
  %v329 = vadd.s32 %v295, %v323
  %v330 = vadd.s32 %v296, %v323
  %v331 = vadd.s32 %v297, %v323
  %v332 = vadd.s32 %v298, %v323
  %v333 = vadd.s32 %v299, %v323
  %v334 = vadd.s32 %v300, %v323
  %v335 = vadd.s32 %v301, %v323
  %v336 = vadd.s32 %v302, %v323
  %v337 = vadd.s32 %v303, %v323
  %v338 = vadd.s32 %v304, %v323
  %v339 = vadd.s32 %v305, %v323
  %v340 = vadd.s32 %v306, %v323
  %v341 = vadd.s32 %v307, %v323
  %v342 = vadd.s32 %v308, %v323
  %v343 = vadd.s32 %v309, %v323
  %v344 = vadd.s32 %v310, %v323
  %v345 = vadd.s32 %v311, %v323
  %v346 = vadd.s32 %v312, %v323
  %v347 = vadd.s32 %v313, %v323
  %v348 = vadd.s32 %v314, %v323
  %v349 = vadd.s32 %v315, %v323
  %v350 = vadd.s32 %v316, %v323
  %v351 = vadd.s32 %v317, %v323
  %v352 = vadd.s32 %v318, %v323
  %v353 = vadd.s32 %v319, %v323
  %v354 = vadd.s32 %v320, %v323
  %v355 = vadd.s32 %v321, %v323
  %vm356 = vcmp.lt.s32.totalorder %v324, 256
  %vm357 = vcmp.lt.s32.totalorder %v325, 256
  %vm358 = vcmp.lt.s32.totalorder %v326, 256
  %vm359 = vcmp.lt.s32.totalorder %v327, 256
  %vm360 = vcmp.lt.s32.totalorder %v328, 256
  %vm361 = vcmp.lt.s32.totalorder %v329, 256
  %vm362 = vcmp.lt.s32.totalorder %v330, 256
  %vm363 = vcmp.lt.s32.totalorder %v331, 256
  %vm364 = vcmp.lt.s32.totalorder %v332, 256
  %vm365 = vcmp.lt.s32.totalorder %v333, 256
  %vm366 = vcmp.lt.s32.totalorder %v334, 256
  %vm367 = vcmp.lt.s32.totalorder %v335, 256
  %vm368 = vcmp.lt.s32.totalorder %v336, 256
  %vm369 = vcmp.lt.s32.totalorder %v337, 256
  %vm370 = vcmp.lt.s32.totalorder %v338, 256
  %vm371 = vcmp.lt.s32.totalorder %v339, 256
  %vm372 = vcmp.lt.s32.totalorder %v340, 256
  %vm373 = vcmp.lt.s32.totalorder %v341, 256
  %vm374 = vcmp.lt.s32.totalorder %v342, 256
  %vm375 = vcmp.lt.s32.totalorder %v343, 256
  %vm376 = vcmp.lt.s32.totalorder %v344, 256
  %vm377 = vcmp.lt.s32.totalorder %v345, 256
  %vm378 = vcmp.lt.s32.totalorder %v346, 256
  %vm379 = vcmp.lt.s32.totalorder %v347, 256
  %vm380 = vcmp.lt.s32.totalorder %v348, 256
  %vm381 = vcmp.lt.s32.totalorder %v349, 256
  %vm382 = vcmp.lt.s32.totalorder %v350, 256
  %vm383 = vcmp.lt.s32.totalorder %v351, 256
  %vm384 = vcmp.lt.s32.totalorder %v352, 256
  %vm385 = vcmp.lt.s32.totalorder %v353, 256
  %vm386 = vcmp.lt.s32.totalorder %v354, 256
  %vm387 = vcmp.lt.s32.totalorder %v355, 256
  %v388 = vsel %vm356, 1, 0
  %v389 = vsel %vm357, 1, 0
  %v390 = vsel %vm358, 1, 0
  %v391 = vsel %vm359, 1, 0
  %v392 = vsel %vm360, 1, 0
  %v393 = vsel %vm361, 1, 0
  %v394 = vsel %vm362, 1, 0
  %v395 = vsel %vm363, 1, 0
  %v396 = vsel %vm364, 1, 0
  %v397 = vsel %vm365, 1, 0
  %v398 = vsel %vm366, 1, 0
  %v399 = vsel %vm367, 1, 0
  %v400 = vsel %vm368, 1, 0
  %v401 = vsel %vm369, 1, 0
  %v402 = vsel %vm370, 1, 0
  %v403 = vsel %vm371, 1, 0
  %v404 = vsel %vm372, 1, 0
  %v405 = vsel %vm373, 1, 0
  %v406 = vsel %vm374, 1, 0
  %v407 = vsel %vm375, 1, 0
  %v408 = vsel %vm376, 1, 0
  %v409 = vsel %vm377, 1, 0
  %v410 = vsel %vm378, 1, 0
  %v411 = vsel %vm379, 1, 0
  %v412 = vsel %vm380, 1, 0
  %v413 = vsel %vm381, 1, 0
  %v414 = vsel %vm382, 1, 0
  %v415 = vsel %vm383, 1, 0
  %v416 = vsel %vm384, 1, 0
  %v417 = vsel %vm385, 1, 0
  %v418 = vsel %vm386, 1, 0
  %v419 = vsel %vm387, 1, 0
  %vm420 = vcmp.eq.s32.totalorder %v388, 1
  %vm421 = vcmp.eq.s32.totalorder %v389, 1
  %vm422 = vcmp.eq.s32.totalorder %v390, 1
  %vm423 = vcmp.eq.s32.totalorder %v391, 1
  %vm424 = vcmp.eq.s32.totalorder %v392, 1
  %vm425 = vcmp.eq.s32.totalorder %v393, 1
  %vm426 = vcmp.eq.s32.totalorder %v394, 1
  %vm427 = vcmp.eq.s32.totalorder %v395, 1
  %vm428 = vcmp.eq.s32.totalorder %v396, 1
  %vm429 = vcmp.eq.s32.totalorder %v397, 1
  %vm430 = vcmp.eq.s32.totalorder %v398, 1
  %vm431 = vcmp.eq.s32.totalorder %v399, 1
  %vm432 = vcmp.eq.s32.totalorder %v400, 1
  %vm433 = vcmp.eq.s32.totalorder %v401, 1
  %vm434 = vcmp.eq.s32.totalorder %v402, 1
  %vm435 = vcmp.eq.s32.totalorder %v403, 1
  %vm436 = vcmp.eq.s32.totalorder %v404, 1
  %vm437 = vcmp.eq.s32.totalorder %v405, 1
  %vm438 = vcmp.eq.s32.totalorder %v406, 1
  %vm439 = vcmp.eq.s32.totalorder %v407, 1
  %vm440 = vcmp.eq.s32.totalorder %v408, 1
  %vm441 = vcmp.eq.s32.totalorder %v409, 1
  %vm442 = vcmp.eq.s32.totalorder %v410, 1
  %vm443 = vcmp.eq.s32.totalorder %v411, 1
  %vm444 = vcmp.eq.s32.totalorder %v412, 1
  %vm445 = vcmp.eq.s32.totalorder %v413, 1
  %vm446 = vcmp.eq.s32.totalorder %v414, 1
  %vm447 = vcmp.eq.s32.totalorder %v415, 1
  %vm448 = vcmp.eq.s32.totalorder %v416, 1
  %vm449 = vcmp.eq.s32.totalorder %v417, 1
  %vm450 = vcmp.eq.s32.totalorder %v418, 1
  %vm451 = vcmp.eq.s32.totalorder %v419, 1
  %v452 = vsel %vm420, %v210, 0.0
  %v453 = vsel %vm421, %v212, 0.0
  %v454 = vsel %vm422, %v215, 0.0
  %v455 = vsel %vm423, %v217, 0.0
  %v456 = vsel %vm424, %v220, 0.0
  %v457 = vsel %vm425, %v222, 0.0
  %v458 = vsel %vm426, %v225, 0.0
  %v459 = vsel %vm427, %v227, 0.0
  %v460 = vsel %vm428, %v230, 0.0
  %v461 = vsel %vm429, %v232, 0.0
  %v462 = vsel %vm430, %v235, 0.0
  %v463 = vsel %vm431, %v237, 0.0
  %v464 = vsel %vm432, %v240, 0.0
  %v465 = vsel %vm433, %v242, 0.0
  %v466 = vsel %vm434, %v245, 0.0
  %v467 = vsel %vm435, %v247, 0.0
  %v468 = vsel %vm436, %v250, 0.0
  %v469 = vsel %vm437, %v252, 0.0
  %v470 = vsel %vm438, %v255, 0.0
  %v471 = vsel %vm439, %v257, 0.0
  %v472 = vsel %vm440, %v260, 0.0
  %v473 = vsel %vm441, %v262, 0.0
  %v474 = vsel %vm442, %v265, 0.0
  %v475 = vsel %vm443, %v267, 0.0
  %v476 = vsel %vm444, %v270, 0.0
  %v477 = vsel %vm445, %v272, 0.0
  %v478 = vsel %vm446, %v275, 0.0
  %v479 = vsel %vm447, %v277, 0.0
  %v480 = vsel %vm448, %v280, 0.0
  %v481 = vsel %vm449, %v282, 0.0
  %v482 = vsel %vm450, %v285, 0.0
  %v483 = vsel %vm451, %v287, 0.0
  %v484 = vld [vmem:[#allocation2] sm:$0x1]
  %vm485 = vcmask 130048
  %v486 = vsel %vm485, %v452, 0.0
  %v487 = vsel %vm485, %v453, 0.0
  %v488 = vadd.f32 %v486, %v487
  %v489 = vsel %vm485, %v454, 0.0
  %v490 = vadd.f32 %v488, %v489
  %v491 = vsel %vm485, %v455, 0.0
  %v492 = vadd.f32 %v490, %v491
  %v493 = vsel %vm485, %v456, 0.0
  %v494 = vadd.f32 %v492, %v493
  %v495 = vsel %vm485, %v457, 0.0
  %v496 = vadd.f32 %v494, %v495
  %v497 = vsel %vm485, %v458, 0.0
  %v498 = vadd.f32 %v496, %v497
  %v499 = vsel %vm485, %v459, 0.0
  %v500 = vadd.f32 %v498, %v499
  %v501 = vsel %vm485, %v460, 0.0
  %v502 = vadd.f32 %v500, %v501
  %v503 = vsel %vm485, %v461, 0.0
  %v504 = vadd.f32 %v502, %v503
  %v505 = vsel %vm485, %v462, 0.0
  %v506 = vadd.f32 %v504, %v505
  %v507 = vsel %vm485, %v463, 0.0
  %v508 = vadd.f32 %v506, %v507
  %v509 = vsel %vm485, %v464, 0.0
  %v510 = vadd.f32 %v508, %v509
  %v511 = vsel %vm485, %v465, 0.0
  %v512 = vadd.f32 %v510, %v511
  %v513 = vsel %vm485, %v466, 0.0
  %v514 = vadd.f32 %v512, %v513
  %v515 = vsel %vm485, %v467, 0.0
  %v516 = vadd.f32 %v514, %v515
  %v517 = vsel %vm485, %v468, 0.0
  %v518 = vadd.f32 %v516, %v517
  %v519 = vsel %vm485, %v469, 0.0
  %v520 = vadd.f32 %v518, %v519
  %v521 = vsel %vm485, %v470, 0.0
  %v522 = vadd.f32 %v520, %v521
  %v523 = vsel %vm485, %v471, 0.0
  %v524 = vadd.f32 %v522, %v523
  %v525 = vsel %vm485, %v472, 0.0
  %v526 = vadd.f32 %v524, %v525
  %v527 = vsel %vm485, %v473, 0.0
  %v528 = vadd.f32 %v526, %v527
  %v529 = vsel %vm485, %v474, 0.0
  %v530 = vadd.f32 %v528, %v529
  %v531 = vsel %vm485, %v475, 0.0
  %v532 = vadd.f32 %v530, %v531
  %v533 = vsel %vm485, %v476, 0.0
  %v534 = vadd.f32 %v532, %v533
  %v535 = vsel %vm485, %v477, 0.0
  %v536 = vadd.f32 %v534, %v535
  %v537 = vsel %vm485, %v478, 0.0
  %v538 = vadd.f32 %v536, %v537
  %v539 = vsel %vm485, %v479, 0.0
  %v540 = vadd.f32 %v538, %v539
  %v541 = vsel %vm485, %v480, 0.0
  %v542 = vadd.f32 %v540, %v541
  %v543 = vsel %vm485, %v481, 0.0
  %v544 = vadd.f32 %v542, %v543
  %v545 = vsel %vm485, %v482, 0.0
  %v546 = vadd.f32 %v544, %v545
  %v547 = vsel %vm485, %v483, 0.0
  %v548 = vadd.f32 %v546, %v547
  %v549 = vrot.slane %v548, 4
  %v550 = vadd.f32 %v548, %v549
  %v551 = vrot.slane %v550, 2
  %v552 = vadd.f32 %v550, %v551
  %v553 = vrot.slane %v552, 1
  %v554 = vadd.f32 %v552, %v553
  %v555 = vadd.f32 %v484, %v554
  %vm556 = vcmask 122880
  %557 = vst.msk [vmem:[#allocation2] sm:$0x1] %vm556, %v555
  %v558 = vld [vmem:[#allocation2 + $0x1] sm:$0x1]
  %v559 = vmul.f32 %v452, %v452
  %v560 = vmul.f32 %v453, %v453
  %v561 = vmul.f32 %v454, %v454
  %v562 = vmul.f32 %v455, %v455
  %v563 = vmul.f32 %v456, %v456
  %v564 = vmul.f32 %v457, %v457
  %v565 = vmul.f32 %v458, %v458
  %v566 = vmul.f32 %v459, %v459
  %v567 = vmul.f32 %v460, %v460
  %v568 = vmul.f32 %v461, %v461
  %v569 = vmul.f32 %v462, %v462
  %v570 = vmul.f32 %v463, %v463
  %v571 = vmul.f32 %v464, %v464
  %v572 = vmul.f32 %v465, %v465
  %v573 = vmul.f32 %v466, %v466
  %v574 = vmul.f32 %v467, %v467
  %v575 = vmul.f32 %v468, %v468
  %v576 = vmul.f32 %v469, %v469
  %v577 = vmul.f32 %v470, %v470
  %v578 = vmul.f32 %v471, %v471
  %v579 = vmul.f32 %v472, %v472
  %v580 = vmul.f32 %v473, %v473
  %v581 = vmul.f32 %v474, %v474
  %v582 = vmul.f32 %v475, %v475
  %v583 = vmul.f32 %v476, %v476
  %v584 = vmul.f32 %v477, %v477
  %v585 = vmul.f32 %v478, %v478
  %v586 = vmul.f32 %v479, %v479
  %v587 = vmul.f32 %v480, %v480
  %v588 = vmul.f32 %v481, %v481
  %v589 = vmul.f32 %v482, %v482
  %v590 = vmul.f32 %v483, %v483
  %v591 = vsel %vm485, %v559, 0.0
  %v592 = vsel %vm485, %v560, 0.0
  %v593 = vadd.f32 %v591, %v592
  %v594 = vsel %vm485, %v561, 0.0
  %v595 = vadd.f32 %v593, %v594
  %v596 = vsel %vm485, %v562, 0.0
  %v597 = vadd.f32 %v595, %v596
  %v598 = vsel %vm485, %v563, 0.0
  %v599 = vadd.f32 %v597, %v598
  %v600 = vsel %vm485, %v564, 0.0
  %v601 = vadd.f32 %v599, %v600
  %v602 = vsel %vm485, %v565, 0.0
  %v603 = vadd.f32 %v601, %v602
  %v604 = vsel %vm485, %v566, 0.0
  %v605 = vadd.f32 %v603, %v604
  %v606 = vsel %vm485, %v567, 0.0
  %v607 = vadd.f32 %v605, %v606
  %v608 = vsel %vm485, %v568, 0.0
  %v609 = vadd.f32 %v607, %v608
  %v610 = vsel %vm485, %v569, 0.0
  %v611 = vadd.f32 %v609, %v610
  %v612 = vsel %vm485, %v570, 0.0
  %v613 = vadd.f32 %v611, %v612
  %v614 = vsel %vm485, %v571, 0.0
  %v615 = vadd.f32 %v613, %v614
  %v616 = vsel %vm485, %v572, 0.0
  %v617 = vadd.f32 %v615, %v616
  %v618 = vsel %vm485, %v573, 0.0
  %v619 = vadd.f32 %v617, %v618
  %v620 = vsel %vm485, %v574, 0.0
  %v621 = vadd.f32 %v619, %v620
  %v622 = vsel %vm485, %v575, 0.0
  %v623 = vadd.f32 %v621, %v622
  %v624 = vsel %vm485, %v576, 0.0
  %v625 = vadd.f32 %v623, %v624
  %v626 = vsel %vm485, %v577, 0.0
  %v627 = vadd.f32 %v625, %v626
  %v628 = vsel %vm485, %v578, 0.0
  %v629 = vadd.f32 %v627, %v628
  %v630 = vsel %vm485, %v579, 0.0
  %v631 = vadd.f32 %v629, %v630
  %v632 = vsel %vm485, %v580, 0.0
  %v633 = vadd.f32 %v631, %v632
  %v634 = vsel %vm485, %v581, 0.0
  %v635 = vadd.f32 %v633, %v634
  %v636 = vsel %vm485, %v582, 0.0
  %v637 = vadd.f32 %v635, %v636
  %v638 = vsel %vm485, %v583, 0.0
  %v639 = vadd.f32 %v637, %v638
  %v640 = vsel %vm485, %v584, 0.0
  %v641 = vadd.f32 %v639, %v640
  %v642 = vsel %vm485, %v585, 0.0
  %v643 = vadd.f32 %v641, %v642
  %v644 = vsel %vm485, %v586, 0.0
  %v645 = vadd.f32 %v643, %v644
  %v646 = vsel %vm485, %v587, 0.0
  %v647 = vadd.f32 %v645, %v646
  %v648 = vsel %vm485, %v588, 0.0
  %v649 = vadd.f32 %v647, %v648
  %v650 = vsel %vm485, %v589, 0.0
  %v651 = vadd.f32 %v649, %v650
  %v652 = vsel %vm485, %v590, 0.0
  %v653 = vadd.f32 %v651, %v652
  %v654 = vrot.slane %v653, 4
  %v655 = vadd.f32 %v653, %v654
  %v656 = vrot.slane %v655, 2
  %v657 = vadd.f32 %v655, %v656
  %v658 = vrot.slane %v657, 1
  %v659 = vadd.f32 %v657, %v658
  %v660 = vadd.f32 %v558, %v659
  %661 = vst.msk [vmem:[#allocation2 + $0x1] sm:$0x1] %vm556, %v660
  // Predicated region
  $region26: #{_lambda_.9} parent=0 // pred_check
    %p662 = pneg %p21
  $region27: #{_lambda_.9} parent=0 // pred_check_branch
    %664 = sbr.rel (%p662) target = $region29
  $region28: #{_lambda_.9} parent=0 // pred_region
    %v665 = vld [vmem:[#allocation2] sm:$0x1]
    %v666 = vrcp.pop 256.0
    %v667 = vmul.f32 256.0, %v666
    %v668 = vsub.f32 1.0, %v667
    %v669 = vmul.f32 %v666, %v668
    %v670 = vadd.f32 %v666, %v669
    %vm671 = vweird.f32 %v666
    %v672 = vsel %vm671, %v666, %v670
    %v673 = vmul.f32 %v665, %v672
    %v674 = vld [vmem:[#allocation2 + $0x1] sm:$0x1]
    %v675 = vmul.f32 %v674, %v672
    %v676 = vmul.f32 %v673, %v673
    %v677 = vsub.f32 %v675, %v676
    %v678 = vld [vmem:[%s3] sm:$0x1]
    %v679 = vadd.f32 %v677, 1e-05
    %v680 = vrsqrt.pop %v679
    %v681 = vmul.f32 %v680, %v679
    %v682 = vmul.f32 %v681, %v680
    %v683 = vmul.f32 0.5, %v682
    %v684 = vsub.f32 1.5, %v683
    %v685 = vmul.f32 %v680, %v684
    %vm686 = vweird.f32 %v679
    %vm687 = vweird.f32 %v680
    %vm688 = vmor %vm686, %vm687
    %v689 = vsel %vm688, %v680, %v685
    %v690 = vmul.f32 %v678, %v689
    %691 = vst.msk [vmem:[%s5] sm:$0x1] %vm556, %v690
    %v692 = vld [vmem:[%s4] sm:$0x1]
    %v693 = vmul.f32 %v673, %v690
    %v694 = vsub.f32 %v692, %v693
    %695 = vst.msk [vmem:[%s5 + $0x1] sm:$0x1] %vm556, %v694
  $region29: #{_lambda_.9} parent=0 // pred_fallthru
    _
  // Predicated region
  $region30: #{_lambda_.9} parent=0 // pred_check
    _
  $region31: #{_lambda_.9} parent=0 // pred_check_branch
    %697 = sbr.rel (0) target = $region33
  $region32: #{_lambda_.9} parent=0 // pred_region
    _
  $region33: #{_lambda_.9} parent=0 // pred_fallthru
    _
  // Predicated region
  $region34: #{_lambda_.9} parent=0 // pred_check
    _
  $region35: #{_lambda_.9} parent=0 // pred_check_branch
    %699 = sbr.rel (0) target = $region37
  $region36: #{_lambda_.9} parent=0 // pred_region
    _
  $region37: #{_lambda_.9} parent=0 // pred_fallthru
    _

// kernel: _lambda_.10
$region0: #{_lambda_.10}
  #allocation0 [shape = 'u32[]', space=smem, size = 0x4, offset = 0x4, fixed_abs, tag = 'smem constant byte address 0x4 - core index']
  #allocation1 [shape = 'u32[72,128]{1,0:T(1,128)}', space=vmem, size = 0x9000, scoped, tag = 'internal scratch']
  #allocation2 [shape = 'f32[2,32]{1,0:T(2,128)}', space=vmem, size = 0x400, scoped, tag = 'scratch operand']
  %s0 = inlined_call_operand.vmem [shape: bf16[256,3], index: 0, kind: input, shape index: {}]
  %s1 = inlined_call_operand.vmem [shape: f32[32,1,32], index: 1, kind: input, shape index: {}]
  %s2 = inlined_call_operand.vmem [shape: bf16[256,32], index: 2, kind: input, shape index: {}]
  %s3 = inlined_call_operand.vmem [shape: bf16[3,16], index: 3, kind: input, shape index: {}]
  %s4 = inlined_call_operand.vmem [shape: f32[1,16], index: 4, kind: input, shape index: {}]
  %s5 = inlined_call_operand.vmem [shape: f32[2,16], index: 5, kind: input, shape index: {}]
  %s6 = inlined_call_operand.vmem [shape: bf16[16,32], index: 6, kind: input, shape index: {}]
  %s7 = inlined_call_operand.vmem [shape: f32[1,32], index: 7, kind: input, shape index: {}]
  %s8 = inlined_call_operand.vmem [shape: bf16[32,32], index: 8, kind: input, shape index: {}]
  %s9 = inlined_call_operand.vmem [shape: f32[1,32], index: 9, kind: input, shape index: {}]
  %s10 = inlined_call_operand.vmem [shape: f32[1,32], index: 10, kind: input, shape index: {}]
  %s11 = inlined_call_operand.vmem [shape: f32[1,32], index: 11, kind: input, shape index: {}]
  %s12 = inlined_call_operand.vmem [shape: f32[2,32], index: 12, kind: output, shape index: {}]
  %s13 = sld [smem:[#allocation0]]
  $region66: #{_lambda_.10} parent=0
    _
  %s15 = ssub.s32 1, %s13
  %s16 = scalar_select 0, %s15, %s13
  // Predicated region
  $region2: #{_lambda_.10} parent=0 // pred_check
    _
  $region3: #{_lambda_.10} parent=0 // pred_check_branch
    %18 = sbr.rel (0) target = $region5
  $region4: #{_lambda_.10} parent=0 // pred_region
    _
  $region5: #{_lambda_.10} parent=0 // pred_fallthru
    _
  // Predicated region
  $region6: #{_lambda_.10} parent=0 // pred_check
    _
  $region7: #{_lambda_.10} parent=0 // pred_check_branch
    %20 = sbr.rel (0) target = $region9
  $region8: #{_lambda_.10} parent=0 // pred_region
    _
  $region9: #{_lambda_.10} parent=0 // pred_fallthru
    _
  // Predicated region
  $region10: #{_lambda_.10} parent=0 // pred_check
    _
  $region11: #{_lambda_.10} parent=0 // pred_check_branch
    %22 = sbr.rel (0) target = $region13
  $region12: #{_lambda_.10} parent=0 // pred_region
    _
  $region13: #{_lambda_.10} parent=0 // pred_fallthru
    _
  // Predicated region
  $region14: #{_lambda_.10} parent=0 // pred_check
    _
  $region15: #{_lambda_.10} parent=0 // pred_check_branch
    %24 = sbr.rel (0) target = $region17
  $region16: #{_lambda_.10} parent=0 // pred_region
    _
  $region17: #{_lambda_.10} parent=0 // pred_fallthru
    _
  // Predicated region
  $region18: #{_lambda_.10} parent=0 // pred_check
    _
  $region19: #{_lambda_.10} parent=0 // pred_check_branch
    %26 = sbr.rel (0) target = $region21
  $region20: #{_lambda_.10} parent=0 // pred_region
    _
  $region21: #{_lambda_.10} parent=0 // pred_fallthru
    _
  // Predicated region
  $region22: #{_lambda_.10} parent=0 // pred_check
    _
  $region23: #{_lambda_.10} parent=0 // pred_check_branch
    %28 = sbr.rel (0) target = $region25
  $region24: #{_lambda_.10} parent=0 // pred_region
    _
  $region25: #{_lambda_.10} parent=0 // pred_fallthru
    _
  // Predicated region
  $region26: #{_lambda_.10} parent=0 // pred_check
    _
  $region27: #{_lambda_.10} parent=0 // pred_check_branch
    %30 = sbr.rel (0) target = $region29
  $region28: #{_lambda_.10} parent=0 // pred_region
    _
  $region29: #{_lambda_.10} parent=0 // pred_fallthru
    _
  // Predicated region
  $region30: #{_lambda_.10} parent=0 // pred_check
    _
  $region31: #{_lambda_.10} parent=0 // pred_check_branch
    %32 = sbr.rel (0) target = $region33
  $region32: #{_lambda_.10} parent=0 // pred_region
    _
  $region33: #{_lambda_.10} parent=0 // pred_fallthru
    _
  // Predicated region
  $region34: #{_lambda_.10} parent=0 // pred_check
    _
  $region35: #{_lambda_.10} parent=0 // pred_check_branch
    %34 = sbr.rel (0) target = $region37
  $region36: #{_lambda_.10} parent=0 // pred_region
    _
  $region37: #{_lambda_.10} parent=0 // pred_fallthru
    _
  // Predicated region
  $region38: #{_lambda_.10} parent=0 // pred_check
    _
  $region39: #{_lambda_.10} parent=0 // pred_check_branch
    %36 = sbr.rel (0) target = $region41
  $region40: #{_lambda_.10} parent=0 // pred_region
    _
  $region41: #{_lambda_.10} parent=0 // pred_fallthru
    _
  // Predicated region
  $region42: #{_lambda_.10} parent=0 // pred_check
    _
  $region43: #{_lambda_.10} parent=0 // pred_check_branch
    %38 = sbr.rel (0) target = $region45
  $region44: #{_lambda_.10} parent=0 // pred_region
    _
  $region45: #{_lambda_.10} parent=0 // pred_fallthru
    _
  // Predicated region
  $region46: #{_lambda_.10} parent=0 // pred_check
    _
  $region47: #{_lambda_.10} parent=0 // pred_check_branch
    %40 = sbr.rel (0) target = $region49
  $region48: #{_lambda_.10} parent=0 // pred_region
    _
  $region49: #{_lambda_.10} parent=0 // pred_fallthru
    _
  %p42 = scmp.eq.s32.totalorder 0, 0
  // Predicated region
  $region50: #{_lambda_.10} parent=0 // pred_check
    %p43 = pneg %p42
  $region51: #{_lambda_.10} parent=0 // pred_check_branch
    %45 = sbr.rel (%p43) target = $region53
  $region52: #{_lambda_.10} parent=0 // pred_region
    %vm46 = vcmask 254976
    %47 = vst.msk [vmem:[#allocation2] sm:$0x3] %vm46, 0.0
  $region53: #{_lambda_.10} parent=0 // pred_fallthru
    _
  %v48 = vld [vmem:[%s0] sm:$0xf]
  %v49 = vld [vmem:[%s0 + $0x4] sm:$0xf]
  %v50 = vld [vmem:[%s0 + $0x8] sm:$0xf]
  %v51 = vld [vmem:[%s0 + $0xc] sm:$0xf]
  %v52 = vld [vmem:[%s0 + $0x10] sm:$0xf]
  %v53 = vld [vmem:[%s0 + $0x14] sm:$0xf]
  %v54 = vld [vmem:[%s0 + $0x18] sm:$0xf]
  %v55 = vld [vmem:[%s0 + $0x1c] sm:$0xf]
  %v56 = vld [vmem:[%s0 + $0x20] sm:$0xf]
  %v57 = vld [vmem:[%s0 + $0x24] sm:$0xf]
  %v58 = vld [vmem:[%s0 + $0x28] sm:$0xf]
  %v59 = vld [vmem:[%s0 + $0x2c] sm:$0xf]
  %v60 = vld [vmem:[%s0 + $0x30] sm:$0xf]
  %v61 = vld [vmem:[%s0 + $0x34] sm:$0xf]
  %v62 = vld [vmem:[%s0 + $0x38] sm:$0xf]
  %v63 = vld [vmem:[%s0 + $0x3c] sm:$0xf]
  %v64 = vld [vmem:[%s0 + $0x40] sm:$0xf]
  %v65 = vld [vmem:[%s0 + $0x44] sm:$0xf]
  %v66 = vld [vmem:[%s0 + $0x48] sm:$0xf]
  %v67 = vld [vmem:[%s0 + $0x4c] sm:$0xf]
  %v68 = vld [vmem:[%s0 + $0x50] sm:$0xf]
  %v69 = vld [vmem:[%s0 + $0x54] sm:$0xf]
  %v70 = vld [vmem:[%s0 + $0x58] sm:$0xf]
  %v71 = vld [vmem:[%s0 + $0x5c] sm:$0xf]
  %v72 = vld [vmem:[%s0 + $0x60] sm:$0xf]
  %v73 = vld [vmem:[%s0 + $0x64] sm:$0xf]
  %v74 = vld [vmem:[%s0 + $0x68] sm:$0xf]
  %v75 = vld [vmem:[%s0 + $0x6c] sm:$0xf]
  %v76 = vld [vmem:[%s0 + $0x70] sm:$0xf]
  %v77 = vld [vmem:[%s0 + $0x74] sm:$0xf]
  %v78 = vld [vmem:[%s0 + $0x78] sm:$0xf]
  %v79 = vld [vmem:[%s0 + $0x7c] sm:$0xf]
  %v80 = vld [vmem:[%s3] sm:$0x3]
  %v81 = vld [vmem:[%s4] sm:$0x1]
  %v83 = vperm.slane %v81, 0
  %v117 = vunpack.c.l.b16 %v48
  %v118 = vunpack.c.l.b16 %v49
  %v119 = vunpack.c.l.b16 %v50
  %v120 = vunpack.c.l.b16 %v51
  %v121 = vunpack.c.l.b16 %v52
  %v122 = vunpack.c.l.b16 %v53
  %v123 = vunpack.c.l.b16 %v54
  %v124 = vunpack.c.l.b16 %v55
  %v125 = vunpack.c.l.b16 %v56
  %v126 = vunpack.c.l.b16 %v57
  %v127 = vunpack.c.l.b16 %v58
  %v128 = vunpack.c.l.b16 %v59
  %v129 = vunpack.c.l.b16 %v60
  %v130 = vunpack.c.l.b16 %v61
  %v131 = vunpack.c.l.b16 %v62
  %v132 = vunpack.c.l.b16 %v63
  %v133 = vunpack.c.l.b16 %v64
  %v134 = vunpack.c.l.b16 %v65
  %v135 = vunpack.c.l.b16 %v66
  %v136 = vunpack.c.l.b16 %v67
  %v137 = vunpack.c.l.b16 %v68
  %v138 = vunpack.c.l.b16 %v69
  %v139 = vunpack.c.l.b16 %v70
  %v140 = vunpack.c.l.b16 %v71
  %v141 = vunpack.c.l.b16 %v72
  %v142 = vunpack.c.l.b16 %v73
  %v143 = vunpack.c.l.b16 %v74
  %v144 = vunpack.c.l.b16 %v75
  %v145 = vunpack.c.l.b16 %v76
  %v146 = vunpack.c.l.b16 %v77
  %v147 = vunpack.c.l.b16 %v78
  %v148 = vunpack.c.l.b16 %v79
  %v149 = vpack.c.b16 %v118, %v117
  %v150 = vpack.c.b16 %v120, %v119
  %v151 = vpack.c.b16 %v122, %v121
  %v152 = vpack.c.b16 %v124, %v123
  %v153 = vpack.c.b16 %v126, %v125
  %v154 = vpack.c.b16 %v128, %v127
  %v155 = vpack.c.b16 %v130, %v129
  %v156 = vpack.c.b16 %v132, %v131
  %v157 = vpack.c.b16 %v134, %v133
  %v158 = vpack.c.b16 %v136, %v135
  %v159 = vpack.c.b16 %v138, %v137
  %v160 = vpack.c.b16 %v140, %v139
  %v161 = vpack.c.b16 %v142, %v141
  %v162 = vpack.c.b16 %v144, %v143
  %v163 = vpack.c.b16 %v146, %v145
  %v164 = vpack.c.b16 %v148, %v147
  %vm165 = vcmask 23552
  %v167 = vsel %vm165, %v149, 0
  %v170 = vsel %vm165, %v150, 0
  %v173 = vsel %vm165, %v151, 0
  %v176 = vsel %vm165, %v152, 0
  %v179 = vsel %vm165, %v153, 0
  %v182 = vsel %vm165, %v154, 0
  %v185 = vsel %vm165, %v155, 0
  %v188 = vsel %vm165, %v156, 0
  %v191 = vsel %vm165, %v157, 0
  %v194 = vsel %vm165, %v158, 0
  %v197 = vsel %vm165, %v159, 0
  %v200 = vsel %vm165, %v160, 0
  %v203 = vsel %vm165, %v161, 0
  %v206 = vsel %vm165, %v162, 0
  %v209 = vsel %vm165, %v163, 0
  %v212 = vsel %vm165, %v164, 0
  %vm214 = vcmask 1040384
  %vm215 = vcmask 1041408
  %v216 = vsel %vm214, 4294967295, 65535
  %v217 = vsel %vm215, %v216, 0
  %v219 = vand.u32 %v80, %v217
  %221 = vmatpush.bf16.msra.mxu0 0
  %222 = vmatpush.bf16.msra.mxu0 0
  %223 = vmatpush.bf16.msra.mxu0 0
  %224 = vmatpush.bf16.msra.mxu0 0
  %225 = vmatpush.bf16.msra.mxu0 0
  %226 = vmatpush.bf16.msra.mxu0 0
  %227 = vmatpush.bf16.msra.mxu0 0
  %228 = vmatpush.bf16.msra.mxu0 %v219
  %229 = vmatmul.bf16.gmra.mxu0 %v167
  %v230 = vpop.f32.mrf.mxu0
  %v231 = vadd.f32 %v83, %v230
  %v232 = vpop.f32.mrf.mxu0
  %v233 = vadd.f32 %v83, %v232
  %234 = vmatmul.bf16.gmra.mxu0 %v170
  %v235 = vpop.f32.mrf.mxu0
  %v236 = vadd.f32 %v83, %v235
  %v237 = vpop.f32.mrf.mxu0
  %v238 = vadd.f32 %v83, %v237
  %239 = vmatmul.bf16.gmra.mxu0 %v173
  %v240 = vpop.f32.mrf.mxu0
  %v241 = vadd.f32 %v83, %v240
  %v242 = vpop.f32.mrf.mxu0
  %v243 = vadd.f32 %v83, %v242
  %244 = vmatmul.bf16.gmra.mxu0 %v176
  %v245 = vpop.f32.mrf.mxu0
  %v246 = vadd.f32 %v83, %v245
  %v247 = vpop.f32.mrf.mxu0
  %v248 = vadd.f32 %v83, %v247
  %249 = vmatmul.bf16.gmra.mxu0 %v179
  %v250 = vpop.f32.mrf.mxu0
  %v251 = vadd.f32 %v83, %v250
  %v252 = vpop.f32.mrf.mxu0
  %v253 = vadd.f32 %v83, %v252
  %254 = vmatmul.bf16.gmra.mxu0 %v182
  %v255 = vpop.f32.mrf.mxu0
  %v256 = vadd.f32 %v83, %v255
  %v257 = vpop.f32.mrf.mxu0
  %v258 = vadd.f32 %v83, %v257
  %259 = vmatmul.bf16.gmra.mxu0 %v185
  %v260 = vpop.f32.mrf.mxu0
  %v261 = vadd.f32 %v83, %v260
  %v262 = vpop.f32.mrf.mxu0
  %v263 = vadd.f32 %v83, %v262
  %264 = vmatmul.bf16.gmra.mxu0 %v188
  %v265 = vpop.f32.mrf.mxu0
  %v266 = vadd.f32 %v83, %v265
  %v267 = vpop.f32.mrf.mxu0
  %v268 = vadd.f32 %v83, %v267
  %269 = vmatmul.bf16.gmra.mxu0 %v191
  %v270 = vpop.f32.mrf.mxu0
  %v271 = vadd.f32 %v83, %v270
  %v272 = vpop.f32.mrf.mxu0
  %v273 = vadd.f32 %v83, %v272
  %274 = vmatmul.bf16.gmra.mxu0 %v194
  %v275 = vpop.f32.mrf.mxu0
  %v276 = vadd.f32 %v83, %v275
  %v277 = vpop.f32.mrf.mxu0
  %v278 = vadd.f32 %v83, %v277
  %279 = vmatmul.bf16.gmra.mxu0 %v197
  %v280 = vpop.f32.mrf.mxu0
  %v281 = vadd.f32 %v83, %v280
  %v282 = vpop.f32.mrf.mxu0
  %v283 = vadd.f32 %v83, %v282
  %284 = vmatmul.bf16.gmra.mxu0 %v200
  %v285 = vpop.f32.mrf.mxu0
  %v286 = vadd.f32 %v83, %v285
  %v287 = vpop.f32.mrf.mxu0
  %v288 = vadd.f32 %v83, %v287
  %289 = vmatmul.bf16.gmra.mxu0 %v203
  %v290 = vpop.f32.mrf.mxu0
  %v291 = vadd.f32 %v83, %v290
  %v292 = vpop.f32.mrf.mxu0
  %v293 = vadd.f32 %v83, %v292
  %294 = vmatmul.bf16.gmra.mxu0 %v206
  %v295 = vpop.f32.mrf.mxu0
  %v296 = vadd.f32 %v83, %v295
  %v297 = vpop.f32.mrf.mxu0
  %v298 = vadd.f32 %v83, %v297
  %299 = vmatmul.bf16.gmra.mxu0 %v209
  %v300 = vpop.f32.mrf.mxu0
  %v301 = vadd.f32 %v83, %v300
  %v302 = vpop.f32.mrf.mxu0
  %v303 = vadd.f32 %v83, %v302
  %304 = vmatmul.bf16.gmra.mxu0 %v212
  %v305 = vpop.f32.mrf.mxu0
  %v306 = vadd.f32 %v83, %v305
  %v307 = vpop.f32.mrf.mxu0
  %v308 = vadd.f32 %v83, %v307
  %309 = vdwg.mxu0
  %v310 = vld [vmem:[%s5] sm:$0x1]
  %v311 = vperm.slane %v310, 0
  %v312 = vmul.f32 %v231, %v311
  %v313 = vmul.f32 %v233, %v311
  %v314 = vmul.f32 %v236, %v311
  %v315 = vmul.f32 %v238, %v311
  %v316 = vmul.f32 %v241, %v311
  %v317 = vmul.f32 %v243, %v311
  %v318 = vmul.f32 %v246, %v311
  %v319 = vmul.f32 %v248, %v311
  %v320 = vmul.f32 %v251, %v311
  %v321 = vmul.f32 %v253, %v311
  %v322 = vmul.f32 %v256, %v311
  %v323 = vmul.f32 %v258, %v311
  %v324 = vmul.f32 %v261, %v311
  %v325 = vmul.f32 %v263, %v311
  %v326 = vmul.f32 %v266, %v311
  %v327 = vmul.f32 %v268, %v311
  %v328 = vmul.f32 %v271, %v311
  %v329 = vmul.f32 %v273, %v311
  %v330 = vmul.f32 %v276, %v311
  %v331 = vmul.f32 %v278, %v311
  %v332 = vmul.f32 %v281, %v311
  %v333 = vmul.f32 %v283, %v311
  %v334 = vmul.f32 %v286, %v311
  %v335 = vmul.f32 %v288, %v311
  %v336 = vmul.f32 %v291, %v311
  %v337 = vmul.f32 %v293, %v311
  %v338 = vmul.f32 %v296, %v311
  %v339 = vmul.f32 %v298, %v311
  %v340 = vmul.f32 %v301, %v311
  %v341 = vmul.f32 %v303, %v311
  %v342 = vmul.f32 %v306, %v311
  %v343 = vmul.f32 %v308, %v311
  %v344 = vld [vmem:[%s5 + $0x1] sm:$0x1]
  %v345 = vperm.slane %v344, 0
  %v346 = vadd.f32 %v312, %v345
  %v347 = vadd.f32 %v313, %v345
  %v348 = vadd.f32 %v314, %v345
  %v349 = vadd.f32 %v315, %v345
  %v350 = vadd.f32 %v316, %v345
  %v351 = vadd.f32 %v317, %v345
  %v352 = vadd.f32 %v318, %v345
  %v353 = vadd.f32 %v319, %v345
  %v354 = vadd.f32 %v320, %v345
  %v355 = vadd.f32 %v321, %v345
  %v356 = vadd.f32 %v322, %v345
  %v357 = vadd.f32 %v323, %v345
  %v358 = vadd.f32 %v324, %v345
  %v359 = vadd.f32 %v325, %v345
  %v360 = vadd.f32 %v326, %v345
  %v361 = vadd.f32 %v327, %v345
  %v362 = vadd.f32 %v328, %v345
  %v363 = vadd.f32 %v329, %v345
  %v364 = vadd.f32 %v330, %v345
  %v365 = vadd.f32 %v331, %v345
  %v366 = vadd.f32 %v332, %v345
  %v367 = vadd.f32 %v333, %v345
  %v368 = vadd.f32 %v334, %v345
  %v369 = vadd.f32 %v335, %v345
  %v370 = vadd.f32 %v336, %v345
  %v371 = vadd.f32 %v337, %v345
  %v372 = vadd.f32 %v338, %v345
  %v373 = vadd.f32 %v339, %v345
  %v374 = vadd.f32 %v340, %v345
  %v375 = vadd.f32 %v341, %v345
  %v376 = vadd.f32 %v342, %v345
  %v377 = vadd.f32 %v343, %v345
  %v378 = vmax.f32 %v346, 0.0
  %v379 = vmax.f32 %v347, 0.0
  %v380 = vmax.f32 %v348, 0.0
  %v381 = vmax.f32 %v349, 0.0
  %v382 = vmax.f32 %v350, 0.0
  %v383 = vmax.f32 %v351, 0.0
  %v384 = vmax.f32 %v352, 0.0
  %v385 = vmax.f32 %v353, 0.0
  %v386 = vmax.f32 %v354, 0.0
  %v387 = vmax.f32 %v355, 0.0
  %v388 = vmax.f32 %v356, 0.0
  %v389 = vmax.f32 %v357, 0.0
  %v390 = vmax.f32 %v358, 0.0
  %v391 = vmax.f32 %v359, 0.0
  %v392 = vmax.f32 %v360, 0.0
  %v393 = vmax.f32 %v361, 0.0
  %v394 = vmax.f32 %v362, 0.0
  %v395 = vmax.f32 %v363, 0.0
  %v396 = vmax.f32 %v364, 0.0
  %v397 = vmax.f32 %v365, 0.0
  %v398 = vmax.f32 %v366, 0.0
  %v399 = vmax.f32 %v367, 0.0
  %v400 = vmax.f32 %v368, 0.0
  %v401 = vmax.f32 %v369, 0.0
  %v402 = vmax.f32 %v370, 0.0
  %v403 = vmax.f32 %v371, 0.0
  %v404 = vmax.f32 %v372, 0.0
  %v405 = vmax.f32 %v373, 0.0
  %v406 = vmax.f32 %v374, 0.0
  %v407 = vmax.f32 %v375, 0.0
  %v408 = vmax.f32 %v376, 0.0
  %v409 = vmax.f32 %v377, 0.0
  %v410 = vpack.c.bf16 %v379, %v378
  %v411 = vpack.c.bf16 %v381, %v380
  %v412 = vpack.c.bf16 %v383, %v382
  %v413 = vpack.c.bf16 %v385, %v384
  %v414 = vpack.c.bf16 %v387, %v386
  %v415 = vpack.c.bf16 %v389, %v388
  %v416 = vpack.c.bf16 %v391, %v390
  %v417 = vpack.c.bf16 %v393, %v392
  %v418 = vpack.c.bf16 %v395, %v394
  %v419 = vpack.c.bf16 %v397, %v396
  %v420 = vpack.c.bf16 %v399, %v398
  %v421 = vpack.c.bf16 %v401, %v400
  %v422 = vpack.c.bf16 %v403, %v402
  %v423 = vpack.c.bf16 %v405, %v404
  %v424 = vpack.c.bf16 %v407, %v406
  %v425 = vpack.c.bf16 %v409, %v408
  %v426 = vld [vmem:[%s6] sm:$0xf]
  %v427 = vld [vmem:[%s6 + $0x4] sm:$0xf]
  %v428 = vld [vmem:[%s7] sm:$0x1]
  %v430 = vperm.slane %v428, 0
  %v434 = vunpack.c.l.b16 %v426
  %v435 = vunpack.c.l.b16 %v427
  %v436 = vpack.c.b16 %v435, %v434
  %vm438 = vcmask 130048
  %v440 = vsel %vm438, %v410, 0
  %v443 = vsel %vm438, %v411, 0
  %v446 = vsel %vm438, %v412, 0
  %v449 = vsel %vm438, %v413, 0
  %v452 = vsel %vm438, %v414, 0
  %v455 = vsel %vm438, %v415, 0
  %v458 = vsel %vm438, %v416, 0
  %v461 = vsel %vm438, %v417, 0
  %v464 = vsel %vm438, %v418, 0
  %v467 = vsel %vm438, %v419, 0
  %v470 = vsel %vm438, %v420, 0
  %v473 = vsel %vm438, %v421, 0
  %v476 = vsel %vm438, %v422, 0
  %v479 = vsel %vm438, %v423, 0
  %v482 = vsel %vm438, %v424, 0
  %v485 = vsel %vm438, %v425, 0
  %487 = vmatpush.bf16.msra.mxu0 0
  %488 = vmatpush.bf16.msra.mxu0 0
  %489 = vmatpush.bf16.msra.mxu0 0
  %490 = vmatpush.bf16.msra.mxu0 0
  %491 = vmatpush.bf16.msra.mxu0 0
  %492 = vmatpush.bf16.msra.mxu0 0
  %493 = vmatpush.bf16.msra.mxu0 0
  %494 = vmatpush.bf16.msra.mxu0 %v436
  %495 = vmatmul.bf16.gmra.mxu0 %v440
  %v496 = vpop.f32.mrf.mxu0
  %v497 = vadd.f32 %v430, %v496
  %v498 = vpop.f32.mrf.mxu0
  %v499 = vadd.f32 %v430, %v498
  %500 = vmatmul.bf16.gmra.mxu0 %v443
  %v501 = vpop.f32.mrf.mxu0
  %v502 = vadd.f32 %v430, %v501
  %v503 = vpop.f32.mrf.mxu0
  %v504 = vadd.f32 %v430, %v503
  %505 = vmatmul.bf16.gmra.mxu0 %v446
  %v506 = vpop.f32.mrf.mxu0
  %v507 = vadd.f32 %v430, %v506
  %v508 = vpop.f32.mrf.mxu0
  %v509 = vadd.f32 %v430, %v508
  %510 = vmatmul.bf16.gmra.mxu0 %v449
  %v511 = vpop.f32.mrf.mxu0
  %v512 = vadd.f32 %v430, %v511
  %v513 = vpop.f32.mrf.mxu0
  %v514 = vadd.f32 %v430, %v513
  %515 = vmatmul.bf16.gmra.mxu0 %v452
  %v516 = vpop.f32.mrf.mxu0
  %v517 = vadd.f32 %v430, %v516
  %v518 = vpop.f32.mrf.mxu0
  %v519 = vadd.f32 %v430, %v518
  %520 = vmatmul.bf16.gmra.mxu0 %v455
  %v521 = vpop.f32.mrf.mxu0
  %v522 = vadd.f32 %v430, %v521
  %v523 = vpop.f32.mrf.mxu0
  %v524 = vadd.f32 %v430, %v523
  %525 = vmatmul.bf16.gmra.mxu0 %v458
  %v526 = vpop.f32.mrf.mxu0
  %v527 = vadd.f32 %v430, %v526
  %v528 = vpop.f32.mrf.mxu0
  %v529 = vadd.f32 %v430, %v528
  %530 = vmatmul.bf16.gmra.mxu0 %v461
  %v531 = vpop.f32.mrf.mxu0
  %v532 = vadd.f32 %v430, %v531
  %v533 = vpop.f32.mrf.mxu0
  %v534 = vadd.f32 %v430, %v533
  %535 = vmatmul.bf16.gmra.mxu0 %v464
  %v536 = vpop.f32.mrf.mxu0
  %v537 = vadd.f32 %v430, %v536
  %v538 = vpop.f32.mrf.mxu0
  %v539 = vadd.f32 %v430, %v538
  %540 = vmatmul.bf16.gmra.mxu0 %v467
  %v541 = vpop.f32.mrf.mxu0
  %v542 = vadd.f32 %v430, %v541
  %v543 = vpop.f32.mrf.mxu0
  %v544 = vadd.f32 %v430, %v543
  %545 = vmatmul.bf16.gmra.mxu0 %v470
  %v546 = vpop.f32.mrf.mxu0
  %v547 = vadd.f32 %v430, %v546
  %v548 = vpop.f32.mrf.mxu0
  %v549 = vadd.f32 %v430, %v548
  %550 = vmatmul.bf16.gmra.mxu0 %v473
  %v551 = vpop.f32.mrf.mxu0
  %v552 = vadd.f32 %v430, %v551
  %v553 = vpop.f32.mrf.mxu0
  %v554 = vadd.f32 %v430, %v553
  %555 = vmatmul.bf16.gmra.mxu0 %v476
  %v556 = vpop.f32.mrf.mxu0
  %v557 = vadd.f32 %v430, %v556
  %v558 = vpop.f32.mrf.mxu0
  %v559 = vadd.f32 %v430, %v558
  %560 = vmatmul.bf16.gmra.mxu0 %v479
  %v561 = vpop.f32.mrf.mxu0
  %v562 = vadd.f32 %v430, %v561
  %v563 = vpop.f32.mrf.mxu0
  %v564 = vadd.f32 %v430, %v563
  %565 = vmatmul.bf16.gmra.mxu0 %v482
  %v566 = vpop.f32.mrf.mxu0
  %v567 = vadd.f32 %v430, %v566
  %v568 = vpop.f32.mrf.mxu0
  %v569 = vadd.f32 %v430, %v568
  %570 = vmatmul.bf16.gmra.mxu0 %v485
  %v571 = vpop.f32.mrf.mxu0
  %v572 = vadd.f32 %v430, %v571
  %v573 = vpop.f32.mrf.mxu0
  %v574 = vadd.f32 %v430, %v573
  %575 = vdwg.mxu0
  %v576 = vld [vmem:[%s2] sm:$0xf]
  %v577 = vld [vmem:[%s2 + $0x4] sm:$0xf]
  %v578 = vld [vmem:[%s2 + $0x8] sm:$0xf]
  %v579 = vld [vmem:[%s2 + $0xc] sm:$0xf]
  %v580 = vld [vmem:[%s2 + $0x10] sm:$0xf]
  %v581 = vld [vmem:[%s2 + $0x14] sm:$0xf]
  %v582 = vld [vmem:[%s2 + $0x18] sm:$0xf]
  %v583 = vld [vmem:[%s2 + $0x1c] sm:$0xf]
  %v584 = vld [vmem:[%s2 + $0x20] sm:$0xf]
  %v585 = vld [vmem:[%s2 + $0x24] sm:$0xf]
  %v586 = vld [vmem:[%s2 + $0x28] sm:$0xf]
  %v587 = vld [vmem:[%s2 + $0x2c] sm:$0xf]
  %v588 = vld [vmem:[%s2 + $0x30] sm:$0xf]
  %v589 = vld [vmem:[%s2 + $0x34] sm:$0xf]
  %v590 = vld [vmem:[%s2 + $0x38] sm:$0xf]
  %v591 = vld [vmem:[%s2 + $0x3c] sm:$0xf]
  %v592 = vld [vmem:[%s2 + $0x40] sm:$0xf]
  %v593 = vld [vmem:[%s2 + $0x44] sm:$0xf]
  %v594 = vld [vmem:[%s2 + $0x48] sm:$0xf]
  %v595 = vld [vmem:[%s2 + $0x4c] sm:$0xf]
  %v596 = vld [vmem:[%s2 + $0x50] sm:$0xf]
  %v597 = vld [vmem:[%s2 + $0x54] sm:$0xf]
  %v598 = vld [vmem:[%s2 + $0x58] sm:$0xf]
  %v599 = vld [vmem:[%s2 + $0x5c] sm:$0xf]
  %v600 = vld [vmem:[%s2 + $0x60] sm:$0xf]
  %v601 = vld [vmem:[%s2 + $0x64] sm:$0xf]
  %v602 = vld [vmem:[%s2 + $0x68] sm:$0xf]
  %v603 = vld [vmem:[%s2 + $0x6c] sm:$0xf]
  %v604 = vld [vmem:[%s2 + $0x70] sm:$0xf]
  %v605 = vld [vmem:[%s2 + $0x74] sm:$0xf]
  %v606 = vld [vmem:[%s2 + $0x78] sm:$0xf]
  %v607 = vld [vmem:[%s2 + $0x7c] sm:$0xf]
  %v608 = vunpack.c.l.bf16 %v576
  %v609 = vunpack.c.l.bf16 %v577
  %v610 = vunpack.c.l.bf16 %v578
  %v611 = vunpack.c.l.bf16 %v579
  %v612 = vunpack.c.l.bf16 %v580
  %v613 = vunpack.c.l.bf16 %v581
  %v614 = vunpack.c.l.bf16 %v582
  %v615 = vunpack.c.l.bf16 %v583
  %v616 = vunpack.c.l.bf16 %v584
  %v617 = vunpack.c.l.bf16 %v585
  %v618 = vunpack.c.l.bf16 %v586
  %v619 = vunpack.c.l.bf16 %v587
  %v620 = vunpack.c.l.bf16 %v588
  %v621 = vunpack.c.l.bf16 %v589
  %v622 = vunpack.c.l.bf16 %v590
  %v623 = vunpack.c.l.bf16 %v591
  %v624 = vunpack.c.l.bf16 %v592
  %v625 = vunpack.c.l.bf16 %v593
  %v626 = vunpack.c.l.bf16 %v594
  %v627 = vunpack.c.l.bf16 %v595
  %v628 = vunpack.c.l.bf16 %v596
  %v629 = vunpack.c.l.bf16 %v597
  %v630 = vunpack.c.l.bf16 %v598
  %v631 = vunpack.c.l.bf16 %v599
  %v632 = vunpack.c.l.bf16 %v600
  %v633 = vunpack.c.l.bf16 %v601
  %v634 = vunpack.c.l.bf16 %v602
  %v635 = vunpack.c.l.bf16 %v603
  %v636 = vunpack.c.l.bf16 %v604
  %v637 = vunpack.c.l.bf16 %v605
  %v638 = vunpack.c.l.bf16 %v606
  %v639 = vunpack.c.l.bf16 %v607
  %v640 = vld [vmem:[%s1] sm:$0x1]
  %v641 = vld [vmem:[%s1 + $0x1] sm:$0x1]
  %v642 = vld [vmem:[%s1 + $0x2] sm:$0x1]
  %v643 = vld [vmem:[%s1 + $0x3] sm:$0x1]
  %v644 = vld [vmem:[%s1 + $0x4] sm:$0x1]
  %v645 = vld [vmem:[%s1 + $0x5] sm:$0x1]
  %v646 = vld [vmem:[%s1 + $0x6] sm:$0x1]
  %v647 = vld [vmem:[%s1 + $0x7] sm:$0x1]
  %v648 = vld [vmem:[%s1 + $0x8] sm:$0x1]
  %v649 = vld [vmem:[%s1 + $0x9] sm:$0x1]
  %v650 = vld [vmem:[%s1 + $0xa] sm:$0x1]
  %v651 = vld [vmem:[%s1 + $0xb] sm:$0x1]
  %v652 = vld [vmem:[%s1 + $0xc] sm:$0x1]
  %v653 = vld [vmem:[%s1 + $0xd] sm:$0x1]
  %v654 = vld [vmem:[%s1 + $0xe] sm:$0x1]
  %v655 = vld [vmem:[%s1 + $0xf] sm:$0x1]
  %v656 = vld [vmem:[%s1 + $0x10] sm:$0x1]
  %v657 = vld [vmem:[%s1 + $0x11] sm:$0x1]
  %v658 = vld [vmem:[%s1 + $0x12] sm:$0x1]
  %v659 = vld [vmem:[%s1 + $0x13] sm:$0x1]
  %v660 = vld [vmem:[%s1 + $0x14] sm:$0x1]
  %v661 = vld [vmem:[%s1 + $0x15] sm:$0x1]
  %v662 = vld [vmem:[%s1 + $0x16] sm:$0x1]
  %v663 = vld [vmem:[%s1 + $0x17] sm:$0x1]
  %v664 = vld [vmem:[%s1 + $0x18] sm:$0x1]
  %v665 = vld [vmem:[%s1 + $0x19] sm:$0x1]
  %v666 = vld [vmem:[%s1 + $0x1a] sm:$0x1]
  %v667 = vld [vmem:[%s1 + $0x1b] sm:$0x1]
  %v668 = vld [vmem:[%s1 + $0x1c] sm:$0x1]
  %v669 = vld [vmem:[%s1 + $0x1d] sm:$0x1]
  %v670 = vld [vmem:[%s1 + $0x1e] sm:$0x1]
  %v671 = vld [vmem:[%s1 + $0x1f] sm:$0x1]
  %v704 = vperm.slane %v640, 0
  %v705 = vperm.slane %v641, 0
  %v706 = vperm.slane %v642, 0
  %v707 = vperm.slane %v643, 0
  %v708 = vperm.slane %v644, 0
  %v709 = vperm.slane %v645, 0
  %v710 = vperm.slane %v646, 0
  %v711 = vperm.slane %v647, 0
  %v712 = vperm.slane %v648, 0
  %v713 = vperm.slane %v649, 0
  %v714 = vperm.slane %v650, 0
  %v715 = vperm.slane %v651, 0
  %v716 = vperm.slane %v652, 0
  %v717 = vperm.slane %v653, 0
  %v718 = vperm.slane %v654, 0
  %v719 = vperm.slane %v655, 0
  %v720 = vperm.slane %v656, 0
  %v721 = vperm.slane %v657, 0
  %v722 = vperm.slane %v658, 0
  %v723 = vperm.slane %v659, 0
  %v724 = vperm.slane %v660, 0
  %v725 = vperm.slane %v661, 0
  %v726 = vperm.slane %v662, 0
  %v727 = vperm.slane %v663, 0
  %v728 = vperm.slane %v664, 0
  %v729 = vperm.slane %v665, 0
  %v730 = vperm.slane %v666, 0
  %v731 = vperm.slane %v667, 0
  %v732 = vperm.slane %v668, 0
  %v733 = vperm.slane %v669, 0
  %v734 = vperm.slane %v670, 0
  %v735 = vperm.slane %v671, 0
  %v768 = vsub.f32 %v608, %v704
  %v769 = vsub.f32 %v609, %v705
  %v770 = vsub.f32 %v610, %v706
  %v771 = vsub.f32 %v611, %v707
  %v772 = vsub.f32 %v612, %v708
  %v773 = vsub.f32 %v613, %v709
  %v774 = vsub.f32 %v614, %v710
  %v775 = vsub.f32 %v615, %v711
  %v776 = vsub.f32 %v616, %v712
  %v777 = vsub.f32 %v617, %v713
  %v778 = vsub.f32 %v618, %v714
  %v779 = vsub.f32 %v619, %v715
  %v780 = vsub.f32 %v620, %v716
  %v781 = vsub.f32 %v621, %v717
  %v782 = vsub.f32 %v622, %v718
  %v783 = vsub.f32 %v623, %v719
  %v784 = vsub.f32 %v624, %v720
  %v785 = vsub.f32 %v625, %v721
  %v786 = vsub.f32 %v626, %v722
  %v787 = vsub.f32 %v627, %v723
  %v788 = vsub.f32 %v628, %v724
  %v789 = vsub.f32 %v629, %v725
  %v790 = vsub.f32 %v630, %v726
  %v791 = vsub.f32 %v631, %v727
  %v792 = vsub.f32 %v632, %v728
  %v793 = vsub.f32 %v633, %v729
  %v794 = vsub.f32 %v634, %v730
  %v795 = vsub.f32 %v635, %v731
  %v796 = vsub.f32 %v636, %v732
  %v797 = vsub.f32 %v637, %v733
  %v798 = vsub.f32 %v638, %v734
  %v799 = vsub.f32 %v639, %v735
  %v800 = vadd.f32 %v768, %v497
  %v801 = vadd.f32 %v769, %v499
  %v802 = vadd.f32 %v770, %v502
  %v803 = vadd.f32 %v771, %v504
  %v804 = vadd.f32 %v772, %v507
  %v805 = vadd.f32 %v773, %v509
  %v806 = vadd.f32 %v774, %v512
  %v807 = vadd.f32 %v775, %v514
  %v808 = vadd.f32 %v776, %v517
  %v809 = vadd.f32 %v777, %v519
  %v810 = vadd.f32 %v778, %v522
  %v811 = vadd.f32 %v779, %v524
  %v812 = vadd.f32 %v780, %v527
  %v813 = vadd.f32 %v781, %v529
  %v814 = vadd.f32 %v782, %v532
  %v815 = vadd.f32 %v783, %v534
  %v816 = vadd.f32 %v784, %v537
  %v817 = vadd.f32 %v785, %v539
  %v818 = vadd.f32 %v786, %v542
  %v819 = vadd.f32 %v787, %v544
  %v820 = vadd.f32 %v788, %v547
  %v821 = vadd.f32 %v789, %v549
  %v822 = vadd.f32 %v790, %v552
  %v823 = vadd.f32 %v791, %v554
  %v824 = vadd.f32 %v792, %v557
  %v825 = vadd.f32 %v793, %v559
  %v826 = vadd.f32 %v794, %v562
  %v827 = vadd.f32 %v795, %v564
  %v828 = vadd.f32 %v796, %v567
  %v829 = vadd.f32 %v797, %v569
  %v830 = vadd.f32 %v798, %v572
  %v831 = vadd.f32 %v799, %v574
  %v832 = vpack.c.bf16 %v801, %v800
  %v833 = vpack.c.bf16 %v803, %v802
  %v834 = vpack.c.bf16 %v805, %v804
  %v835 = vpack.c.bf16 %v807, %v806
  %v836 = vpack.c.bf16 %v809, %v808
  %v837 = vpack.c.bf16 %v811, %v810
  %v838 = vpack.c.bf16 %v813, %v812
  %v839 = vpack.c.bf16 %v815, %v814
  %v840 = vpack.c.bf16 %v817, %v816
  %v841 = vpack.c.bf16 %v819, %v818
  %v842 = vpack.c.bf16 %v821, %v820
  %v843 = vpack.c.bf16 %v823, %v822
  %v844 = vpack.c.bf16 %v825, %v824
  %v845 = vpack.c.bf16 %v827, %v826
  %v846 = vpack.c.bf16 %v829, %v828
  %v847 = vpack.c.bf16 %v831, %v830
  %v848 = vld [vmem:[%s8] sm:$0xf]
  %v849 = vld [vmem:[%s8 + $0x4] sm:$0xf]
  %v850 = vld [vmem:[%s8 + $0x8] sm:$0xf]
  %v851 = vld [vmem:[%s8 + $0xc] sm:$0xf]
  %v852 = vld [vmem:[%s9] sm:$0x1]
  %v854 = vperm.slane %v852, 0
  %v860 = vunpack.c.l.b16 %v848
  %v861 = vunpack.c.l.b16 %v849
  %v862 = vunpack.c.l.b16 %v850
  %v863 = vunpack.c.l.b16 %v851
  %v864 = vpack.c.b16 %v861, %v860
  %v865 = vpack.c.b16 %v863, %v862
  %vm868 = vcmask 261120
  %v870 = vsel %vm868, %v832, 0
  %v873 = vsel %vm868, %v833, 0
  %v876 = vsel %vm868, %v834, 0
  %v879 = vsel %vm868, %v835, 0
  %v882 = vsel %vm868, %v836, 0
  %v885 = vsel %vm868, %v837, 0
  %v888 = vsel %vm868, %v838, 0
  %v891 = vsel %vm868, %v839, 0
  %v894 = vsel %vm868, %v840, 0
  %v897 = vsel %vm868, %v841, 0
  %v900 = vsel %vm868, %v842, 0
  %v903 = vsel %vm868, %v843, 0
  %v906 = vsel %vm868, %v844, 0
  %v909 = vsel %vm868, %v845, 0
  %v912 = vsel %vm868, %v846, 0
  %v915 = vsel %vm868, %v847, 0
  %917 = vmatpush.bf16.msra.mxu0 0
  %918 = vmatpush.bf16.msra.mxu0 0
  %919 = vmatpush.bf16.msra.mxu0 0
  %920 = vmatpush.bf16.msra.mxu0 0
  %921 = vmatpush.bf16.msra.mxu0 0
  %922 = vmatpush.bf16.msra.mxu0 0
  %923 = vmatpush.bf16.msra.mxu0 %v865
  %924 = vmatpush.bf16.msra.mxu0 %v864
  %925 = vmatmul.bf16.gmra.mxu0 %v870
  %v926 = vpop.f32.mrf.mxu0
  %v927 = vadd.f32 %v854, %v926
  %v928 = vpop.f32.mrf.mxu0
  %v929 = vadd.f32 %v854, %v928
  %930 = vmatmul.bf16.gmra.mxu0 %v873
  %v931 = vpop.f32.mrf.mxu0
  %v932 = vadd.f32 %v854, %v931
  %v933 = vpop.f32.mrf.mxu0
  %v934 = vadd.f32 %v854, %v933
  %935 = vmatmul.bf16.gmra.mxu0 %v876
  %v936 = vpop.f32.mrf.mxu0
  %v937 = vadd.f32 %v854, %v936
  %v938 = vpop.f32.mrf.mxu0
  %v939 = vadd.f32 %v854, %v938
  %940 = vmatmul.bf16.gmra.mxu0 %v879
  %v941 = vpop.f32.mrf.mxu0
  %v942 = vadd.f32 %v854, %v941
  %v943 = vpop.f32.mrf.mxu0
  %v944 = vadd.f32 %v854, %v943
  %945 = vmatmul.bf16.gmra.mxu0 %v882
  %v946 = vpop.f32.mrf.mxu0
  %v947 = vadd.f32 %v854, %v946
  %v948 = vpop.f32.mrf.mxu0
  %v949 = vadd.f32 %v854, %v948
  %950 = vmatmul.bf16.gmra.mxu0 %v885
  %v951 = vpop.f32.mrf.mxu0
  %v952 = vadd.f32 %v854, %v951
  %v953 = vpop.f32.mrf.mxu0
  %v954 = vadd.f32 %v854, %v953
  %955 = vmatmul.bf16.gmra.mxu0 %v888
  %v956 = vpop.f32.mrf.mxu0
  %v957 = vadd.f32 %v854, %v956
  %v958 = vpop.f32.mrf.mxu0
  %v959 = vadd.f32 %v854, %v958
  %960 = vmatmul.bf16.gmra.mxu0 %v891
  %v961 = vpop.f32.mrf.mxu0
  %v962 = vadd.f32 %v854, %v961
  %v963 = vpop.f32.mrf.mxu0
  %v964 = vadd.f32 %v854, %v963
  %965 = vmatmul.bf16.gmra.mxu0 %v894
  %v966 = vpop.f32.mrf.mxu0
  %v967 = vadd.f32 %v854, %v966
  %v968 = vpop.f32.mrf.mxu0
  %v969 = vadd.f32 %v854, %v968
  %970 = vmatmul.bf16.gmra.mxu0 %v897
  %v971 = vpop.f32.mrf.mxu0
  %v972 = vadd.f32 %v854, %v971
  %v973 = vpop.f32.mrf.mxu0
  %v974 = vadd.f32 %v854, %v973
  %975 = vmatmul.bf16.gmra.mxu0 %v900
  %v976 = vpop.f32.mrf.mxu0
  %v977 = vadd.f32 %v854, %v976
  %v978 = vpop.f32.mrf.mxu0
  %v979 = vadd.f32 %v854, %v978
  %980 = vmatmul.bf16.gmra.mxu0 %v903
  %v981 = vpop.f32.mrf.mxu0
  %v982 = vadd.f32 %v854, %v981
  %v983 = vpop.f32.mrf.mxu0
  %v984 = vadd.f32 %v854, %v983
  %985 = vmatmul.bf16.gmra.mxu0 %v906
  %v986 = vpop.f32.mrf.mxu0
  %v987 = vadd.f32 %v854, %v986
  %v988 = vpop.f32.mrf.mxu0
  %v989 = vadd.f32 %v854, %v988
  %990 = vmatmul.bf16.gmra.mxu0 %v909
  %v991 = vpop.f32.mrf.mxu0
  %v992 = vadd.f32 %v854, %v991
  %v993 = vpop.f32.mrf.mxu0
  %v994 = vadd.f32 %v854, %v993
  %995 = vmatmul.bf16.gmra.mxu0 %v912
  %v996 = vpop.f32.mrf.mxu0
  %v997 = vadd.f32 %v854, %v996
  %v998 = vpop.f32.mrf.mxu0
  %v999 = vadd.f32 %v854, %v998
  %1000 = vmatmul.bf16.gmra.mxu0 %v915
  %v1001 = vpop.f32.mrf.mxu0
  %v1002 = vadd.f32 %v854, %v1001
  %v1003 = vpop.f32.mrf.mxu0
  %v1004 = vadd.f32 %v854, %v1003
  %1005 = vdwg.mxu0
  %v1006 = vlaneseq
  %v1007 = vshrl.u32 %v1006, 7
  %v1008 = vadd.s32 %v1007, 8
  %v1009 = vadd.s32 %v1007, 16
  %v1010 = vadd.s32 %v1007, 24
  %v1011 = vadd.s32 %v1007, 32
  %v1012 = vadd.s32 %v1007, 40
  %v1013 = vadd.s32 %v1007, 48
  %v1014 = vadd.s32 %v1007, 56
  %v1015 = vadd.s32 %v1007, 64
  %v1016 = vadd.s32 %v1007, 72
  %v1017 = vadd.s32 %v1007, 80
  %v1018 = vadd.s32 %v1007, 88
  %v1019 = vadd.s32 %v1007, 96
  %v1020 = vadd.s32 %v1007, 104
  %v1021 = vadd.s32 %v1007, 112
  %v1022 = vadd.s32 %v1007, 120
  %v1023 = vadd.s32 %v1007, 128
  %v1024 = vadd.s32 %v1007, 136
  %v1025 = vadd.s32 %v1007, 144
  %v1026 = vadd.s32 %v1007, 152
  %v1027 = vadd.s32 %v1007, 160
  %v1028 = vadd.s32 %v1007, 168
  %v1029 = vadd.s32 %v1007, 176
  %v1030 = vadd.s32 %v1007, 184
  %v1031 = vadd.s32 %v1007, 192
  %v1032 = vadd.s32 %v1007, 200
  %v1033 = vadd.s32 %v1007, 208
  %v1034 = vadd.s32 %v1007, 216
  %v1035 = vadd.s32 %v1007, 224
  %v1036 = vadd.s32 %v1007, 232
  %v1037 = vadd.s32 %v1007, 240
  %v1038 = vadd.s32 %v1007, 248
  %s1039 = smul.u32 0, 256
  %v1040 = vstv %s1039
  %v1041 = vadd.s32 %v1007, %v1040
  %v1042 = vadd.s32 %v1008, %v1040
  %v1043 = vadd.s32 %v1009, %v1040
  %v1044 = vadd.s32 %v1010, %v1040
  %v1045 = vadd.s32 %v1011, %v1040
  %v1046 = vadd.s32 %v1012, %v1040
  %v1047 = vadd.s32 %v1013, %v1040
  %v1048 = vadd.s32 %v1014, %v1040
  %v1049 = vadd.s32 %v1015, %v1040
  %v1050 = vadd.s32 %v1016, %v1040
  %v1051 = vadd.s32 %v1017, %v1040
  %v1052 = vadd.s32 %v1018, %v1040
  %v1053 = vadd.s32 %v1019, %v1040
  %v1054 = vadd.s32 %v1020, %v1040
  %v1055 = vadd.s32 %v1021, %v1040
  %v1056 = vadd.s32 %v1022, %v1040
  %v1057 = vadd.s32 %v1023, %v1040
  %v1058 = vadd.s32 %v1024, %v1040
  %v1059 = vadd.s32 %v1025, %v1040
  %v1060 = vadd.s32 %v1026, %v1040
  %v1061 = vadd.s32 %v1027, %v1040
  %v1062 = vadd.s32 %v1028, %v1040
  %v1063 = vadd.s32 %v1029, %v1040
  %v1064 = vadd.s32 %v1030, %v1040
  %v1065 = vadd.s32 %v1031, %v1040
  %v1066 = vadd.s32 %v1032, %v1040
  %v1067 = vadd.s32 %v1033, %v1040
  %v1068 = vadd.s32 %v1034, %v1040
  %v1069 = vadd.s32 %v1035, %v1040
  %v1070 = vadd.s32 %v1036, %v1040
  %v1071 = vadd.s32 %v1037, %v1040
  %v1072 = vadd.s32 %v1038, %v1040
  %vm1073 = vcmp.lt.s32.totalorder %v1041, 256
  %vm1074 = vcmp.lt.s32.totalorder %v1042, 256
  %vm1075 = vcmp.lt.s32.totalorder %v1043, 256
  %vm1076 = vcmp.lt.s32.totalorder %v1044, 256
  %vm1077 = vcmp.lt.s32.totalorder %v1045, 256
  %vm1078 = vcmp.lt.s32.totalorder %v1046, 256
  %vm1079 = vcmp.lt.s32.totalorder %v1047, 256
  %vm1080 = vcmp.lt.s32.totalorder %v1048, 256
  %vm1081 = vcmp.lt.s32.totalorder %v1049, 256
  %vm1082 = vcmp.lt.s32.totalorder %v1050, 256
  %vm1083 = vcmp.lt.s32.totalorder %v1051, 256
  %vm1084 = vcmp.lt.s32.totalorder %v1052, 256
  %vm1085 = vcmp.lt.s32.totalorder %v1053, 256
  %vm1086 = vcmp.lt.s32.totalorder %v1054, 256
  %vm1087 = vcmp.lt.s32.totalorder %v1055, 256
  %vm1088 = vcmp.lt.s32.totalorder %v1056, 256
  %vm1089 = vcmp.lt.s32.totalorder %v1057, 256
  %vm1090 = vcmp.lt.s32.totalorder %v1058, 256
  %vm1091 = vcmp.lt.s32.totalorder %v1059, 256
  %vm1092 = vcmp.lt.s32.totalorder %v1060, 256
  %vm1093 = vcmp.lt.s32.totalorder %v1061, 256
  %vm1094 = vcmp.lt.s32.totalorder %v1062, 256
  %vm1095 = vcmp.lt.s32.totalorder %v1063, 256
  %vm1096 = vcmp.lt.s32.totalorder %v1064, 256
  %vm1097 = vcmp.lt.s32.totalorder %v1065, 256
  %vm1098 = vcmp.lt.s32.totalorder %v1066, 256
  %vm1099 = vcmp.lt.s32.totalorder %v1067, 256
  %vm1100 = vcmp.lt.s32.totalorder %v1068, 256
  %vm1101 = vcmp.lt.s32.totalorder %v1069, 256
  %vm1102 = vcmp.lt.s32.totalorder %v1070, 256
  %vm1103 = vcmp.lt.s32.totalorder %v1071, 256
  %vm1104 = vcmp.lt.s32.totalorder %v1072, 256
  %v1105 = vsel %vm1073, 1, 0
  %v1106 = vsel %vm1074, 1, 0
  %v1107 = vsel %vm1075, 1, 0
  %v1108 = vsel %vm1076, 1, 0
  %v1109 = vsel %vm1077, 1, 0
  %v1110 = vsel %vm1078, 1, 0
  %v1111 = vsel %vm1079, 1, 0
  %v1112 = vsel %vm1080, 1, 0
  %v1113 = vsel %vm1081, 1, 0
  %v1114 = vsel %vm1082, 1, 0
  %v1115 = vsel %vm1083, 1, 0
  %v1116 = vsel %vm1084, 1, 0
  %v1117 = vsel %vm1085, 1, 0
  %v1118 = vsel %vm1086, 1, 0
  %v1119 = vsel %vm1087, 1, 0
  %v1120 = vsel %vm1088, 1, 0
  %v1121 = vsel %vm1089, 1, 0
  %v1122 = vsel %vm1090, 1, 0
  %v1123 = vsel %vm1091, 1, 0
  %v1124 = vsel %vm1092, 1, 0
  %v1125 = vsel %vm1093, 1, 0
  %v1126 = vsel %vm1094, 1, 0
  %v1127 = vsel %vm1095, 1, 0
  %v1128 = vsel %vm1096, 1, 0
  %v1129 = vsel %vm1097, 1, 0
  %v1130 = vsel %vm1098, 1, 0
  %v1131 = vsel %vm1099, 1, 0
  %v1132 = vsel %vm1100, 1, 0
  %v1133 = vsel %vm1101, 1, 0
  %v1134 = vsel %vm1102, 1, 0
  %v1135 = vsel %vm1103, 1, 0
  %v1136 = vsel %vm1104, 1, 0
  %vm1137 = vcmp.eq.s32.totalorder %v1105, 1
  %vm1138 = vcmp.eq.s32.totalorder %v1106, 1
  %vm1139 = vcmp.eq.s32.totalorder %v1107, 1
  %vm1140 = vcmp.eq.s32.totalorder %v1108, 1
  %vm1141 = vcmp.eq.s32.totalorder %v1109, 1
  %vm1142 = vcmp.eq.s32.totalorder %v1110, 1
  %vm1143 = vcmp.eq.s32.totalorder %v1111, 1
  %vm1144 = vcmp.eq.s32.totalorder %v1112, 1
  %vm1145 = vcmp.eq.s32.totalorder %v1113, 1
  %vm1146 = vcmp.eq.s32.totalorder %v1114, 1
  %vm1147 = vcmp.eq.s32.totalorder %v1115, 1
  %vm1148 = vcmp.eq.s32.totalorder %v1116, 1
  %vm1149 = vcmp.eq.s32.totalorder %v1117, 1
  %vm1150 = vcmp.eq.s32.totalorder %v1118, 1
  %vm1151 = vcmp.eq.s32.totalorder %v1119, 1
  %vm1152 = vcmp.eq.s32.totalorder %v1120, 1
  %vm1153 = vcmp.eq.s32.totalorder %v1121, 1
  %vm1154 = vcmp.eq.s32.totalorder %v1122, 1
  %vm1155 = vcmp.eq.s32.totalorder %v1123, 1
  %vm1156 = vcmp.eq.s32.totalorder %v1124, 1
  %vm1157 = vcmp.eq.s32.totalorder %v1125, 1
  %vm1158 = vcmp.eq.s32.totalorder %v1126, 1
  %vm1159 = vcmp.eq.s32.totalorder %v1127, 1
  %vm1160 = vcmp.eq.s32.totalorder %v1128, 1
  %vm1161 = vcmp.eq.s32.totalorder %v1129, 1
  %vm1162 = vcmp.eq.s32.totalorder %v1130, 1
  %vm1163 = vcmp.eq.s32.totalorder %v1131, 1
  %vm1164 = vcmp.eq.s32.totalorder %v1132, 1
  %vm1165 = vcmp.eq.s32.totalorder %v1133, 1
  %vm1166 = vcmp.eq.s32.totalorder %v1134, 1
  %vm1167 = vcmp.eq.s32.totalorder %v1135, 1
  %vm1168 = vcmp.eq.s32.totalorder %v1136, 1
  %v1169 = vsel %vm1137, %v927, 0.0
  %v1170 = vsel %vm1138, %v929, 0.0
  %v1171 = vsel %vm1139, %v932, 0.0
  %v1172 = vsel %vm1140, %v934, 0.0
  %v1173 = vsel %vm1141, %v937, 0.0
  %v1174 = vsel %vm1142, %v939, 0.0
  %v1175 = vsel %vm1143, %v942, 0.0
  %v1176 = vsel %vm1144, %v944, 0.0
  %v1177 = vsel %vm1145, %v947, 0.0
  %v1178 = vsel %vm1146, %v949, 0.0
  %v1179 = vsel %vm1147, %v952, 0.0
  %v1180 = vsel %vm1148, %v954, 0.0
  %v1181 = vsel %vm1149, %v957, 0.0
  %v1182 = vsel %vm1150, %v959, 0.0
  %v1183 = vsel %vm1151, %v962, 0.0
  %v1184 = vsel %vm1152, %v964, 0.0
  %v1185 = vsel %vm1153, %v967, 0.0
  %v1186 = vsel %vm1154, %v969, 0.0
  %v1187 = vsel %vm1155, %v972, 0.0
  %v1188 = vsel %vm1156, %v974, 0.0
  %v1189 = vsel %vm1157, %v977, 0.0
  %v1190 = vsel %vm1158, %v979, 0.0
  %v1191 = vsel %vm1159, %v982, 0.0
  %v1192 = vsel %vm1160, %v984, 0.0
  %v1193 = vsel %vm1161, %v987, 0.0
  %v1194 = vsel %vm1162, %v989, 0.0
  %v1195 = vsel %vm1163, %v992, 0.0
  %v1196 = vsel %vm1164, %v994, 0.0
  %v1197 = vsel %vm1165, %v997, 0.0
  %v1198 = vsel %vm1166, %v999, 0.0
  %v1199 = vsel %vm1167, %v1002, 0.0
  %v1200 = vsel %vm1168, %v1004, 0.0
  %v1201 = vld [vmem:[#allocation2] sm:$0x1]
  %v1202 = vsel %vm868, %v1169, 0.0
  %v1203 = vsel %vm868, %v1170, 0.0
  %v1204 = vadd.f32 %v1202, %v1203
  %v1205 = vsel %vm868, %v1171, 0.0
  %v1206 = vadd.f32 %v1204, %v1205
  %v1207 = vsel %vm868, %v1172, 0.0
  %v1208 = vadd.f32 %v1206, %v1207
  %v1209 = vsel %vm868, %v1173, 0.0
  %v1210 = vadd.f32 %v1208, %v1209
  %v1211 = vsel %vm868, %v1174, 0.0
  %v1212 = vadd.f32 %v1210, %v1211
  %v1213 = vsel %vm868, %v1175, 0.0
  %v1214 = vadd.f32 %v1212, %v1213
  %v1215 = vsel %vm868, %v1176, 0.0
  %v1216 = vadd.f32 %v1214, %v1215
  %v1217 = vsel %vm868, %v1177, 0.0
  %v1218 = vadd.f32 %v1216, %v1217
  %v1219 = vsel %vm868, %v1178, 0.0
  %v1220 = vadd.f32 %v1218, %v1219
  %v1221 = vsel %vm868, %v1179, 0.0
  %v1222 = vadd.f32 %v1220, %v1221
  %v1223 = vsel %vm868, %v1180, 0.0
  %v1224 = vadd.f32 %v1222, %v1223
  %v1225 = vsel %vm868, %v1181, 0.0
  %v1226 = vadd.f32 %v1224, %v1225
  %v1227 = vsel %vm868, %v1182, 0.0
  %v1228 = vadd.f32 %v1226, %v1227
  %v1229 = vsel %vm868, %v1183, 0.0
  %v1230 = vadd.f32 %v1228, %v1229
  %v1231 = vsel %vm868, %v1184, 0.0
  %v1232 = vadd.f32 %v1230, %v1231
  %v1233 = vsel %vm868, %v1185, 0.0
  %v1234 = vadd.f32 %v1232, %v1233
  %v1235 = vsel %vm868, %v1186, 0.0
  %v1236 = vadd.f32 %v1234, %v1235
  %v1237 = vsel %vm868, %v1187, 0.0
  %v1238 = vadd.f32 %v1236, %v1237
  %v1239 = vsel %vm868, %v1188, 0.0
  %v1240 = vadd.f32 %v1238, %v1239
  %v1241 = vsel %vm868, %v1189, 0.0
  %v1242 = vadd.f32 %v1240, %v1241
  %v1243 = vsel %vm868, %v1190, 0.0
  %v1244 = vadd.f32 %v1242, %v1243
  %v1245 = vsel %vm868, %v1191, 0.0
  %v1246 = vadd.f32 %v1244, %v1245
  %v1247 = vsel %vm868, %v1192, 0.0
  %v1248 = vadd.f32 %v1246, %v1247
  %v1249 = vsel %vm868, %v1193, 0.0
  %v1250 = vadd.f32 %v1248, %v1249
  %v1251 = vsel %vm868, %v1194, 0.0
  %v1252 = vadd.f32 %v1250, %v1251
  %v1253 = vsel %vm868, %v1195, 0.0
  %v1254 = vadd.f32 %v1252, %v1253
  %v1255 = vsel %vm868, %v1196, 0.0
  %v1256 = vadd.f32 %v1254, %v1255
  %v1257 = vsel %vm868, %v1197, 0.0
  %v1258 = vadd.f32 %v1256, %v1257
  %v1259 = vsel %vm868, %v1198, 0.0
  %v1260 = vadd.f32 %v1258, %v1259
  %v1261 = vsel %vm868, %v1199, 0.0
  %v1262 = vadd.f32 %v1260, %v1261
  %v1263 = vsel %vm868, %v1200, 0.0
  %v1264 = vadd.f32 %v1262, %v1263
  %v1265 = vrot.slane %v1264, 4
  %v1266 = vadd.f32 %v1264, %v1265
  %v1267 = vrot.slane %v1266, 2
  %v1268 = vadd.f32 %v1266, %v1267
  %v1269 = vrot.slane %v1268, 1
  %v1270 = vadd.f32 %v1268, %v1269
  %v1271 = vadd.f32 %v1201, %v1270
  %vm1272 = vcmask 253952
  %1273 = vst.msk [vmem:[#allocation2] sm:$0x1] %vm1272, %v1271
  %v1274 = vld [vmem:[#allocation2 + $0x1] sm:$0x1]
  %v1275 = vmul.f32 %v1169, %v1169
  %v1276 = vmul.f32 %v1170, %v1170
  %v1277 = vmul.f32 %v1171, %v1171
  %v1278 = vmul.f32 %v1172, %v1172
  %v1279 = vmul.f32 %v1173, %v1173
  %v1280 = vmul.f32 %v1174, %v1174
  %v1281 = vmul.f32 %v1175, %v1175
  %v1282 = vmul.f32 %v1176, %v1176
  %v1283 = vmul.f32 %v1177, %v1177
  %v1284 = vmul.f32 %v1178, %v1178
  %v1285 = vmul.f32 %v1179, %v1179
  %v1286 = vmul.f32 %v1180, %v1180
  %v1287 = vmul.f32 %v1181, %v1181
  %v1288 = vmul.f32 %v1182, %v1182
  %v1289 = vmul.f32 %v1183, %v1183
  %v1290 = vmul.f32 %v1184, %v1184
  %v1291 = vmul.f32 %v1185, %v1185
  %v1292 = vmul.f32 %v1186, %v1186
  %v1293 = vmul.f32 %v1187, %v1187
  %v1294 = vmul.f32 %v1188, %v1188
  %v1295 = vmul.f32 %v1189, %v1189
  %v1296 = vmul.f32 %v1190, %v1190
  %v1297 = vmul.f32 %v1191, %v1191
  %v1298 = vmul.f32 %v1192, %v1192
  %v1299 = vmul.f32 %v1193, %v1193
  %v1300 = vmul.f32 %v1194, %v1194
  %v1301 = vmul.f32 %v1195, %v1195
  %v1302 = vmul.f32 %v1196, %v1196
  %v1303 = vmul.f32 %v1197, %v1197
  %v1304 = vmul.f32 %v1198, %v1198
  %v1305 = vmul.f32 %v1199, %v1199
  %v1306 = vmul.f32 %v1200, %v1200
  %v1307 = vsel %vm868, %v1275, 0.0
  %v1308 = vsel %vm868, %v1276, 0.0
  %v1309 = vadd.f32 %v1307, %v1308
  %v1310 = vsel %vm868, %v1277, 0.0
  %v1311 = vadd.f32 %v1309, %v1310
  %v1312 = vsel %vm868, %v1278, 0.0
  %v1313 = vadd.f32 %v1311, %v1312
  %v1314 = vsel %vm868, %v1279, 0.0
  %v1315 = vadd.f32 %v1313, %v1314
  %v1316 = vsel %vm868, %v1280, 0.0
  %v1317 = vadd.f32 %v1315, %v1316
  %v1318 = vsel %vm868, %v1281, 0.0
  %v1319 = vadd.f32 %v1317, %v1318
  %v1320 = vsel %vm868, %v1282, 0.0
  %v1321 = vadd.f32 %v1319, %v1320
  %v1322 = vsel %vm868, %v1283, 0.0
  %v1323 = vadd.f32 %v1321, %v1322
  %v1324 = vsel %vm868, %v1284, 0.0
  %v1325 = vadd.f32 %v1323, %v1324
  %v1326 = vsel %vm868, %v1285, 0.0
  %v1327 = vadd.f32 %v1325, %v1326
  %v1328 = vsel %vm868, %v1286, 0.0
  %v1329 = vadd.f32 %v1327, %v1328
  %v1330 = vsel %vm868, %v1287, 0.0
  %v1331 = vadd.f32 %v1329, %v1330
  %v1332 = vsel %vm868, %v1288, 0.0
  %v1333 = vadd.f32 %v1331, %v1332
  %v1334 = vsel %vm868, %v1289, 0.0
  %v1335 = vadd.f32 %v1333, %v1334
  %v1336 = vsel %vm868, %v1290, 0.0
  %v1337 = vadd.f32 %v1335, %v1336
  %v1338 = vsel %vm868, %v1291, 0.0
  %v1339 = vadd.f32 %v1337, %v1338
  %v1340 = vsel %vm868, %v1292, 0.0
  %v1341 = vadd.f32 %v1339, %v1340
  %v1342 = vsel %vm868, %v1293, 0.0
  %v1343 = vadd.f32 %v1341, %v1342
  %v1344 = vsel %vm868, %v1294, 0.0
  %v1345 = vadd.f32 %v1343, %v1344
  %v1346 = vsel %vm868, %v1295, 0.0
  %v1347 = vadd.f32 %v1345, %v1346
  %v1348 = vsel %vm868, %v1296, 0.0
  %v1349 = vadd.f32 %v1347, %v1348
  %v1350 = vsel %vm868, %v1297, 0.0
  %v1351 = vadd.f32 %v1349, %v1350
  %v1352 = vsel %vm868, %v1298, 0.0
  %v1353 = vadd.f32 %v1351, %v1352
  %v1354 = vsel %vm868, %v1299, 0.0
  %v1355 = vadd.f32 %v1353, %v1354
  %v1356 = vsel %vm868, %v1300, 0.0
  %v1357 = vadd.f32 %v1355, %v1356
  %v1358 = vsel %vm868, %v1301, 0.0
  %v1359 = vadd.f32 %v1357, %v1358
  %v1360 = vsel %vm868, %v1302, 0.0
  %v1361 = vadd.f32 %v1359, %v1360
  %v1362 = vsel %vm868, %v1303, 0.0
  %v1363 = vadd.f32 %v1361, %v1362
  %v1364 = vsel %vm868, %v1304, 0.0
  %v1365 = vadd.f32 %v1363, %v1364
  %v1366 = vsel %vm868, %v1305, 0.0
  %v1367 = vadd.f32 %v1365, %v1366
  %v1368 = vsel %vm868, %v1306, 0.0
  %v1369 = vadd.f32 %v1367, %v1368
  %v1370 = vrot.slane %v1369, 4
  %v1371 = vadd.f32 %v1369, %v1370
  %v1372 = vrot.slane %v1371, 2
  %v1373 = vadd.f32 %v1371, %v1372
  %v1374 = vrot.slane %v1373, 1
  %v1375 = vadd.f32 %v1373, %v1374
  %v1376 = vadd.f32 %v1274, %v1375
  %1377 = vst.msk [vmem:[#allocation2 + $0x1] sm:$0x1] %vm1272, %v1376
  // Predicated region
  $region54: #{_lambda_.10} parent=0 // pred_check
    %p1378 = pneg %p42
  $region55: #{_lambda_.10} parent=0 // pred_check_branch
    %1380 = sbr.rel (%p1378) target = $region57
  $region56: #{_lambda_.10} parent=0 // pred_region
    %v1381 = vld [vmem:[#allocation2] sm:$0x1]
    %v1382 = vrcp.pop 256.0
    %v1383 = vmul.f32 256.0, %v1382
    %v1384 = vsub.f32 1.0, %v1383
    %v1385 = vmul.f32 %v1382, %v1384
    %v1386 = vadd.f32 %v1382, %v1385
    %vm1387 = vweird.f32 %v1382
    %v1388 = vsel %vm1387, %v1382, %v1386
    %v1389 = vmul.f32 %v1381, %v1388
    %v1390 = vld [vmem:[#allocation2 + $0x1] sm:$0x1]
    %v1391 = vmul.f32 %v1390, %v1388
    %v1392 = vmul.f32 %v1389, %v1389
    %v1393 = vsub.f32 %v1391, %v1392
    %v1394 = vld [vmem:[%s10] sm:$0x1]
    %v1395 = vadd.f32 %v1393, 1e-05
    %v1396 = vrsqrt.pop %v1395
    %v1397 = vmul.f32 %v1396, %v1395
    %v1398 = vmul.f32 %v1397, %v1396
    %v1399 = vmul.f32 0.5, %v1398
    %v1400 = vsub.f32 1.5, %v1399
    %v1401 = vmul.f32 %v1396, %v1400
    %vm1402 = vweird.f32 %v1395
    %vm1403 = vweird.f32 %v1396
    %vm1404 = vmor %vm1402, %vm1403
    %v1405 = vsel %vm1404, %v1396, %v1401
    %v1406 = vmul.f32 %v1394, %v1405
    %1407 = vst.msk [vmem:[%s12] sm:$0x1] %vm1272, %v1406
    %v1408 = vld [vmem:[%s11] sm:$0x1]
    %v1409 = vmul.f32 %v1389, %v1406
    %v1410 = vsub.f32 %v1408, %v1409
    %1411 = vst.msk [vmem:[%s12 + $0x1] sm:$0x1] %vm1272, %v1410
  $region57: #{_lambda_.10} parent=0 // pred_fallthru
    _
  // Predicated region
  $region58: #{_lambda_.10} parent=0 // pred_check
    _
  $region59: #{_lambda_.10} parent=0 // pred_check_branch
    %1413 = sbr.rel (0) target = $region61
  $region60: #{_lambda_.10} parent=0 // pred_region
    _
  $region61: #{_lambda_.10} parent=0 // pred_fallthru
    _
  // Predicated region
  $region62: #{_lambda_.10} parent=0 // pred_check
    _
  $region63: #{_lambda_.10} parent=0 // pred_check_branch
    %1415 = sbr.rel (0) target = $region65
  $region64: #{_lambda_.10} parent=0 // pred_region
    _
  $region65: #{_lambda_.10} parent=0 // pred_fallthru
    _

// kernel: _lambda_.11
$region0: #{_lambda_.11}
  #allocation0 [shape = 'u32[]', space=smem, size = 0x4, offset = 0x4, fixed_abs, tag = 'smem constant byte address 0x4 - core index']
  #allocation1 [shape = 'u32[72,128]{1,0:T(1,128)}', space=vmem, size = 0x9000, scoped, tag = 'internal scratch']
  %s0 = inlined_call_operand.vmem [shape: bf16[256,3], index: 0, kind: input, shape index: {}]
  %s1 = inlined_call_operand.vmem [shape: f32[32,1,32], index: 1, kind: input, shape index: {}]
  %s2 = inlined_call_operand.vmem [shape: bf16[256,32], index: 2, kind: input, shape index: {}]
  %s3 = inlined_call_operand.vmem [shape: f32[256,32], index: 3, kind: input, shape index: {}]
  %s4 = inlined_call_operand.vmem [shape: f32[32,16], index: 4, kind: input, shape index: {}]
  %s5 = inlined_call_operand.vmem [shape: bf16[3,16], index: 5, kind: input, shape index: {}]
  %s6 = inlined_call_operand.vmem [shape: f32[1,16], index: 6, kind: input, shape index: {}]
  %s7 = inlined_call_operand.vmem [shape: f32[2,16], index: 7, kind: input, shape index: {}]
  %s8 = inlined_call_operand.vmem [shape: bf16[16,32], index: 8, kind: input, shape index: {}]
  %s9 = inlined_call_operand.vmem [shape: f32[1,32], index: 9, kind: input, shape index: {}]
  %s10 = inlined_call_operand.vmem [shape: bf16[32,32], index: 10, kind: input, shape index: {}]
  %s11 = inlined_call_operand.vmem [shape: f32[1,32], index: 11, kind: input, shape index: {}]
  %s12 = inlined_call_operand.vmem [shape: f32[2,32], index: 12, kind: input, shape index: {}]
  %s13 = inlined_call_operand.vmem [shape: bf16[32,32], index: 13, kind: input, shape index: {}]
  %s14 = inlined_call_operand.vmem [shape: f32[1,32], index: 14, kind: input, shape index: {}]
  %s15 = inlined_call_operand.vmem [shape: bf16[32,16], index: 15, kind: input, shape index: {}]
  %s16 = inlined_call_operand.vmem [shape: f32[1,16], index: 16, kind: input, shape index: {}]
  %s17 = inlined_call_operand.vmem [shape: bf16[32,24], index: 17, kind: input, shape index: {}]
  %s18 = inlined_call_operand.vmem [shape: f32[1,24], index: 18, kind: input, shape index: {}]
  %s19 = inlined_call_operand.hbm [shape: f32[32,16], index: 19, kind: output, shape index: {0}]
  %s20 = inlined_call_operand.hbm [shape: f32[32,24], index: 20, kind: output, shape index: {1}]
  %21 = xla_tuple %s19, %s20
  %s22 = sld [smem:[#allocation0]]
  $region94: #{_lambda_.11} parent=0
    _
  %s24 = ssub.s32 1, %s22
  %s25 = scalar_select 0, %s24, %s22
  $region1: #{_lambda_.11} parent=0
    #allocation2 [shape = 'u8[16384]{0}', space=vmem, size = 0x4000, scoped, tag = 'output window, operand 0, single buffered']
    #allocation3 [shape = 's32[1]{0}', space=sflag, size = 0x4, scoped, tag = 'scoped memory for _lambda_.11']
    #allocation4 [shape = 'u8[16384]{0}', space=vmem, size = 0x4000, scoped, tag = 'output window, operand 1, single buffered']
    #allocation5 [shape = 's32[1]{0}', space=sflag, size = 0x4, scoped, tag = 'scoped memory for _lambda_.11']
    %26 = vsyncpa [#allocation3], 0
    %27 = vsyncpa [#allocation5], 0
    // Predicated region
    $region2: #{_lambda_.11} parent=1 // pred_check
      _
    $region3: #{_lambda_.11} parent=1 // pred_check_branch
      %29 = sbr.rel (0) target = $region5
    $region4: #{_lambda_.11} parent=1 // pred_region
      _
    $region5: #{_lambda_.11} parent=1 // pred_fallthru
      _
    // Predicated region
    $region6: #{_lambda_.11} parent=1 // pred_check
      _
    $region7: #{_lambda_.11} parent=1 // pred_check_branch
      %31 = sbr.rel (0) target = $region9
    $region8: #{_lambda_.11} parent=1 // pred_region
      _
    $region9: #{_lambda_.11} parent=1 // pred_fallthru
      _
    // Predicated region
    $region10: #{_lambda_.11} parent=1 // pred_check
      _
    $region11: #{_lambda_.11} parent=1 // pred_check_branch
      %33 = sbr.rel (0) target = $region13
    $region12: #{_lambda_.11} parent=1 // pred_region
      _
    $region13: #{_lambda_.11} parent=1 // pred_fallthru
      _
    // Predicated region
    $region14: #{_lambda_.11} parent=1 // pred_check
      _
    $region15: #{_lambda_.11} parent=1 // pred_check_branch
      %35 = sbr.rel (0) target = $region17
    $region16: #{_lambda_.11} parent=1 // pred_region
      _
    $region17: #{_lambda_.11} parent=1 // pred_fallthru
      _
    // Predicated region
    $region18: #{_lambda_.11} parent=1 // pred_check
      _
    $region19: #{_lambda_.11} parent=1 // pred_check_branch
      %37 = sbr.rel (0) target = $region21
    $region20: #{_lambda_.11} parent=1 // pred_region
      _
    $region21: #{_lambda_.11} parent=1 // pred_fallthru
      _
    // Predicated region
    $region22: #{_lambda_.11} parent=1 // pred_check
      _
    $region23: #{_lambda_.11} parent=1 // pred_check_branch
      %39 = sbr.rel (0) target = $region25
    $region24: #{_lambda_.11} parent=1 // pred_region
      _
    $region25: #{_lambda_.11} parent=1 // pred_fallthru
      _
    // Predicated region
    $region26: #{_lambda_.11} parent=1 // pred_check
      _
    $region27: #{_lambda_.11} parent=1 // pred_check_branch
      %41 = sbr.rel (0) target = $region29
    $region28: #{_lambda_.11} parent=1 // pred_region
      _
    $region29: #{_lambda_.11} parent=1 // pred_fallthru
      _
    // Predicated region
    $region30: #{_lambda_.11} parent=1 // pred_check
      _
    $region31: #{_lambda_.11} parent=1 // pred_check_branch
      %43 = sbr.rel (0) target = $region33
    $region32: #{_lambda_.11} parent=1 // pred_region
      _
    $region33: #{_lambda_.11} parent=1 // pred_fallthru
      _
    // Predicated region
    $region34: #{_lambda_.11} parent=1 // pred_check
      _
    $region35: #{_lambda_.11} parent=1 // pred_check_branch
      %45 = sbr.rel (0) target = $region37
    $region36: #{_lambda_.11} parent=1 // pred_region
      _
    $region37: #{_lambda_.11} parent=1 // pred_fallthru
      _
    // Predicated region
    $region38: #{_lambda_.11} parent=1 // pred_check
      _
    $region39: #{_lambda_.11} parent=1 // pred_check_branch
      %47 = sbr.rel (0) target = $region41
    $region40: #{_lambda_.11} parent=1 // pred_region
      _
    $region41: #{_lambda_.11} parent=1 // pred_fallthru
      _
    // Predicated region
    $region42: #{_lambda_.11} parent=1 // pred_check
      _
    $region43: #{_lambda_.11} parent=1 // pred_check_branch
      %49 = sbr.rel (0) target = $region45
    $region44: #{_lambda_.11} parent=1 // pred_region
      _
    $region45: #{_lambda_.11} parent=1 // pred_fallthru
      _
    // Predicated region
    $region46: #{_lambda_.11} parent=1 // pred_check
      _
    $region47: #{_lambda_.11} parent=1 // pred_check_branch
      %51 = sbr.rel (0) target = $region49
    $region48: #{_lambda_.11} parent=1 // pred_region
      _
    $region49: #{_lambda_.11} parent=1 // pred_fallthru
      _
    // Predicated region
    $region50: #{_lambda_.11} parent=1 // pred_check
      _
    $region51: #{_lambda_.11} parent=1 // pred_check_branch
      %53 = sbr.rel (0) target = $region53
    $region52: #{_lambda_.11} parent=1 // pred_region
      _
    $region53: #{_lambda_.11} parent=1 // pred_fallthru
      _
    // Predicated region
    $region54: #{_lambda_.11} parent=1 // pred_check
      _
    $region55: #{_lambda_.11} parent=1 // pred_check_branch
      %55 = sbr.rel (0) target = $region57
    $region56: #{_lambda_.11} parent=1 // pred_region
      _
    $region57: #{_lambda_.11} parent=1 // pred_fallthru
      _
    // Predicated region
    $region58: #{_lambda_.11} parent=1 // pred_check
      _
    $region59: #{_lambda_.11} parent=1 // pred_check_branch
      %57 = sbr.rel (0) target = $region61
    $region60: #{_lambda_.11} parent=1 // pred_region
      _
    $region61: #{_lambda_.11} parent=1 // pred_fallthru
      _
    // Predicated region
    $region62: #{_lambda_.11} parent=1 // pred_check
      _
    $region63: #{_lambda_.11} parent=1 // pred_check_branch
      %59 = sbr.rel (0) target = $region65
    $region64: #{_lambda_.11} parent=1 // pred_region
      _
    $region65: #{_lambda_.11} parent=1 // pred_fallthru
      _
    // Predicated region
    $region66: #{_lambda_.11} parent=1 // pred_check
      _
    $region67: #{_lambda_.11} parent=1 // pred_check_branch
      %61 = sbr.rel (0) target = $region69
    $region68: #{_lambda_.11} parent=1 // pred_region
      _
    $region69: #{_lambda_.11} parent=1 // pred_fallthru
      _
    // Predicated region
    $region70: #{_lambda_.11} parent=1 // pred_check
      _
    $region71: #{_lambda_.11} parent=1 // pred_check_branch
      %63 = sbr.rel (0) target = $region73
    $region72: #{_lambda_.11} parent=1 // pred_region
      _
    $region73: #{_lambda_.11} parent=1 // pred_fallthru
      _
    // Predicated region
    $region74: #{_lambda_.11} parent=1 // pred_check
      _
    $region75: #{_lambda_.11} parent=1 // pred_check_branch
      %65 = sbr.rel (0) target = $region77
    $region76: #{_lambda_.11} parent=1 // pred_region
      _
    $region77: #{_lambda_.11} parent=1 // pred_fallthru
      _
    %v67 = vld [vmem:[%s0] sm:$0xf]
    %v68 = vld [vmem:[%s0 + $0x4] sm:$0xf]
    %v69 = vld [vmem:[%s0 + $0x8] sm:$0xf]
    %v70 = vld [vmem:[%s0 + $0xc] sm:$0xf]
    %v71 = vld [vmem:[%s0 + $0x10] sm:$0xf]
    %v72 = vld [vmem:[%s0 + $0x14] sm:$0xf]
    %v73 = vld [vmem:[%s0 + $0x18] sm:$0xf]
    %v74 = vld [vmem:[%s0 + $0x1c] sm:$0xf]
    %v75 = vld [vmem:[%s0 + $0x20] sm:$0xf]
    %v76 = vld [vmem:[%s0 + $0x24] sm:$0xf]
    %v77 = vld [vmem:[%s0 + $0x28] sm:$0xf]
    %v78 = vld [vmem:[%s0 + $0x2c] sm:$0xf]
    %v79 = vld [vmem:[%s0 + $0x30] sm:$0xf]
    %v80 = vld [vmem:[%s0 + $0x34] sm:$0xf]
    %v81 = vld [vmem:[%s0 + $0x38] sm:$0xf]
    %v82 = vld [vmem:[%s0 + $0x3c] sm:$0xf]
    %v83 = vld [vmem:[%s0 + $0x40] sm:$0xf]
    %v84 = vld [vmem:[%s0 + $0x44] sm:$0xf]
    %v85 = vld [vmem:[%s0 + $0x48] sm:$0xf]
    %v86 = vld [vmem:[%s0 + $0x4c] sm:$0xf]
    %v87 = vld [vmem:[%s0 + $0x50] sm:$0xf]
    %v88 = vld [vmem:[%s0 + $0x54] sm:$0xf]
    %v89 = vld [vmem:[%s0 + $0x58] sm:$0xf]
    %v90 = vld [vmem:[%s0 + $0x5c] sm:$0xf]
    %v91 = vld [vmem:[%s0 + $0x60] sm:$0xf]
    %v92 = vld [vmem:[%s0 + $0x64] sm:$0xf]
    %v93 = vld [vmem:[%s0 + $0x68] sm:$0xf]
    %v94 = vld [vmem:[%s0 + $0x6c] sm:$0xf]
    %v95 = vld [vmem:[%s0 + $0x70] sm:$0xf]
    %v96 = vld [vmem:[%s0 + $0x74] sm:$0xf]
    %v97 = vld [vmem:[%s0 + $0x78] sm:$0xf]
    %v98 = vld [vmem:[%s0 + $0x7c] sm:$0xf]
    %v99 = vld [vmem:[%s5] sm:$0x3]
    %v100 = vld [vmem:[%s6] sm:$0x1]
    %v102 = vperm.slane %v100, 0
    %v136 = vunpack.c.l.b16 %v67
    %v137 = vunpack.c.l.b16 %v68
    %v138 = vunpack.c.l.b16 %v69
    %v139 = vunpack.c.l.b16 %v70
    %v140 = vunpack.c.l.b16 %v71
    %v141 = vunpack.c.l.b16 %v72
    %v142 = vunpack.c.l.b16 %v73
    %v143 = vunpack.c.l.b16 %v74
    %v144 = vunpack.c.l.b16 %v75
    %v145 = vunpack.c.l.b16 %v76
    %v146 = vunpack.c.l.b16 %v77
    %v147 = vunpack.c.l.b16 %v78
    %v148 = vunpack.c.l.b16 %v79
    %v149 = vunpack.c.l.b16 %v80
    %v150 = vunpack.c.l.b16 %v81
    %v151 = vunpack.c.l.b16 %v82
    %v152 = vunpack.c.l.b16 %v83
    %v153 = vunpack.c.l.b16 %v84
    %v154 = vunpack.c.l.b16 %v85
    %v155 = vunpack.c.l.b16 %v86
    %v156 = vunpack.c.l.b16 %v87
    %v157 = vunpack.c.l.b16 %v88
    %v158 = vunpack.c.l.b16 %v89
    %v159 = vunpack.c.l.b16 %v90
    %v160 = vunpack.c.l.b16 %v91
    %v161 = vunpack.c.l.b16 %v92
    %v162 = vunpack.c.l.b16 %v93
    %v163 = vunpack.c.l.b16 %v94
    %v164 = vunpack.c.l.b16 %v95
    %v165 = vunpack.c.l.b16 %v96
    %v166 = vunpack.c.l.b16 %v97
    %v167 = vunpack.c.l.b16 %v98
    %v168 = vpack.c.b16 %v137, %v136
    %v169 = vpack.c.b16 %v139, %v138
    %v170 = vpack.c.b16 %v141, %v140
    %v171 = vpack.c.b16 %v143, %v142
    %v172 = vpack.c.b16 %v145, %v144
    %v173 = vpack.c.b16 %v147, %v146
    %v174 = vpack.c.b16 %v149, %v148
    %v175 = vpack.c.b16 %v151, %v150
    %v176 = vpack.c.b16 %v153, %v152
    %v177 = vpack.c.b16 %v155, %v154
    %v178 = vpack.c.b16 %v157, %v156
    %v179 = vpack.c.b16 %v159, %v158
    %v180 = vpack.c.b16 %v161, %v160
    %v181 = vpack.c.b16 %v163, %v162
    %v182 = vpack.c.b16 %v165, %v164
    %v183 = vpack.c.b16 %v167, %v166
    %vm184 = vcmask 23552
    %v186 = vsel %vm184, %v168, 0
    %v189 = vsel %vm184, %v169, 0
    %v192 = vsel %vm184, %v170, 0
    %v195 = vsel %vm184, %v171, 0
    %v198 = vsel %vm184, %v172, 0
    %v201 = vsel %vm184, %v173, 0
    %v204 = vsel %vm184, %v174, 0
    %v207 = vsel %vm184, %v175, 0
    %v210 = vsel %vm184, %v176, 0
    %v213 = vsel %vm184, %v177, 0
    %v216 = vsel %vm184, %v178, 0
    %v219 = vsel %vm184, %v179, 0
    %v222 = vsel %vm184, %v180, 0
    %v225 = vsel %vm184, %v181, 0
    %v228 = vsel %vm184, %v182, 0
    %v231 = vsel %vm184, %v183, 0
    %vm233 = vcmask 1040384
    %vm234 = vcmask 1041408
    %v235 = vsel %vm233, 4294967295, 65535
    %v236 = vsel %vm234, %v235, 0
    %v238 = vand.u32 %v99, %v236
    %240 = vmatpush.bf16.msra.mxu0 0
    %241 = vmatpush.bf16.msra.mxu0 0
    %242 = vmatpush.bf16.msra.mxu0 0
    %243 = vmatpush.bf16.msra.mxu0 0
    %244 = vmatpush.bf16.msra.mxu0 0
    %245 = vmatpush.bf16.msra.mxu0 0
    %246 = vmatpush.bf16.msra.mxu0 0
    %247 = vmatpush.bf16.msra.mxu0 %v238
    %248 = vmatmul.bf16.gmra.mxu0 %v186
    %v249 = vpop.f32.mrf.mxu0
    %v250 = vadd.f32 %v102, %v249
    %v251 = vpop.f32.mrf.mxu0
    %v252 = vadd.f32 %v102, %v251
    %253 = vmatmul.bf16.gmra.mxu0 %v189
    %v254 = vpop.f32.mrf.mxu0
    %v255 = vadd.f32 %v102, %v254
    %v256 = vpop.f32.mrf.mxu0
    %v257 = vadd.f32 %v102, %v256
    %258 = vmatmul.bf16.gmra.mxu0 %v192
    %v259 = vpop.f32.mrf.mxu0
    %v260 = vadd.f32 %v102, %v259
    %v261 = vpop.f32.mrf.mxu0
    %v262 = vadd.f32 %v102, %v261
    %263 = vmatmul.bf16.gmra.mxu0 %v195
    %v264 = vpop.f32.mrf.mxu0
    %v265 = vadd.f32 %v102, %v264
    %v266 = vpop.f32.mrf.mxu0
    %v267 = vadd.f32 %v102, %v266
    %268 = vmatmul.bf16.gmra.mxu0 %v198
    %v269 = vpop.f32.mrf.mxu0
    %v270 = vadd.f32 %v102, %v269
    %v271 = vpop.f32.mrf.mxu0
    %v272 = vadd.f32 %v102, %v271
    %273 = vmatmul.bf16.gmra.mxu0 %v201
    %v274 = vpop.f32.mrf.mxu0
    %v275 = vadd.f32 %v102, %v274
    %v276 = vpop.f32.mrf.mxu0
    %v277 = vadd.f32 %v102, %v276
    %278 = vmatmul.bf16.gmra.mxu0 %v204
    %v279 = vpop.f32.mrf.mxu0
    %v280 = vadd.f32 %v102, %v279
    %v281 = vpop.f32.mrf.mxu0
    %v282 = vadd.f32 %v102, %v281
    %283 = vmatmul.bf16.gmra.mxu0 %v207
    %v284 = vpop.f32.mrf.mxu0
    %v285 = vadd.f32 %v102, %v284
    %v286 = vpop.f32.mrf.mxu0
    %v287 = vadd.f32 %v102, %v286
    %288 = vmatmul.bf16.gmra.mxu0 %v210
    %v289 = vpop.f32.mrf.mxu0
    %v290 = vadd.f32 %v102, %v289
    %v291 = vpop.f32.mrf.mxu0
    %v292 = vadd.f32 %v102, %v291
    %293 = vmatmul.bf16.gmra.mxu0 %v213
    %v294 = vpop.f32.mrf.mxu0
    %v295 = vadd.f32 %v102, %v294
    %v296 = vpop.f32.mrf.mxu0
    %v297 = vadd.f32 %v102, %v296
    %298 = vmatmul.bf16.gmra.mxu0 %v216
    %v299 = vpop.f32.mrf.mxu0
    %v300 = vadd.f32 %v102, %v299
    %v301 = vpop.f32.mrf.mxu0
    %v302 = vadd.f32 %v102, %v301
    %303 = vmatmul.bf16.gmra.mxu0 %v219
    %v304 = vpop.f32.mrf.mxu0
    %v305 = vadd.f32 %v102, %v304
    %v306 = vpop.f32.mrf.mxu0
    %v307 = vadd.f32 %v102, %v306
    %308 = vmatmul.bf16.gmra.mxu0 %v222
    %v309 = vpop.f32.mrf.mxu0
    %v310 = vadd.f32 %v102, %v309
    %v311 = vpop.f32.mrf.mxu0
    %v312 = vadd.f32 %v102, %v311
    %313 = vmatmul.bf16.gmra.mxu0 %v225
    %v314 = vpop.f32.mrf.mxu0
    %v315 = vadd.f32 %v102, %v314
    %v316 = vpop.f32.mrf.mxu0
    %v317 = vadd.f32 %v102, %v316
    %318 = vmatmul.bf16.gmra.mxu0 %v228
    %v319 = vpop.f32.mrf.mxu0
    %v320 = vadd.f32 %v102, %v319
    %v321 = vpop.f32.mrf.mxu0
    %v322 = vadd.f32 %v102, %v321
    %323 = vmatmul.bf16.gmra.mxu0 %v231
    %v324 = vpop.f32.mrf.mxu0
    %v325 = vadd.f32 %v102, %v324
    %v326 = vpop.f32.mrf.mxu0
    %v327 = vadd.f32 %v102, %v326
    %328 = vdwg.mxu0
    %v329 = vld [vmem:[%s7] sm:$0x1]
    %v330 = vperm.slane %v329, 0
    %v331 = vmul.f32 %v250, %v330
    %v332 = vmul.f32 %v252, %v330
    %v333 = vmul.f32 %v255, %v330
    %v334 = vmul.f32 %v257, %v330
    %v335 = vmul.f32 %v260, %v330
    %v336 = vmul.f32 %v262, %v330
    %v337 = vmul.f32 %v265, %v330
    %v338 = vmul.f32 %v267, %v330
    %v339 = vmul.f32 %v270, %v330
    %v340 = vmul.f32 %v272, %v330
    %v341 = vmul.f32 %v275, %v330
    %v342 = vmul.f32 %v277, %v330
    %v343 = vmul.f32 %v280, %v330
    %v344 = vmul.f32 %v282, %v330
    %v345 = vmul.f32 %v285, %v330
    %v346 = vmul.f32 %v287, %v330
    %v347 = vmul.f32 %v290, %v330
    %v348 = vmul.f32 %v292, %v330
    %v349 = vmul.f32 %v295, %v330
    %v350 = vmul.f32 %v297, %v330
    %v351 = vmul.f32 %v300, %v330
    %v352 = vmul.f32 %v302, %v330
    %v353 = vmul.f32 %v305, %v330
    %v354 = vmul.f32 %v307, %v330
    %v355 = vmul.f32 %v310, %v330
    %v356 = vmul.f32 %v312, %v330
    %v357 = vmul.f32 %v315, %v330
    %v358 = vmul.f32 %v317, %v330
    %v359 = vmul.f32 %v320, %v330
    %v360 = vmul.f32 %v322, %v330
    %v361 = vmul.f32 %v325, %v330
    %v362 = vmul.f32 %v327, %v330
    %v363 = vld [vmem:[%s7 + $0x1] sm:$0x1]
    %v364 = vperm.slane %v363, 0
    %v365 = vadd.f32 %v331, %v364
    %v366 = vadd.f32 %v332, %v364
    %v367 = vadd.f32 %v333, %v364
    %v368 = vadd.f32 %v334, %v364
    %v369 = vadd.f32 %v335, %v364
    %v370 = vadd.f32 %v336, %v364
    %v371 = vadd.f32 %v337, %v364
    %v372 = vadd.f32 %v338, %v364
    %v373 = vadd.f32 %v339, %v364
    %v374 = vadd.f32 %v340, %v364
    %v375 = vadd.f32 %v341, %v364
    %v376 = vadd.f32 %v342, %v364
    %v377 = vadd.f32 %v343, %v364
    %v378 = vadd.f32 %v344, %v364
    %v379 = vadd.f32 %v345, %v364
    %v380 = vadd.f32 %v346, %v364
    %v381 = vadd.f32 %v347, %v364
    %v382 = vadd.f32 %v348, %v364
    %v383 = vadd.f32 %v349, %v364
    %v384 = vadd.f32 %v350, %v364
    %v385 = vadd.f32 %v351, %v364
    %v386 = vadd.f32 %v352, %v364
    %v387 = vadd.f32 %v353, %v364
    %v388 = vadd.f32 %v354, %v364
    %v389 = vadd.f32 %v355, %v364
    %v390 = vadd.f32 %v356, %v364
    %v391 = vadd.f32 %v357, %v364
    %v392 = vadd.f32 %v358, %v364
    %v393 = vadd.f32 %v359, %v364
    %v394 = vadd.f32 %v360, %v364
    %v395 = vadd.f32 %v361, %v364
    %v396 = vadd.f32 %v362, %v364
    %v397 = vmax.f32 %v365, 0.0
    %v398 = vmax.f32 %v366, 0.0
    %v399 = vmax.f32 %v367, 0.0
    %v400 = vmax.f32 %v368, 0.0
    %v401 = vmax.f32 %v369, 0.0
    %v402 = vmax.f32 %v370, 0.0
    %v403 = vmax.f32 %v371, 0.0
    %v404 = vmax.f32 %v372, 0.0
    %v405 = vmax.f32 %v373, 0.0
    %v406 = vmax.f32 %v374, 0.0
    %v407 = vmax.f32 %v375, 0.0
    %v408 = vmax.f32 %v376, 0.0
    %v409 = vmax.f32 %v377, 0.0
    %v410 = vmax.f32 %v378, 0.0
    %v411 = vmax.f32 %v379, 0.0
    %v412 = vmax.f32 %v380, 0.0
    %v413 = vmax.f32 %v381, 0.0
    %v414 = vmax.f32 %v382, 0.0
    %v415 = vmax.f32 %v383, 0.0
    %v416 = vmax.f32 %v384, 0.0
    %v417 = vmax.f32 %v385, 0.0
    %v418 = vmax.f32 %v386, 0.0
    %v419 = vmax.f32 %v387, 0.0
    %v420 = vmax.f32 %v388, 0.0
    %v421 = vmax.f32 %v389, 0.0
    %v422 = vmax.f32 %v390, 0.0
    %v423 = vmax.f32 %v391, 0.0
    %v424 = vmax.f32 %v392, 0.0
    %v425 = vmax.f32 %v393, 0.0
    %v426 = vmax.f32 %v394, 0.0
    %v427 = vmax.f32 %v395, 0.0
    %v428 = vmax.f32 %v396, 0.0
    %v429 = vpack.c.bf16 %v398, %v397
    %v430 = vpack.c.bf16 %v400, %v399
    %v431 = vpack.c.bf16 %v402, %v401
    %v432 = vpack.c.bf16 %v404, %v403
    %v433 = vpack.c.bf16 %v406, %v405
    %v434 = vpack.c.bf16 %v408, %v407
    %v435 = vpack.c.bf16 %v410, %v409
    %v436 = vpack.c.bf16 %v412, %v411
    %v437 = vpack.c.bf16 %v414, %v413
    %v438 = vpack.c.bf16 %v416, %v415
    %v439 = vpack.c.bf16 %v418, %v417
    %v440 = vpack.c.bf16 %v420, %v419
    %v441 = vpack.c.bf16 %v422, %v421
    %v442 = vpack.c.bf16 %v424, %v423
    %v443 = vpack.c.bf16 %v426, %v425
    %v444 = vpack.c.bf16 %v428, %v427
    %v445 = vld [vmem:[%s8] sm:$0xf]
    %v446 = vld [vmem:[%s8 + $0x4] sm:$0xf]
    %v447 = vld [vmem:[%s9] sm:$0x1]
    %v449 = vperm.slane %v447, 0
    %v453 = vunpack.c.l.b16 %v445
    %v454 = vunpack.c.l.b16 %v446
    %v455 = vpack.c.b16 %v454, %v453
    %vm457 = vcmask 130048
    %v459 = vsel %vm457, %v429, 0
    %v462 = vsel %vm457, %v430, 0
    %v465 = vsel %vm457, %v431, 0
    %v468 = vsel %vm457, %v432, 0
    %v471 = vsel %vm457, %v433, 0
    %v474 = vsel %vm457, %v434, 0
    %v477 = vsel %vm457, %v435, 0
    %v480 = vsel %vm457, %v436, 0
    %v483 = vsel %vm457, %v437, 0
    %v486 = vsel %vm457, %v438, 0
    %v489 = vsel %vm457, %v439, 0
    %v492 = vsel %vm457, %v440, 0
    %v495 = vsel %vm457, %v441, 0
    %v498 = vsel %vm457, %v442, 0
    %v501 = vsel %vm457, %v443, 0
    %v504 = vsel %vm457, %v444, 0
    %506 = vmatpush.bf16.msra.mxu0 0
    %507 = vmatpush.bf16.msra.mxu0 0
    %508 = vmatpush.bf16.msra.mxu0 0
    %509 = vmatpush.bf16.msra.mxu0 0
    %510 = vmatpush.bf16.msra.mxu0 0
    %511 = vmatpush.bf16.msra.mxu0 0
    %512 = vmatpush.bf16.msra.mxu0 0
    %513 = vmatpush.bf16.msra.mxu0 %v455
    %514 = vmatmul.bf16.gmra.mxu0 %v459
    %v515 = vpop.f32.mrf.mxu0
    %v516 = vadd.f32 %v449, %v515
    %v517 = vpop.f32.mrf.mxu0
    %v518 = vadd.f32 %v449, %v517
    %519 = vmatmul.bf16.gmra.mxu0 %v462
    %v520 = vpop.f32.mrf.mxu0
    %v521 = vadd.f32 %v449, %v520
    %v522 = vpop.f32.mrf.mxu0
    %v523 = vadd.f32 %v449, %v522
    %524 = vmatmul.bf16.gmra.mxu0 %v465
    %v525 = vpop.f32.mrf.mxu0
    %v526 = vadd.f32 %v449, %v525
    %v527 = vpop.f32.mrf.mxu0
    %v528 = vadd.f32 %v449, %v527
    %529 = vmatmul.bf16.gmra.mxu0 %v468
    %v530 = vpop.f32.mrf.mxu0
    %v531 = vadd.f32 %v449, %v530
    %v532 = vpop.f32.mrf.mxu0
    %v533 = vadd.f32 %v449, %v532
    %534 = vmatmul.bf16.gmra.mxu0 %v471
    %v535 = vpop.f32.mrf.mxu0
    %v536 = vadd.f32 %v449, %v535
    %v537 = vpop.f32.mrf.mxu0
    %v538 = vadd.f32 %v449, %v537
    %539 = vmatmul.bf16.gmra.mxu0 %v474
    %v540 = vpop.f32.mrf.mxu0
    %v541 = vadd.f32 %v449, %v540
    %v542 = vpop.f32.mrf.mxu0
    %v543 = vadd.f32 %v449, %v542
    %544 = vmatmul.bf16.gmra.mxu0 %v477
    %v545 = vpop.f32.mrf.mxu0
    %v546 = vadd.f32 %v449, %v545
    %v547 = vpop.f32.mrf.mxu0
    %v548 = vadd.f32 %v449, %v547
    %549 = vmatmul.bf16.gmra.mxu0 %v480
    %v550 = vpop.f32.mrf.mxu0
    %v551 = vadd.f32 %v449, %v550
    %v552 = vpop.f32.mrf.mxu0
    %v553 = vadd.f32 %v449, %v552
    %554 = vmatmul.bf16.gmra.mxu0 %v483
    %v555 = vpop.f32.mrf.mxu0
    %v556 = vadd.f32 %v449, %v555
    %v557 = vpop.f32.mrf.mxu0
    %v558 = vadd.f32 %v449, %v557
    %559 = vmatmul.bf16.gmra.mxu0 %v486
    %v560 = vpop.f32.mrf.mxu0
    %v561 = vadd.f32 %v449, %v560
    %v562 = vpop.f32.mrf.mxu0
    %v563 = vadd.f32 %v449, %v562
    %564 = vmatmul.bf16.gmra.mxu0 %v489
    %v565 = vpop.f32.mrf.mxu0
    %v566 = vadd.f32 %v449, %v565
    %v567 = vpop.f32.mrf.mxu0
    %v568 = vadd.f32 %v449, %v567
    %569 = vmatmul.bf16.gmra.mxu0 %v492
    %v570 = vpop.f32.mrf.mxu0
    %v571 = vadd.f32 %v449, %v570
    %v572 = vpop.f32.mrf.mxu0
    %v573 = vadd.f32 %v449, %v572
    %574 = vmatmul.bf16.gmra.mxu0 %v495
    %v575 = vpop.f32.mrf.mxu0
    %v576 = vadd.f32 %v449, %v575
    %v577 = vpop.f32.mrf.mxu0
    %v578 = vadd.f32 %v449, %v577
    %579 = vmatmul.bf16.gmra.mxu0 %v498
    %v580 = vpop.f32.mrf.mxu0
    %v581 = vadd.f32 %v449, %v580
    %v582 = vpop.f32.mrf.mxu0
    %v583 = vadd.f32 %v449, %v582
    %584 = vmatmul.bf16.gmra.mxu0 %v501
    %v585 = vpop.f32.mrf.mxu0
    %v586 = vadd.f32 %v449, %v585
    %v587 = vpop.f32.mrf.mxu0
    %v588 = vadd.f32 %v449, %v587
    %589 = vmatmul.bf16.gmra.mxu0 %v504
    %v590 = vpop.f32.mrf.mxu0
    %v591 = vadd.f32 %v449, %v590
    %v592 = vpop.f32.mrf.mxu0
    %v593 = vadd.f32 %v449, %v592
    %594 = vdwg.mxu0
    %v595 = vld [vmem:[%s2] sm:$0xf]
    %v596 = vld [vmem:[%s2 + $0x4] sm:$0xf]
    %v597 = vld [vmem:[%s2 + $0x8] sm:$0xf]
    %v598 = vld [vmem:[%s2 + $0xc] sm:$0xf]
    %v599 = vld [vmem:[%s2 + $0x10] sm:$0xf]
    %v600 = vld [vmem:[%s2 + $0x14] sm:$0xf]
    %v601 = vld [vmem:[%s2 + $0x18] sm:$0xf]
    %v602 = vld [vmem:[%s2 + $0x1c] sm:$0xf]
    %v603 = vld [vmem:[%s2 + $0x20] sm:$0xf]
    %v604 = vld [vmem:[%s2 + $0x24] sm:$0xf]
    %v605 = vld [vmem:[%s2 + $0x28] sm:$0xf]
    %v606 = vld [vmem:[%s2 + $0x2c] sm:$0xf]
    %v607 = vld [vmem:[%s2 + $0x30] sm:$0xf]
    %v608 = vld [vmem:[%s2 + $0x34] sm:$0xf]
    %v609 = vld [vmem:[%s2 + $0x38] sm:$0xf]
    %v610 = vld [vmem:[%s2 + $0x3c] sm:$0xf]
    %v611 = vld [vmem:[%s2 + $0x40] sm:$0xf]
    %v612 = vld [vmem:[%s2 + $0x44] sm:$0xf]
    %v613 = vld [vmem:[%s2 + $0x48] sm:$0xf]
    %v614 = vld [vmem:[%s2 + $0x4c] sm:$0xf]
    %v615 = vld [vmem:[%s2 + $0x50] sm:$0xf]
    %v616 = vld [vmem:[%s2 + $0x54] sm:$0xf]
    %v617 = vld [vmem:[%s2 + $0x58] sm:$0xf]
    %v618 = vld [vmem:[%s2 + $0x5c] sm:$0xf]
    %v619 = vld [vmem:[%s2 + $0x60] sm:$0xf]
    %v620 = vld [vmem:[%s2 + $0x64] sm:$0xf]
    %v621 = vld [vmem:[%s2 + $0x68] sm:$0xf]
    %v622 = vld [vmem:[%s2 + $0x6c] sm:$0xf]
    %v623 = vld [vmem:[%s2 + $0x70] sm:$0xf]
    %v624 = vld [vmem:[%s2 + $0x74] sm:$0xf]
    %v625 = vld [vmem:[%s2 + $0x78] sm:$0xf]
    %v626 = vld [vmem:[%s2 + $0x7c] sm:$0xf]
    %v627 = vunpack.c.l.bf16 %v595
    %v628 = vunpack.c.l.bf16 %v596
    %v629 = vunpack.c.l.bf16 %v597
    %v630 = vunpack.c.l.bf16 %v598
    %v631 = vunpack.c.l.bf16 %v599
    %v632 = vunpack.c.l.bf16 %v600
    %v633 = vunpack.c.l.bf16 %v601
    %v634 = vunpack.c.l.bf16 %v602
    %v635 = vunpack.c.l.bf16 %v603
    %v636 = vunpack.c.l.bf16 %v604
    %v637 = vunpack.c.l.bf16 %v605
    %v638 = vunpack.c.l.bf16 %v606
    %v639 = vunpack.c.l.bf16 %v607
    %v640 = vunpack.c.l.bf16 %v608
    %v641 = vunpack.c.l.bf16 %v609
    %v642 = vunpack.c.l.bf16 %v610
    %v643 = vunpack.c.l.bf16 %v611
    %v644 = vunpack.c.l.bf16 %v612
    %v645 = vunpack.c.l.bf16 %v613
    %v646 = vunpack.c.l.bf16 %v614
    %v647 = vunpack.c.l.bf16 %v615
    %v648 = vunpack.c.l.bf16 %v616
    %v649 = vunpack.c.l.bf16 %v617
    %v650 = vunpack.c.l.bf16 %v618
    %v651 = vunpack.c.l.bf16 %v619
    %v652 = vunpack.c.l.bf16 %v620
    %v653 = vunpack.c.l.bf16 %v621
    %v654 = vunpack.c.l.bf16 %v622
    %v655 = vunpack.c.l.bf16 %v623
    %v656 = vunpack.c.l.bf16 %v624
    %v657 = vunpack.c.l.bf16 %v625
    %v658 = vunpack.c.l.bf16 %v626
    %v659 = vld [vmem:[%s1] sm:$0x1]
    %v660 = vld [vmem:[%s1 + $0x1] sm:$0x1]
    %v661 = vld [vmem:[%s1 + $0x2] sm:$0x1]
    %v662 = vld [vmem:[%s1 + $0x3] sm:$0x1]
    %v663 = vld [vmem:[%s1 + $0x4] sm:$0x1]
    %v664 = vld [vmem:[%s1 + $0x5] sm:$0x1]
    %v665 = vld [vmem:[%s1 + $0x6] sm:$0x1]
    %v666 = vld [vmem:[%s1 + $0x7] sm:$0x1]
    %v667 = vld [vmem:[%s1 + $0x8] sm:$0x1]
    %v668 = vld [vmem:[%s1 + $0x9] sm:$0x1]
    %v669 = vld [vmem:[%s1 + $0xa] sm:$0x1]
    %v670 = vld [vmem:[%s1 + $0xb] sm:$0x1]
    %v671 = vld [vmem:[%s1 + $0xc] sm:$0x1]
    %v672 = vld [vmem:[%s1 + $0xd] sm:$0x1]
    %v673 = vld [vmem:[%s1 + $0xe] sm:$0x1]
    %v674 = vld [vmem:[%s1 + $0xf] sm:$0x1]
    %v675 = vld [vmem:[%s1 + $0x10] sm:$0x1]
    %v676 = vld [vmem:[%s1 + $0x11] sm:$0x1]
    %v677 = vld [vmem:[%s1 + $0x12] sm:$0x1]
    %v678 = vld [vmem:[%s1 + $0x13] sm:$0x1]
    %v679 = vld [vmem:[%s1 + $0x14] sm:$0x1]
    %v680 = vld [vmem:[%s1 + $0x15] sm:$0x1]
    %v681 = vld [vmem:[%s1 + $0x16] sm:$0x1]
    %v682 = vld [vmem:[%s1 + $0x17] sm:$0x1]
    %v683 = vld [vmem:[%s1 + $0x18] sm:$0x1]
    %v684 = vld [vmem:[%s1 + $0x19] sm:$0x1]
    %v685 = vld [vmem:[%s1 + $0x1a] sm:$0x1]
    %v686 = vld [vmem:[%s1 + $0x1b] sm:$0x1]
    %v687 = vld [vmem:[%s1 + $0x1c] sm:$0x1]
    %v688 = vld [vmem:[%s1 + $0x1d] sm:$0x1]
    %v689 = vld [vmem:[%s1 + $0x1e] sm:$0x1]
    %v690 = vld [vmem:[%s1 + $0x1f] sm:$0x1]
    %v723 = vperm.slane %v659, 0
    %v724 = vperm.slane %v660, 0
    %v725 = vperm.slane %v661, 0
    %v726 = vperm.slane %v662, 0
    %v727 = vperm.slane %v663, 0
    %v728 = vperm.slane %v664, 0
    %v729 = vperm.slane %v665, 0
    %v730 = vperm.slane %v666, 0
    %v731 = vperm.slane %v667, 0
    %v732 = vperm.slane %v668, 0
    %v733 = vperm.slane %v669, 0
    %v734 = vperm.slane %v670, 0
    %v735 = vperm.slane %v671, 0
    %v736 = vperm.slane %v672, 0
    %v737 = vperm.slane %v673, 0
    %v738 = vperm.slane %v674, 0
    %v739 = vperm.slane %v675, 0
    %v740 = vperm.slane %v676, 0
    %v741 = vperm.slane %v677, 0
    %v742 = vperm.slane %v678, 0
    %v743 = vperm.slane %v679, 0
    %v744 = vperm.slane %v680, 0
    %v745 = vperm.slane %v681, 0
    %v746 = vperm.slane %v682, 0
    %v747 = vperm.slane %v683, 0
    %v748 = vperm.slane %v684, 0
    %v749 = vperm.slane %v685, 0
    %v750 = vperm.slane %v686, 0
    %v751 = vperm.slane %v687, 0
    %v752 = vperm.slane %v688, 0
    %v753 = vperm.slane %v689, 0
    %v754 = vperm.slane %v690, 0
    %v787 = vsub.f32 %v627, %v723
    %v788 = vsub.f32 %v628, %v724
    %v789 = vsub.f32 %v629, %v725
    %v790 = vsub.f32 %v630, %v726
    %v791 = vsub.f32 %v631, %v727
    %v792 = vsub.f32 %v632, %v728
    %v793 = vsub.f32 %v633, %v729
    %v794 = vsub.f32 %v634, %v730
    %v795 = vsub.f32 %v635, %v731
    %v796 = vsub.f32 %v636, %v732
    %v797 = vsub.f32 %v637, %v733
    %v798 = vsub.f32 %v638, %v734
    %v799 = vsub.f32 %v639, %v735
    %v800 = vsub.f32 %v640, %v736
    %v801 = vsub.f32 %v641, %v737
    %v802 = vsub.f32 %v642, %v738
    %v803 = vsub.f32 %v643, %v739
    %v804 = vsub.f32 %v644, %v740
    %v805 = vsub.f32 %v645, %v741
    %v806 = vsub.f32 %v646, %v742
    %v807 = vsub.f32 %v647, %v743
    %v808 = vsub.f32 %v648, %v744
    %v809 = vsub.f32 %v649, %v745
    %v810 = vsub.f32 %v650, %v746
    %v811 = vsub.f32 %v651, %v747
    %v812 = vsub.f32 %v652, %v748
    %v813 = vsub.f32 %v653, %v749
    %v814 = vsub.f32 %v654, %v750
    %v815 = vsub.f32 %v655, %v751
    %v816 = vsub.f32 %v656, %v752
    %v817 = vsub.f32 %v657, %v753
    %v818 = vsub.f32 %v658, %v754
    %v819 = vadd.f32 %v787, %v516
    %v820 = vadd.f32 %v788, %v518
    %v821 = vadd.f32 %v789, %v521
    %v822 = vadd.f32 %v790, %v523
    %v823 = vadd.f32 %v791, %v526
    %v824 = vadd.f32 %v792, %v528
    %v825 = vadd.f32 %v793, %v531
    %v826 = vadd.f32 %v794, %v533
    %v827 = vadd.f32 %v795, %v536
    %v828 = vadd.f32 %v796, %v538
    %v829 = vadd.f32 %v797, %v541
    %v830 = vadd.f32 %v798, %v543
    %v831 = vadd.f32 %v799, %v546
    %v832 = vadd.f32 %v800, %v548
    %v833 = vadd.f32 %v801, %v551
    %v834 = vadd.f32 %v802, %v553
    %v835 = vadd.f32 %v803, %v556
    %v836 = vadd.f32 %v804, %v558
    %v837 = vadd.f32 %v805, %v561
    %v838 = vadd.f32 %v806, %v563
    %v839 = vadd.f32 %v807, %v566
    %v840 = vadd.f32 %v808, %v568
    %v841 = vadd.f32 %v809, %v571
    %v842 = vadd.f32 %v810, %v573
    %v843 = vadd.f32 %v811, %v576
    %v844 = vadd.f32 %v812, %v578
    %v845 = vadd.f32 %v813, %v581
    %v846 = vadd.f32 %v814, %v583
    %v847 = vadd.f32 %v815, %v586
    %v848 = vadd.f32 %v816, %v588
    %v849 = vadd.f32 %v817, %v591
    %v850 = vadd.f32 %v818, %v593
    %v851 = vpack.c.bf16 %v820, %v819
    %v852 = vpack.c.bf16 %v822, %v821
    %v853 = vpack.c.bf16 %v824, %v823
    %v854 = vpack.c.bf16 %v826, %v825
    %v855 = vpack.c.bf16 %v828, %v827
    %v856 = vpack.c.bf16 %v830, %v829
    %v857 = vpack.c.bf16 %v832, %v831
    %v858 = vpack.c.bf16 %v834, %v833
    %v859 = vpack.c.bf16 %v836, %v835
    %v860 = vpack.c.bf16 %v838, %v837
    %v861 = vpack.c.bf16 %v840, %v839
    %v862 = vpack.c.bf16 %v842, %v841
    %v863 = vpack.c.bf16 %v844, %v843
    %v864 = vpack.c.bf16 %v846, %v845
    %v865 = vpack.c.bf16 %v848, %v847
    %v866 = vpack.c.bf16 %v850, %v849
    %v867 = vld [vmem:[%s10] sm:$0xf]
    %v868 = vld [vmem:[%s10 + $0x4] sm:$0xf]
    %v869 = vld [vmem:[%s10 + $0x8] sm:$0xf]
    %v870 = vld [vmem:[%s10 + $0xc] sm:$0xf]
    %v871 = vld [vmem:[%s11] sm:$0x1]
    %v873 = vperm.slane %v871, 0
    %v879 = vunpack.c.l.b16 %v867
    %v880 = vunpack.c.l.b16 %v868
    %v881 = vunpack.c.l.b16 %v869
    %v882 = vunpack.c.l.b16 %v870
    %v883 = vpack.c.b16 %v880, %v879
    %v884 = vpack.c.b16 %v882, %v881
    %vm887 = vcmask 261120
    %v889 = vsel %vm887, %v851, 0
    %v892 = vsel %vm887, %v852, 0
    %v895 = vsel %vm887, %v853, 0
    %v898 = vsel %vm887, %v854, 0
    %v901 = vsel %vm887, %v855, 0
    %v904 = vsel %vm887, %v856, 0
    %v907 = vsel %vm887, %v857, 0
    %v910 = vsel %vm887, %v858, 0
    %v913 = vsel %vm887, %v859, 0
    %v916 = vsel %vm887, %v860, 0
    %v919 = vsel %vm887, %v861, 0
    %v922 = vsel %vm887, %v862, 0
    %v925 = vsel %vm887, %v863, 0
    %v928 = vsel %vm887, %v864, 0
    %v931 = vsel %vm887, %v865, 0
    %v934 = vsel %vm887, %v866, 0
    %936 = vmatpush.bf16.msra.mxu0 0
    %937 = vmatpush.bf16.msra.mxu0 0
    %938 = vmatpush.bf16.msra.mxu0 0
    %939 = vmatpush.bf16.msra.mxu0 0
    %940 = vmatpush.bf16.msra.mxu0 0
    %941 = vmatpush.bf16.msra.mxu0 0
    %942 = vmatpush.bf16.msra.mxu0 %v884
    %943 = vmatpush.bf16.msra.mxu0 %v883
    %944 = vmatmul.bf16.gmra.mxu0 %v889
    %v945 = vpop.f32.mrf.mxu0
    %v946 = vadd.f32 %v873, %v945
    %v947 = vpop.f32.mrf.mxu0
    %v948 = vadd.f32 %v873, %v947
    %949 = vmatmul.bf16.gmra.mxu0 %v892
    %v950 = vpop.f32.mrf.mxu0
    %v951 = vadd.f32 %v873, %v950
    %v952 = vpop.f32.mrf.mxu0
    %v953 = vadd.f32 %v873, %v952
    %954 = vmatmul.bf16.gmra.mxu0 %v895
    %v955 = vpop.f32.mrf.mxu0
    %v956 = vadd.f32 %v873, %v955
    %v957 = vpop.f32.mrf.mxu0
    %v958 = vadd.f32 %v873, %v957
    %959 = vmatmul.bf16.gmra.mxu0 %v898
    %v960 = vpop.f32.mrf.mxu0
    %v961 = vadd.f32 %v873, %v960
    %v962 = vpop.f32.mrf.mxu0
    %v963 = vadd.f32 %v873, %v962
    %964 = vmatmul.bf16.gmra.mxu0 %v901
    %v965 = vpop.f32.mrf.mxu0
    %v966 = vadd.f32 %v873, %v965
    %v967 = vpop.f32.mrf.mxu0
    %v968 = vadd.f32 %v873, %v967
    %969 = vmatmul.bf16.gmra.mxu0 %v904
    %v970 = vpop.f32.mrf.mxu0
    %v971 = vadd.f32 %v873, %v970
    %v972 = vpop.f32.mrf.mxu0
    %v973 = vadd.f32 %v873, %v972
    %974 = vmatmul.bf16.gmra.mxu0 %v907
    %v975 = vpop.f32.mrf.mxu0
    %v976 = vadd.f32 %v873, %v975
    %v977 = vpop.f32.mrf.mxu0
    %v978 = vadd.f32 %v873, %v977
    %979 = vmatmul.bf16.gmra.mxu0 %v910
    %v980 = vpop.f32.mrf.mxu0
    %v981 = vadd.f32 %v873, %v980
    %v982 = vpop.f32.mrf.mxu0
    %v983 = vadd.f32 %v873, %v982
    %984 = vmatmul.bf16.gmra.mxu0 %v913
    %v985 = vpop.f32.mrf.mxu0
    %v986 = vadd.f32 %v873, %v985
    %v987 = vpop.f32.mrf.mxu0
    %v988 = vadd.f32 %v873, %v987
    %989 = vmatmul.bf16.gmra.mxu0 %v916
    %v990 = vpop.f32.mrf.mxu0
    %v991 = vadd.f32 %v873, %v990
    %v992 = vpop.f32.mrf.mxu0
    %v993 = vadd.f32 %v873, %v992
    %994 = vmatmul.bf16.gmra.mxu0 %v919
    %v995 = vpop.f32.mrf.mxu0
    %v996 = vadd.f32 %v873, %v995
    %v997 = vpop.f32.mrf.mxu0
    %v998 = vadd.f32 %v873, %v997
    %999 = vmatmul.bf16.gmra.mxu0 %v922
    %v1000 = vpop.f32.mrf.mxu0
    %v1001 = vadd.f32 %v873, %v1000
    %v1002 = vpop.f32.mrf.mxu0
    %v1003 = vadd.f32 %v873, %v1002
    %1004 = vmatmul.bf16.gmra.mxu0 %v925
    %v1005 = vpop.f32.mrf.mxu0
    %v1006 = vadd.f32 %v873, %v1005
    %v1007 = vpop.f32.mrf.mxu0
    %v1008 = vadd.f32 %v873, %v1007
    %1009 = vmatmul.bf16.gmra.mxu0 %v928
    %v1010 = vpop.f32.mrf.mxu0
    %v1011 = vadd.f32 %v873, %v1010
    %v1012 = vpop.f32.mrf.mxu0
    %v1013 = vadd.f32 %v873, %v1012
    %1014 = vmatmul.bf16.gmra.mxu0 %v931
    %v1015 = vpop.f32.mrf.mxu0
    %v1016 = vadd.f32 %v873, %v1015
    %v1017 = vpop.f32.mrf.mxu0
    %v1018 = vadd.f32 %v873, %v1017
    %1019 = vmatmul.bf16.gmra.mxu0 %v934
    %v1020 = vpop.f32.mrf.mxu0
    %v1021 = vadd.f32 %v873, %v1020
    %v1022 = vpop.f32.mrf.mxu0
    %v1023 = vadd.f32 %v873, %v1022
    %1024 = vdwg.mxu0
    %v1025 = vld [vmem:[%s12] sm:$0x1]
    %v1026 = vperm.slane %v1025, 0
    %v1027 = vmul.f32 %v946, %v1026
    %v1028 = vmul.f32 %v948, %v1026
    %v1029 = vmul.f32 %v951, %v1026
    %v1030 = vmul.f32 %v953, %v1026
    %v1031 = vmul.f32 %v956, %v1026
    %v1032 = vmul.f32 %v958, %v1026
    %v1033 = vmul.f32 %v961, %v1026
    %v1034 = vmul.f32 %v963, %v1026
    %v1035 = vmul.f32 %v966, %v1026
    %v1036 = vmul.f32 %v968, %v1026
    %v1037 = vmul.f32 %v971, %v1026
    %v1038 = vmul.f32 %v973, %v1026
    %v1039 = vmul.f32 %v976, %v1026
    %v1040 = vmul.f32 %v978, %v1026
    %v1041 = vmul.f32 %v981, %v1026
    %v1042 = vmul.f32 %v983, %v1026
    %v1043 = vmul.f32 %v986, %v1026
    %v1044 = vmul.f32 %v988, %v1026
    %v1045 = vmul.f32 %v991, %v1026
    %v1046 = vmul.f32 %v993, %v1026
    %v1047 = vmul.f32 %v996, %v1026
    %v1048 = vmul.f32 %v998, %v1026
    %v1049 = vmul.f32 %v1001, %v1026
    %v1050 = vmul.f32 %v1003, %v1026
    %v1051 = vmul.f32 %v1006, %v1026
    %v1052 = vmul.f32 %v1008, %v1026
    %v1053 = vmul.f32 %v1011, %v1026
    %v1054 = vmul.f32 %v1013, %v1026
    %v1055 = vmul.f32 %v1016, %v1026
    %v1056 = vmul.f32 %v1018, %v1026
    %v1057 = vmul.f32 %v1021, %v1026
    %v1058 = vmul.f32 %v1023, %v1026
    %v1059 = vld [vmem:[%s12 + $0x1] sm:$0x1]
    %v1060 = vperm.slane %v1059, 0
    %v1061 = vadd.f32 %v1027, %v1060
    %v1062 = vadd.f32 %v1028, %v1060
    %v1063 = vadd.f32 %v1029, %v1060
    %v1064 = vadd.f32 %v1030, %v1060
    %v1065 = vadd.f32 %v1031, %v1060
    %v1066 = vadd.f32 %v1032, %v1060
    %v1067 = vadd.f32 %v1033, %v1060
    %v1068 = vadd.f32 %v1034, %v1060
    %v1069 = vadd.f32 %v1035, %v1060
    %v1070 = vadd.f32 %v1036, %v1060
    %v1071 = vadd.f32 %v1037, %v1060
    %v1072 = vadd.f32 %v1038, %v1060
    %v1073 = vadd.f32 %v1039, %v1060
    %v1074 = vadd.f32 %v1040, %v1060
    %v1075 = vadd.f32 %v1041, %v1060
    %v1076 = vadd.f32 %v1042, %v1060
    %v1077 = vadd.f32 %v1043, %v1060
    %v1078 = vadd.f32 %v1044, %v1060
    %v1079 = vadd.f32 %v1045, %v1060
    %v1080 = vadd.f32 %v1046, %v1060
    %v1081 = vadd.f32 %v1047, %v1060
    %v1082 = vadd.f32 %v1048, %v1060
    %v1083 = vadd.f32 %v1049, %v1060
    %v1084 = vadd.f32 %v1050, %v1060
    %v1085 = vadd.f32 %v1051, %v1060
    %v1086 = vadd.f32 %v1052, %v1060
    %v1087 = vadd.f32 %v1053, %v1060
    %v1088 = vadd.f32 %v1054, %v1060
    %v1089 = vadd.f32 %v1055, %v1060
    %v1090 = vadd.f32 %v1056, %v1060
    %v1091 = vadd.f32 %v1057, %v1060
    %v1092 = vadd.f32 %v1058, %v1060
    %v1093 = vmax.f32 %v1061, 0.0
    %v1094 = vmax.f32 %v1062, 0.0
    %v1095 = vmax.f32 %v1063, 0.0
    %v1096 = vmax.f32 %v1064, 0.0
    %v1097 = vmax.f32 %v1065, 0.0
    %v1098 = vmax.f32 %v1066, 0.0
    %v1099 = vmax.f32 %v1067, 0.0
    %v1100 = vmax.f32 %v1068, 0.0
    %v1101 = vmax.f32 %v1069, 0.0
    %v1102 = vmax.f32 %v1070, 0.0
    %v1103 = vmax.f32 %v1071, 0.0
    %v1104 = vmax.f32 %v1072, 0.0
    %v1105 = vmax.f32 %v1073, 0.0
    %v1106 = vmax.f32 %v1074, 0.0
    %v1107 = vmax.f32 %v1075, 0.0
    %v1108 = vmax.f32 %v1076, 0.0
    %v1109 = vmax.f32 %v1077, 0.0
    %v1110 = vmax.f32 %v1078, 0.0
    %v1111 = vmax.f32 %v1079, 0.0
    %v1112 = vmax.f32 %v1080, 0.0
    %v1113 = vmax.f32 %v1081, 0.0
    %v1114 = vmax.f32 %v1082, 0.0
    %v1115 = vmax.f32 %v1083, 0.0
    %v1116 = vmax.f32 %v1084, 0.0
    %v1117 = vmax.f32 %v1085, 0.0
    %v1118 = vmax.f32 %v1086, 0.0
    %v1119 = vmax.f32 %v1087, 0.0
    %v1120 = vmax.f32 %v1088, 0.0
    %v1121 = vmax.f32 %v1089, 0.0
    %v1122 = vmax.f32 %v1090, 0.0
    %v1123 = vmax.f32 %v1091, 0.0
    %v1124 = vmax.f32 %v1092, 0.0
    %v1125 = vpack.c.bf16 %v1094, %v1093
    %v1126 = vpack.c.bf16 %v1096, %v1095
    %v1127 = vpack.c.bf16 %v1098, %v1097
    %v1128 = vpack.c.bf16 %v1100, %v1099
    %v1129 = vpack.c.bf16 %v1102, %v1101
    %v1130 = vpack.c.bf16 %v1104, %v1103
    %v1131 = vpack.c.bf16 %v1106, %v1105
    %v1132 = vpack.c.bf16 %v1108, %v1107
    %v1133 = vpack.c.bf16 %v1110, %v1109
    %v1134 = vpack.c.bf16 %v1112, %v1111
    %v1135 = vpack.c.bf16 %v1114, %v1113
    %v1136 = vpack.c.bf16 %v1116, %v1115
    %v1137 = vpack.c.bf16 %v1118, %v1117
    %v1138 = vpack.c.bf16 %v1120, %v1119
    %v1139 = vpack.c.bf16 %v1122, %v1121
    %v1140 = vpack.c.bf16 %v1124, %v1123
    %v1141 = vld [vmem:[%s13] sm:$0xf]
    %v1142 = vld [vmem:[%s13 + $0x4] sm:$0xf]
    %v1143 = vld [vmem:[%s13 + $0x8] sm:$0xf]
    %v1144 = vld [vmem:[%s13 + $0xc] sm:$0xf]
    %v1145 = vld [vmem:[%s14] sm:$0x1]
    %v1147 = vperm.slane %v1145, 0
    %v1153 = vunpack.c.l.b16 %v1141
    %v1154 = vunpack.c.l.b16 %v1142
    %v1155 = vunpack.c.l.b16 %v1143
    %v1156 = vunpack.c.l.b16 %v1144
    %v1157 = vpack.c.b16 %v1154, %v1153
    %v1158 = vpack.c.b16 %v1156, %v1155
    %v1162 = vsel %vm887, %v1125, 0
    %v1165 = vsel %vm887, %v1126, 0
    %v1168 = vsel %vm887, %v1127, 0
    %v1171 = vsel %vm887, %v1128, 0
    %v1174 = vsel %vm887, %v1129, 0
    %v1177 = vsel %vm887, %v1130, 0
    %v1180 = vsel %vm887, %v1131, 0
    %v1183 = vsel %vm887, %v1132, 0
    %v1186 = vsel %vm887, %v1133, 0
    %v1189 = vsel %vm887, %v1134, 0
    %v1192 = vsel %vm887, %v1135, 0
    %v1195 = vsel %vm887, %v1136, 0
    %v1198 = vsel %vm887, %v1137, 0
    %v1201 = vsel %vm887, %v1138, 0
    %v1204 = vsel %vm887, %v1139, 0
    %v1207 = vsel %vm887, %v1140, 0
    %1209 = vmatpush.bf16.msra.mxu0 0
    %1210 = vmatpush.bf16.msra.mxu0 0
    %1211 = vmatpush.bf16.msra.mxu0 0
    %1212 = vmatpush.bf16.msra.mxu0 0
    %1213 = vmatpush.bf16.msra.mxu0 0
    %1214 = vmatpush.bf16.msra.mxu0 0
    %1215 = vmatpush.bf16.msra.mxu0 %v1158
    %1216 = vmatpush.bf16.msra.mxu0 %v1157
    %1217 = vmatmul.bf16.gmra.mxu0 %v1162
    %v1218 = vpop.f32.mrf.mxu0
    %v1219 = vadd.f32 %v1147, %v1218
    %v1220 = vpop.f32.mrf.mxu0
    %v1221 = vadd.f32 %v1147, %v1220
    %1222 = vmatmul.bf16.gmra.mxu0 %v1165
    %v1223 = vpop.f32.mrf.mxu0
    %v1224 = vadd.f32 %v1147, %v1223
    %v1225 = vpop.f32.mrf.mxu0
    %v1226 = vadd.f32 %v1147, %v1225
    %1227 = vmatmul.bf16.gmra.mxu0 %v1168
    %v1228 = vpop.f32.mrf.mxu0
    %v1229 = vadd.f32 %v1147, %v1228
    %v1230 = vpop.f32.mrf.mxu0
    %v1231 = vadd.f32 %v1147, %v1230
    %1232 = vmatmul.bf16.gmra.mxu0 %v1171
    %v1233 = vpop.f32.mrf.mxu0
    %v1234 = vadd.f32 %v1147, %v1233
    %v1235 = vpop.f32.mrf.mxu0
    %v1236 = vadd.f32 %v1147, %v1235
    %1237 = vmatmul.bf16.gmra.mxu0 %v1174
    %v1238 = vpop.f32.mrf.mxu0
    %v1239 = vadd.f32 %v1147, %v1238
    %v1240 = vpop.f32.mrf.mxu0
    %v1241 = vadd.f32 %v1147, %v1240
    %1242 = vmatmul.bf16.gmra.mxu0 %v1177
    %v1243 = vpop.f32.mrf.mxu0
    %v1244 = vadd.f32 %v1147, %v1243
    %v1245 = vpop.f32.mrf.mxu0
    %v1246 = vadd.f32 %v1147, %v1245
    %1247 = vmatmul.bf16.gmra.mxu0 %v1180
    %v1248 = vpop.f32.mrf.mxu0
    %v1249 = vadd.f32 %v1147, %v1248
    %v1250 = vpop.f32.mrf.mxu0
    %v1251 = vadd.f32 %v1147, %v1250
    %1252 = vmatmul.bf16.gmra.mxu0 %v1183
    %v1253 = vpop.f32.mrf.mxu0
    %v1254 = vadd.f32 %v1147, %v1253
    %v1255 = vpop.f32.mrf.mxu0
    %v1256 = vadd.f32 %v1147, %v1255
    %1257 = vmatmul.bf16.gmra.mxu0 %v1186
    %v1258 = vpop.f32.mrf.mxu0
    %v1259 = vadd.f32 %v1147, %v1258
    %v1260 = vpop.f32.mrf.mxu0
    %v1261 = vadd.f32 %v1147, %v1260
    %1262 = vmatmul.bf16.gmra.mxu0 %v1189
    %v1263 = vpop.f32.mrf.mxu0
    %v1264 = vadd.f32 %v1147, %v1263
    %v1265 = vpop.f32.mrf.mxu0
    %v1266 = vadd.f32 %v1147, %v1265
    %1267 = vmatmul.bf16.gmra.mxu0 %v1192
    %v1268 = vpop.f32.mrf.mxu0
    %v1269 = vadd.f32 %v1147, %v1268
    %v1270 = vpop.f32.mrf.mxu0
    %v1271 = vadd.f32 %v1147, %v1270
    %1272 = vmatmul.bf16.gmra.mxu0 %v1195
    %v1273 = vpop.f32.mrf.mxu0
    %v1274 = vadd.f32 %v1147, %v1273
    %v1275 = vpop.f32.mrf.mxu0
    %v1276 = vadd.f32 %v1147, %v1275
    %1277 = vmatmul.bf16.gmra.mxu0 %v1198
    %v1278 = vpop.f32.mrf.mxu0
    %v1279 = vadd.f32 %v1147, %v1278
    %v1280 = vpop.f32.mrf.mxu0
    %v1281 = vadd.f32 %v1147, %v1280
    %1282 = vmatmul.bf16.gmra.mxu0 %v1201
    %v1283 = vpop.f32.mrf.mxu0
    %v1284 = vadd.f32 %v1147, %v1283
    %v1285 = vpop.f32.mrf.mxu0
    %v1286 = vadd.f32 %v1147, %v1285
    %1287 = vmatmul.bf16.gmra.mxu0 %v1204
    %v1288 = vpop.f32.mrf.mxu0
    %v1289 = vadd.f32 %v1147, %v1288
    %v1290 = vpop.f32.mrf.mxu0
    %v1291 = vadd.f32 %v1147, %v1290
    %1292 = vmatmul.bf16.gmra.mxu0 %v1207
    %v1293 = vpop.f32.mrf.mxu0
    %v1294 = vadd.f32 %v1147, %v1293
    %v1295 = vpop.f32.mrf.mxu0
    %v1296 = vadd.f32 %v1147, %v1295
    %1297 = vdwg.mxu0
    %v1298 = vsel %vm887, %v1219, -inf
    %v1299 = vrot.slane %v1298, 4
    %v1300 = vmax.f32 %v1298, %v1299
    %v1301 = vrot.slane %v1300, 2
    %v1302 = vmax.f32 %v1300, %v1301
    %v1303 = vrot.slane %v1302, 1
    %v1304 = vmax.f32 %v1302, %v1303
    %v1305 = vsel %vm887, %v1221, -inf
    %v1306 = vrot.slane %v1305, 4
    %v1307 = vmax.f32 %v1305, %v1306
    %v1308 = vrot.slane %v1307, 2
    %v1309 = vmax.f32 %v1307, %v1308
    %v1310 = vrot.slane %v1309, 1
    %v1311 = vmax.f32 %v1309, %v1310
    %v1312 = vsel %vm887, %v1224, -inf
    %v1313 = vrot.slane %v1312, 4
    %v1314 = vmax.f32 %v1312, %v1313
    %v1315 = vrot.slane %v1314, 2
    %v1316 = vmax.f32 %v1314, %v1315
    %v1317 = vrot.slane %v1316, 1
    %v1318 = vmax.f32 %v1316, %v1317
    %v1319 = vsel %vm887, %v1226, -inf
    %v1320 = vrot.slane %v1319, 4
    %v1321 = vmax.f32 %v1319, %v1320
    %v1322 = vrot.slane %v1321, 2
    %v1323 = vmax.f32 %v1321, %v1322
    %v1324 = vrot.slane %v1323, 1
    %v1325 = vmax.f32 %v1323, %v1324
    %v1326 = vsel %vm887, %v1229, -inf
    %v1327 = vrot.slane %v1326, 4
    %v1328 = vmax.f32 %v1326, %v1327
    %v1329 = vrot.slane %v1328, 2
    %v1330 = vmax.f32 %v1328, %v1329
    %v1331 = vrot.slane %v1330, 1
    %v1332 = vmax.f32 %v1330, %v1331
    %v1333 = vsel %vm887, %v1231, -inf
    %v1334 = vrot.slane %v1333, 4
    %v1335 = vmax.f32 %v1333, %v1334
    %v1336 = vrot.slane %v1335, 2
    %v1337 = vmax.f32 %v1335, %v1336
    %v1338 = vrot.slane %v1337, 1
    %v1339 = vmax.f32 %v1337, %v1338
    %v1340 = vsel %vm887, %v1234, -inf
    %v1341 = vrot.slane %v1340, 4
    %v1342 = vmax.f32 %v1340, %v1341
    %v1343 = vrot.slane %v1342, 2
    %v1344 = vmax.f32 %v1342, %v1343
    %v1345 = vrot.slane %v1344, 1
    %v1346 = vmax.f32 %v1344, %v1345
    %v1347 = vsel %vm887, %v1236, -inf
    %v1348 = vrot.slane %v1347, 4
    %v1349 = vmax.f32 %v1347, %v1348
    %v1350 = vrot.slane %v1349, 2
    %v1351 = vmax.f32 %v1349, %v1350
    %v1352 = vrot.slane %v1351, 1
    %v1353 = vmax.f32 %v1351, %v1352
    %v1354 = vsel %vm887, %v1239, -inf
    %v1355 = vrot.slane %v1354, 4
    %v1356 = vmax.f32 %v1354, %v1355
    %v1357 = vrot.slane %v1356, 2
    %v1358 = vmax.f32 %v1356, %v1357
    %v1359 = vrot.slane %v1358, 1
    %v1360 = vmax.f32 %v1358, %v1359
    %v1361 = vsel %vm887, %v1241, -inf
    %v1362 = vrot.slane %v1361, 4
    %v1363 = vmax.f32 %v1361, %v1362
    %v1364 = vrot.slane %v1363, 2
    %v1365 = vmax.f32 %v1363, %v1364
    %v1366 = vrot.slane %v1365, 1
    %v1367 = vmax.f32 %v1365, %v1366
    %v1368 = vsel %vm887, %v1244, -inf
    %v1369 = vrot.slane %v1368, 4
    %v1370 = vmax.f32 %v1368, %v1369
    %v1371 = vrot.slane %v1370, 2
    %v1372 = vmax.f32 %v1370, %v1371
    %v1373 = vrot.slane %v1372, 1
    %v1374 = vmax.f32 %v1372, %v1373
    %v1375 = vsel %vm887, %v1246, -inf
    %v1376 = vrot.slane %v1375, 4
    %v1377 = vmax.f32 %v1375, %v1376
    %v1378 = vrot.slane %v1377, 2
    %v1379 = vmax.f32 %v1377, %v1378
    %v1380 = vrot.slane %v1379, 1
    %v1381 = vmax.f32 %v1379, %v1380
    %v1382 = vsel %vm887, %v1249, -inf
    %v1383 = vrot.slane %v1382, 4
    %v1384 = vmax.f32 %v1382, %v1383
    %v1385 = vrot.slane %v1384, 2
    %v1386 = vmax.f32 %v1384, %v1385
    %v1387 = vrot.slane %v1386, 1
    %v1388 = vmax.f32 %v1386, %v1387
    %v1389 = vsel %vm887, %v1251, -inf
    %v1390 = vrot.slane %v1389, 4
    %v1391 = vmax.f32 %v1389, %v1390
    %v1392 = vrot.slane %v1391, 2
    %v1393 = vmax.f32 %v1391, %v1392
    %v1394 = vrot.slane %v1393, 1
    %v1395 = vmax.f32 %v1393, %v1394
    %v1396 = vsel %vm887, %v1254, -inf
    %v1397 = vrot.slane %v1396, 4
    %v1398 = vmax.f32 %v1396, %v1397
    %v1399 = vrot.slane %v1398, 2
    %v1400 = vmax.f32 %v1398, %v1399
    %v1401 = vrot.slane %v1400, 1
    %v1402 = vmax.f32 %v1400, %v1401
    %v1403 = vsel %vm887, %v1256, -inf
    %v1404 = vrot.slane %v1403, 4
    %v1405 = vmax.f32 %v1403, %v1404
    %v1406 = vrot.slane %v1405, 2
    %v1407 = vmax.f32 %v1405, %v1406
    %v1408 = vrot.slane %v1407, 1
    %v1409 = vmax.f32 %v1407, %v1408
    %v1410 = vsel %vm887, %v1259, -inf
    %v1411 = vrot.slane %v1410, 4
    %v1412 = vmax.f32 %v1410, %v1411
    %v1413 = vrot.slane %v1412, 2
    %v1414 = vmax.f32 %v1412, %v1413
    %v1415 = vrot.slane %v1414, 1
    %v1416 = vmax.f32 %v1414, %v1415
    %v1417 = vsel %vm887, %v1261, -inf
    %v1418 = vrot.slane %v1417, 4
    %v1419 = vmax.f32 %v1417, %v1418
    %v1420 = vrot.slane %v1419, 2
    %v1421 = vmax.f32 %v1419, %v1420
    %v1422 = vrot.slane %v1421, 1
    %v1423 = vmax.f32 %v1421, %v1422
    %v1424 = vsel %vm887, %v1264, -inf
    %v1425 = vrot.slane %v1424, 4
    %v1426 = vmax.f32 %v1424, %v1425
    %v1427 = vrot.slane %v1426, 2
    %v1428 = vmax.f32 %v1426, %v1427
    %v1429 = vrot.slane %v1428, 1
    %v1430 = vmax.f32 %v1428, %v1429
    %v1431 = vsel %vm887, %v1266, -inf
    %v1432 = vrot.slane %v1431, 4
    %v1433 = vmax.f32 %v1431, %v1432
    %v1434 = vrot.slane %v1433, 2
    %v1435 = vmax.f32 %v1433, %v1434
    %v1436 = vrot.slane %v1435, 1
    %v1437 = vmax.f32 %v1435, %v1436
    %v1438 = vsel %vm887, %v1269, -inf
    %v1439 = vrot.slane %v1438, 4
    %v1440 = vmax.f32 %v1438, %v1439
    %v1441 = vrot.slane %v1440, 2
    %v1442 = vmax.f32 %v1440, %v1441
    %v1443 = vrot.slane %v1442, 1
    %v1444 = vmax.f32 %v1442, %v1443
    %v1445 = vsel %vm887, %v1271, -inf
    %v1446 = vrot.slane %v1445, 4
    %v1447 = vmax.f32 %v1445, %v1446
    %v1448 = vrot.slane %v1447, 2
    %v1449 = vmax.f32 %v1447, %v1448
    %v1450 = vrot.slane %v1449, 1
    %v1451 = vmax.f32 %v1449, %v1450
    %v1452 = vsel %vm887, %v1274, -inf
    %v1453 = vrot.slane %v1452, 4
    %v1454 = vmax.f32 %v1452, %v1453
    %v1455 = vrot.slane %v1454, 2
    %v1456 = vmax.f32 %v1454, %v1455
    %v1457 = vrot.slane %v1456, 1
    %v1458 = vmax.f32 %v1456, %v1457
    %v1459 = vsel %vm887, %v1276, -inf
    %v1460 = vrot.slane %v1459, 4
    %v1461 = vmax.f32 %v1459, %v1460
    %v1462 = vrot.slane %v1461, 2
    %v1463 = vmax.f32 %v1461, %v1462
    %v1464 = vrot.slane %v1463, 1
    %v1465 = vmax.f32 %v1463, %v1464
    %v1466 = vsel %vm887, %v1279, -inf
    %v1467 = vrot.slane %v1466, 4
    %v1468 = vmax.f32 %v1466, %v1467
    %v1469 = vrot.slane %v1468, 2
    %v1470 = vmax.f32 %v1468, %v1469
    %v1471 = vrot.slane %v1470, 1
    %v1472 = vmax.f32 %v1470, %v1471
    %v1473 = vsel %vm887, %v1281, -inf
    %v1474 = vrot.slane %v1473, 4
    %v1475 = vmax.f32 %v1473, %v1474
    %v1476 = vrot.slane %v1475, 2
    %v1477 = vmax.f32 %v1475, %v1476
    %v1478 = vrot.slane %v1477, 1
    %v1479 = vmax.f32 %v1477, %v1478
    %v1480 = vsel %vm887, %v1284, -inf
    %v1481 = vrot.slane %v1480, 4
    %v1482 = vmax.f32 %v1480, %v1481
    %v1483 = vrot.slane %v1482, 2
    %v1484 = vmax.f32 %v1482, %v1483
    %v1485 = vrot.slane %v1484, 1
    %v1486 = vmax.f32 %v1484, %v1485
    %v1487 = vsel %vm887, %v1286, -inf
    %v1488 = vrot.slane %v1487, 4
    %v1489 = vmax.f32 %v1487, %v1488
    %v1490 = vrot.slane %v1489, 2
    %v1491 = vmax.f32 %v1489, %v1490
    %v1492 = vrot.slane %v1491, 1
    %v1493 = vmax.f32 %v1491, %v1492
    %v1494 = vsel %vm887, %v1289, -inf
    %v1495 = vrot.slane %v1494, 4
    %v1496 = vmax.f32 %v1494, %v1495
    %v1497 = vrot.slane %v1496, 2
    %v1498 = vmax.f32 %v1496, %v1497
    %v1499 = vrot.slane %v1498, 1
    %v1500 = vmax.f32 %v1498, %v1499
    %v1501 = vsel %vm887, %v1291, -inf
    %v1502 = vrot.slane %v1501, 4
    %v1503 = vmax.f32 %v1501, %v1502
    %v1504 = vrot.slane %v1503, 2
    %v1505 = vmax.f32 %v1503, %v1504
    %v1506 = vrot.slane %v1505, 1
    %v1507 = vmax.f32 %v1505, %v1506
    %v1508 = vsel %vm887, %v1294, -inf
    %v1509 = vrot.slane %v1508, 4
    %v1510 = vmax.f32 %v1508, %v1509
    %v1511 = vrot.slane %v1510, 2
    %v1512 = vmax.f32 %v1510, %v1511
    %v1513 = vrot.slane %v1512, 1
    %v1514 = vmax.f32 %v1512, %v1513
    %v1515 = vsel %vm887, %v1296, -inf
    %v1516 = vrot.slane %v1515, 4
    %v1517 = vmax.f32 %v1515, %v1516
    %v1518 = vrot.slane %v1517, 2
    %v1519 = vmax.f32 %v1517, %v1518
    %v1520 = vrot.slane %v1519, 1
    %v1521 = vmax.f32 %v1519, %v1520
    %v1522 = vsub.f32 %v1219, %v1304
    %v1523 = vsub.f32 %v1221, %v1311
    %v1524 = vsub.f32 %v1224, %v1318
    %v1525 = vsub.f32 %v1226, %v1325
    %v1526 = vsub.f32 %v1229, %v1332
    %v1527 = vsub.f32 %v1231, %v1339
    %v1528 = vsub.f32 %v1234, %v1346
    %v1529 = vsub.f32 %v1236, %v1353
    %v1530 = vsub.f32 %v1239, %v1360
    %v1531 = vsub.f32 %v1241, %v1367
    %v1532 = vsub.f32 %v1244, %v1374
    %v1533 = vsub.f32 %v1246, %v1381
    %v1534 = vsub.f32 %v1249, %v1388
    %v1535 = vsub.f32 %v1251, %v1395
    %v1536 = vsub.f32 %v1254, %v1402
    %v1537 = vsub.f32 %v1256, %v1409
    %v1538 = vsub.f32 %v1259, %v1416
    %v1539 = vsub.f32 %v1261, %v1423
    %v1540 = vsub.f32 %v1264, %v1430
    %v1541 = vsub.f32 %v1266, %v1437
    %v1542 = vsub.f32 %v1269, %v1444
    %v1543 = vsub.f32 %v1271, %v1451
    %v1544 = vsub.f32 %v1274, %v1458
    %v1545 = vsub.f32 %v1276, %v1465
    %v1546 = vsub.f32 %v1279, %v1472
    %v1547 = vsub.f32 %v1281, %v1479
    %v1548 = vsub.f32 %v1284, %v1486
    %v1549 = vsub.f32 %v1286, %v1493
    %v1550 = vsub.f32 %v1289, %v1500
    %v1551 = vsub.f32 %v1291, %v1507
    %v1552 = vsub.f32 %v1294, %v1514
    %v1553 = vsub.f32 %v1296, %v1521
    %v1554 = vmul.f32 %v1522, 1.442695
    %v1555 = vpow.pop %v1554
    %v1556 = vmul.f32 %v1523, 1.442695
    %v1557 = vpow.pop %v1556
    %v1558 = vmul.f32 %v1524, 1.442695
    %v1559 = vpow.pop %v1558
    %v1560 = vmul.f32 %v1525, 1.442695
    %v1561 = vpow.pop %v1560
    %v1562 = vmul.f32 %v1526, 1.442695
    %v1563 = vpow.pop %v1562
    %v1564 = vmul.f32 %v1527, 1.442695
    %v1565 = vpow.pop %v1564
    %v1566 = vmul.f32 %v1528, 1.442695
    %v1567 = vpow.pop %v1566
    %v1568 = vmul.f32 %v1529, 1.442695
    %v1569 = vpow.pop %v1568
    %v1570 = vmul.f32 %v1530, 1.442695
    %v1571 = vpow.pop %v1570
    %v1572 = vmul.f32 %v1531, 1.442695
    %v1573 = vpow.pop %v1572
    %v1574 = vmul.f32 %v1532, 1.442695
    %v1575 = vpow.pop %v1574
    %v1576 = vmul.f32 %v1533, 1.442695
    %v1577 = vpow.pop %v1576
    %v1578 = vmul.f32 %v1534, 1.442695
    %v1579 = vpow.pop %v1578
    %v1580 = vmul.f32 %v1535, 1.442695
    %v1581 = vpow.pop %v1580
    %v1582 = vmul.f32 %v1536, 1.442695
    %v1583 = vpow.pop %v1582
    %v1584 = vmul.f32 %v1537, 1.442695
    %v1585 = vpow.pop %v1584
    %v1586 = vmul.f32 %v1538, 1.442695
    %v1587 = vpow.pop %v1586
    %v1588 = vmul.f32 %v1539, 1.442695
    %v1589 = vpow.pop %v1588
    %v1590 = vmul.f32 %v1540, 1.442695
    %v1591 = vpow.pop %v1590
    %v1592 = vmul.f32 %v1541, 1.442695
    %v1593 = vpow.pop %v1592
    %v1594 = vmul.f32 %v1542, 1.442695
    %v1595 = vpow.pop %v1594
    %v1596 = vmul.f32 %v1543, 1.442695
    %v1597 = vpow.pop %v1596
    %v1598 = vmul.f32 %v1544, 1.442695
    %v1599 = vpow.pop %v1598
    %v1600 = vmul.f32 %v1545, 1.442695
    %v1601 = vpow.pop %v1600
    %v1602 = vmul.f32 %v1546, 1.442695
    %v1603 = vpow.pop %v1602
    %v1604 = vmul.f32 %v1547, 1.442695
    %v1605 = vpow.pop %v1604
    %v1606 = vmul.f32 %v1548, 1.442695
    %v1607 = vpow.pop %v1606
    %v1608 = vmul.f32 %v1549, 1.442695
    %v1609 = vpow.pop %v1608
    %v1610 = vmul.f32 %v1550, 1.442695
    %v1611 = vpow.pop %v1610
    %v1612 = vmul.f32 %v1551, 1.442695
    %v1613 = vpow.pop %v1612
    %v1614 = vmul.f32 %v1552, 1.442695
    %v1615 = vpow.pop %v1614
    %v1616 = vmul.f32 %v1553, 1.442695
    %v1617 = vpow.pop %v1616
    %v1618 = vsel %vm887, %v1555, 0.0
    %v1619 = vrot.slane %v1618, 4
    %v1620 = vadd.f32 %v1618, %v1619
    %v1621 = vrot.slane %v1620, 2
    %v1622 = vadd.f32 %v1620, %v1621
    %v1623 = vrot.slane %v1622, 1
    %v1624 = vadd.f32 %v1622, %v1623
    %v1625 = vsel %vm887, %v1557, 0.0
    %v1626 = vrot.slane %v1625, 4
    %v1627 = vadd.f32 %v1625, %v1626
    %v1628 = vrot.slane %v1627, 2
    %v1629 = vadd.f32 %v1627, %v1628
    %v1630 = vrot.slane %v1629, 1
    %v1631 = vadd.f32 %v1629, %v1630
    %v1632 = vsel %vm887, %v1559, 0.0
    %v1633 = vrot.slane %v1632, 4
    %v1634 = vadd.f32 %v1632, %v1633
    %v1635 = vrot.slane %v1634, 2
    %v1636 = vadd.f32 %v1634, %v1635
    %v1637 = vrot.slane %v1636, 1
    %v1638 = vadd.f32 %v1636, %v1637
    %v1639 = vsel %vm887, %v1561, 0.0
    %v1640 = vrot.slane %v1639, 4
    %v1641 = vadd.f32 %v1639, %v1640
    %v1642 = vrot.slane %v1641, 2
    %v1643 = vadd.f32 %v1641, %v1642
    %v1644 = vrot.slane %v1643, 1
    %v1645 = vadd.f32 %v1643, %v1644
    %v1646 = vsel %vm887, %v1563, 0.0
    %v1647 = vrot.slane %v1646, 4
    %v1648 = vadd.f32 %v1646, %v1647
    %v1649 = vrot.slane %v1648, 2
    %v1650 = vadd.f32 %v1648, %v1649
    %v1651 = vrot.slane %v1650, 1
    %v1652 = vadd.f32 %v1650, %v1651
    %v1653 = vsel %vm887, %v1565, 0.0
    %v1654 = vrot.slane %v1653, 4
    %v1655 = vadd.f32 %v1653, %v1654
    %v1656 = vrot.slane %v1655, 2
    %v1657 = vadd.f32 %v1655, %v1656
    %v1658 = vrot.slane %v1657, 1
    %v1659 = vadd.f32 %v1657, %v1658
    %v1660 = vsel %vm887, %v1567, 0.0
    %v1661 = vrot.slane %v1660, 4
    %v1662 = vadd.f32 %v1660, %v1661
    %v1663 = vrot.slane %v1662, 2
    %v1664 = vadd.f32 %v1662, %v1663
    %v1665 = vrot.slane %v1664, 1
    %v1666 = vadd.f32 %v1664, %v1665
    %v1667 = vsel %vm887, %v1569, 0.0
    %v1668 = vrot.slane %v1667, 4
    %v1669 = vadd.f32 %v1667, %v1668
    %v1670 = vrot.slane %v1669, 2
    %v1671 = vadd.f32 %v1669, %v1670
    %v1672 = vrot.slane %v1671, 1
    %v1673 = vadd.f32 %v1671, %v1672
    %v1674 = vsel %vm887, %v1571, 0.0
    %v1675 = vrot.slane %v1674, 4
    %v1676 = vadd.f32 %v1674, %v1675
    %v1677 = vrot.slane %v1676, 2
    %v1678 = vadd.f32 %v1676, %v1677
    %v1679 = vrot.slane %v1678, 1
    %v1680 = vadd.f32 %v1678, %v1679
    %v1681 = vsel %vm887, %v1573, 0.0
    %v1682 = vrot.slane %v1681, 4
    %v1683 = vadd.f32 %v1681, %v1682
    %v1684 = vrot.slane %v1683, 2
    %v1685 = vadd.f32 %v1683, %v1684
    %v1686 = vrot.slane %v1685, 1
    %v1687 = vadd.f32 %v1685, %v1686
    %v1688 = vsel %vm887, %v1575, 0.0
    %v1689 = vrot.slane %v1688, 4
    %v1690 = vadd.f32 %v1688, %v1689
    %v1691 = vrot.slane %v1690, 2
    %v1692 = vadd.f32 %v1690, %v1691
    %v1693 = vrot.slane %v1692, 1
    %v1694 = vadd.f32 %v1692, %v1693
    %v1695 = vsel %vm887, %v1577, 0.0
    %v1696 = vrot.slane %v1695, 4
    %v1697 = vadd.f32 %v1695, %v1696
    %v1698 = vrot.slane %v1697, 2
    %v1699 = vadd.f32 %v1697, %v1698
    %v1700 = vrot.slane %v1699, 1
    %v1701 = vadd.f32 %v1699, %v1700
    %v1702 = vsel %vm887, %v1579, 0.0
    %v1703 = vrot.slane %v1702, 4
    %v1704 = vadd.f32 %v1702, %v1703
    %v1705 = vrot.slane %v1704, 2
    %v1706 = vadd.f32 %v1704, %v1705
    %v1707 = vrot.slane %v1706, 1
    %v1708 = vadd.f32 %v1706, %v1707
    %v1709 = vsel %vm887, %v1581, 0.0
    %v1710 = vrot.slane %v1709, 4
    %v1711 = vadd.f32 %v1709, %v1710
    %v1712 = vrot.slane %v1711, 2
    %v1713 = vadd.f32 %v1711, %v1712
    %v1714 = vrot.slane %v1713, 1
    %v1715 = vadd.f32 %v1713, %v1714
    %v1716 = vsel %vm887, %v1583, 0.0
    %v1717 = vrot.slane %v1716, 4
    %v1718 = vadd.f32 %v1716, %v1717
    %v1719 = vrot.slane %v1718, 2
    %v1720 = vadd.f32 %v1718, %v1719
    %v1721 = vrot.slane %v1720, 1
    %v1722 = vadd.f32 %v1720, %v1721
    %v1723 = vsel %vm887, %v1585, 0.0
    %v1724 = vrot.slane %v1723, 4
    %v1725 = vadd.f32 %v1723, %v1724
    %v1726 = vrot.slane %v1725, 2
    %v1727 = vadd.f32 %v1725, %v1726
    %v1728 = vrot.slane %v1727, 1
    %v1729 = vadd.f32 %v1727, %v1728
    %v1730 = vsel %vm887, %v1587, 0.0
    %v1731 = vrot.slane %v1730, 4
    %v1732 = vadd.f32 %v1730, %v1731
    %v1733 = vrot.slane %v1732, 2
    %v1734 = vadd.f32 %v1732, %v1733
    %v1735 = vrot.slane %v1734, 1
    %v1736 = vadd.f32 %v1734, %v1735
    %v1737 = vsel %vm887, %v1589, 0.0
    %v1738 = vrot.slane %v1737, 4
    %v1739 = vadd.f32 %v1737, %v1738
    %v1740 = vrot.slane %v1739, 2
    %v1741 = vadd.f32 %v1739, %v1740
    %v1742 = vrot.slane %v1741, 1
    %v1743 = vadd.f32 %v1741, %v1742
    %v1744 = vsel %vm887, %v1591, 0.0
    %v1745 = vrot.slane %v1744, 4
    %v1746 = vadd.f32 %v1744, %v1745
    %v1747 = vrot.slane %v1746, 2
    %v1748 = vadd.f32 %v1746, %v1747
    %v1749 = vrot.slane %v1748, 1
    %v1750 = vadd.f32 %v1748, %v1749
    %v1751 = vsel %vm887, %v1593, 0.0
    %v1752 = vrot.slane %v1751, 4
    %v1753 = vadd.f32 %v1751, %v1752
    %v1754 = vrot.slane %v1753, 2
    %v1755 = vadd.f32 %v1753, %v1754
    %v1756 = vrot.slane %v1755, 1
    %v1757 = vadd.f32 %v1755, %v1756
    %v1758 = vsel %vm887, %v1595, 0.0
    %v1759 = vrot.slane %v1758, 4
    %v1760 = vadd.f32 %v1758, %v1759
    %v1761 = vrot.slane %v1760, 2
    %v1762 = vadd.f32 %v1760, %v1761
    %v1763 = vrot.slane %v1762, 1
    %v1764 = vadd.f32 %v1762, %v1763
    %v1765 = vsel %vm887, %v1597, 0.0
    %v1766 = vrot.slane %v1765, 4
    %v1767 = vadd.f32 %v1765, %v1766
    %v1768 = vrot.slane %v1767, 2
    %v1769 = vadd.f32 %v1767, %v1768
    %v1770 = vrot.slane %v1769, 1
    %v1771 = vadd.f32 %v1769, %v1770
    %v1772 = vsel %vm887, %v1599, 0.0
    %v1773 = vrot.slane %v1772, 4
    %v1774 = vadd.f32 %v1772, %v1773
    %v1775 = vrot.slane %v1774, 2
    %v1776 = vadd.f32 %v1774, %v1775
    %v1777 = vrot.slane %v1776, 1
    %v1778 = vadd.f32 %v1776, %v1777
    %v1779 = vsel %vm887, %v1601, 0.0
    %v1780 = vrot.slane %v1779, 4
    %v1781 = vadd.f32 %v1779, %v1780
    %v1782 = vrot.slane %v1781, 2
    %v1783 = vadd.f32 %v1781, %v1782
    %v1784 = vrot.slane %v1783, 1
    %v1785 = vadd.f32 %v1783, %v1784
    %v1786 = vsel %vm887, %v1603, 0.0
    %v1787 = vrot.slane %v1786, 4
    %v1788 = vadd.f32 %v1786, %v1787
    %v1789 = vrot.slane %v1788, 2
    %v1790 = vadd.f32 %v1788, %v1789
    %v1791 = vrot.slane %v1790, 1
    %v1792 = vadd.f32 %v1790, %v1791
    %v1793 = vsel %vm887, %v1605, 0.0
    %v1794 = vrot.slane %v1793, 4
    %v1795 = vadd.f32 %v1793, %v1794
    %v1796 = vrot.slane %v1795, 2
    %v1797 = vadd.f32 %v1795, %v1796
    %v1798 = vrot.slane %v1797, 1
    %v1799 = vadd.f32 %v1797, %v1798
    %v1800 = vsel %vm887, %v1607, 0.0
    %v1801 = vrot.slane %v1800, 4
    %v1802 = vadd.f32 %v1800, %v1801
    %v1803 = vrot.slane %v1802, 2
    %v1804 = vadd.f32 %v1802, %v1803
    %v1805 = vrot.slane %v1804, 1
    %v1806 = vadd.f32 %v1804, %v1805
    %v1807 = vsel %vm887, %v1609, 0.0
    %v1808 = vrot.slane %v1807, 4
    %v1809 = vadd.f32 %v1807, %v1808
    %v1810 = vrot.slane %v1809, 2
    %v1811 = vadd.f32 %v1809, %v1810
    %v1812 = vrot.slane %v1811, 1
    %v1813 = vadd.f32 %v1811, %v1812
    %v1814 = vsel %vm887, %v1611, 0.0
    %v1815 = vrot.slane %v1814, 4
    %v1816 = vadd.f32 %v1814, %v1815
    %v1817 = vrot.slane %v1816, 2
    %v1818 = vadd.f32 %v1816, %v1817
    %v1819 = vrot.slane %v1818, 1
    %v1820 = vadd.f32 %v1818, %v1819
    %v1821 = vsel %vm887, %v1613, 0.0
    %v1822 = vrot.slane %v1821, 4
    %v1823 = vadd.f32 %v1821, %v1822
    %v1824 = vrot.slane %v1823, 2
    %v1825 = vadd.f32 %v1823, %v1824
    %v1826 = vrot.slane %v1825, 1
    %v1827 = vadd.f32 %v1825, %v1826
    %v1828 = vsel %vm887, %v1615, 0.0
    %v1829 = vrot.slane %v1828, 4
    %v1830 = vadd.f32 %v1828, %v1829
    %v1831 = vrot.slane %v1830, 2
    %v1832 = vadd.f32 %v1830, %v1831
    %v1833 = vrot.slane %v1832, 1
    %v1834 = vadd.f32 %v1832, %v1833
    %v1835 = vsel %vm887, %v1617, 0.0
    %v1836 = vrot.slane %v1835, 4
    %v1837 = vadd.f32 %v1835, %v1836
    %v1838 = vrot.slane %v1837, 2
    %v1839 = vadd.f32 %v1837, %v1838
    %v1840 = vrot.slane %v1839, 1
    %v1841 = vadd.f32 %v1839, %v1840
    %v1842 = vrcp.pop %v1624
    %v1843 = vrcp.pop %v1631
    %v1844 = vrcp.pop %v1638
    %v1845 = vrcp.pop %v1645
    %v1846 = vrcp.pop %v1652
    %v1847 = vrcp.pop %v1659
    %v1848 = vrcp.pop %v1666
    %v1849 = vrcp.pop %v1673
    %v1850 = vrcp.pop %v1680
    %v1851 = vrcp.pop %v1687
    %v1852 = vrcp.pop %v1694
    %v1853 = vrcp.pop %v1701
    %v1854 = vrcp.pop %v1708
    %v1855 = vrcp.pop %v1715
    %v1856 = vrcp.pop %v1722
    %v1857 = vrcp.pop %v1729
    %v1858 = vrcp.pop %v1736
    %v1859 = vrcp.pop %v1743
    %v1860 = vrcp.pop %v1750
    %v1861 = vrcp.pop %v1757
    %v1862 = vrcp.pop %v1764
    %v1863 = vrcp.pop %v1771
    %v1864 = vrcp.pop %v1778
    %v1865 = vrcp.pop %v1785
    %v1866 = vrcp.pop %v1792
    %v1867 = vrcp.pop %v1799
    %v1868 = vrcp.pop %v1806
    %v1869 = vrcp.pop %v1813
    %v1870 = vrcp.pop %v1820
    %v1871 = vrcp.pop %v1827
    %v1872 = vrcp.pop %v1834
    %v1873 = vrcp.pop %v1841
    %v1874 = vmul.f32 %v1555, %v1842
    %v1875 = vmul.f32 %v1557, %v1843
    %v1876 = vmul.f32 %v1559, %v1844
    %v1877 = vmul.f32 %v1561, %v1845
    %v1878 = vmul.f32 %v1563, %v1846
    %v1879 = vmul.f32 %v1565, %v1847
    %v1880 = vmul.f32 %v1567, %v1848
    %v1881 = vmul.f32 %v1569, %v1849
    %v1882 = vmul.f32 %v1571, %v1850
    %v1883 = vmul.f32 %v1573, %v1851
    %v1884 = vmul.f32 %v1575, %v1852
    %v1885 = vmul.f32 %v1577, %v1853
    %v1886 = vmul.f32 %v1579, %v1854
    %v1887 = vmul.f32 %v1581, %v1855
    %v1888 = vmul.f32 %v1583, %v1856
    %v1889 = vmul.f32 %v1585, %v1857
    %v1890 = vmul.f32 %v1587, %v1858
    %v1891 = vmul.f32 %v1589, %v1859
    %v1892 = vmul.f32 %v1591, %v1860
    %v1893 = vmul.f32 %v1593, %v1861
    %v1894 = vmul.f32 %v1595, %v1862
    %v1895 = vmul.f32 %v1597, %v1863
    %v1896 = vmul.f32 %v1599, %v1864
    %v1897 = vmul.f32 %v1601, %v1865
    %v1898 = vmul.f32 %v1603, %v1866
    %v1899 = vmul.f32 %v1605, %v1867
    %v1900 = vmul.f32 %v1607, %v1868
    %v1901 = vmul.f32 %v1609, %v1869
    %v1902 = vmul.f32 %v1611, %v1870
    %v1903 = vmul.f32 %v1613, %v1871
    %v1904 = vmul.f32 %v1615, %v1872
    %v1905 = vmul.f32 %v1617, %v1873
    %v1906 = vld [vmem:[%s3] sm:$0xff]
    %v1907 = vld [vmem:[%s3 + $0x8] sm:$0xff]
    %v1908 = vld [vmem:[%s3 + $0x10] sm:$0xff]
    %v1909 = vld [vmem:[%s3 + $0x18] sm:$0xff]
    %v1910 = vld [vmem:[%s3 + $0x20] sm:$0xff]
    %v1911 = vld [vmem:[%s3 + $0x28] sm:$0xff]
    %v1912 = vld [vmem:[%s3 + $0x30] sm:$0xff]
    %v1913 = vld [vmem:[%s3 + $0x38] sm:$0xff]
    %v1914 = vld [vmem:[%s3 + $0x40] sm:$0xff]
    %v1915 = vld [vmem:[%s3 + $0x48] sm:$0xff]
    %v1916 = vld [vmem:[%s3 + $0x50] sm:$0xff]
    %v1917 = vld [vmem:[%s3 + $0x58] sm:$0xff]
    %v1918 = vld [vmem:[%s3 + $0x60] sm:$0xff]
    %v1919 = vld [vmem:[%s3 + $0x68] sm:$0xff]
    %v1920 = vld [vmem:[%s3 + $0x70] sm:$0xff]
    %v1921 = vld [vmem:[%s3 + $0x78] sm:$0xff]
    %v1922 = vld [vmem:[%s3 + $0x80] sm:$0xff]
    %v1923 = vld [vmem:[%s3 + $0x88] sm:$0xff]
    %v1924 = vld [vmem:[%s3 + $0x90] sm:$0xff]
    %v1925 = vld [vmem:[%s3 + $0x98] sm:$0xff]
    %v1926 = vld [vmem:[%s3 + $0xa0] sm:$0xff]
    %v1927 = vld [vmem:[%s3 + $0xa8] sm:$0xff]
    %v1928 = vld [vmem:[%s3 + $0xb0] sm:$0xff]
    %v1929 = vld [vmem:[%s3 + $0xb8] sm:$0xff]
    %v1930 = vld [vmem:[%s3 + $0xc0] sm:$0xff]
    %v1931 = vld [vmem:[%s3 + $0xc8] sm:$0xff]
    %v1932 = vld [vmem:[%s3 + $0xd0] sm:$0xff]
    %v1933 = vld [vmem:[%s3 + $0xd8] sm:$0xff]
    %v1934 = vld [vmem:[%s3 + $0xe0] sm:$0xff]
    %v1935 = vld [vmem:[%s3 + $0xe8] sm:$0xff]
    %v1936 = vld [vmem:[%s3 + $0xf0] sm:$0xff]
    %v1937 = vld [vmem:[%s3 + $0xf8] sm:$0xff]
    %v1938 = vadd.f32 %v1906, %v516
    %v1939 = vadd.f32 %v1907, %v518
    %v1940 = vadd.f32 %v1908, %v521
    %v1941 = vadd.f32 %v1909, %v523
    %v1942 = vadd.f32 %v1910, %v526
    %v1943 = vadd.f32 %v1911, %v528
    %v1944 = vadd.f32 %v1912, %v531
    %v1945 = vadd.f32 %v1913, %v533
    %v1946 = vadd.f32 %v1914, %v536
    %v1947 = vadd.f32 %v1915, %v538
    %v1948 = vadd.f32 %v1916, %v541
    %v1949 = vadd.f32 %v1917, %v543
    %v1950 = vadd.f32 %v1918, %v546
    %v1951 = vadd.f32 %v1919, %v548
    %v1952 = vadd.f32 %v1920, %v551
    %v1953 = vadd.f32 %v1921, %v553
    %v1954 = vadd.f32 %v1922, %v556
    %v1955 = vadd.f32 %v1923, %v558
    %v1956 = vadd.f32 %v1924, %v561
    %v1957 = vadd.f32 %v1925, %v563
    %v1958 = vadd.f32 %v1926, %v566
    %v1959 = vadd.f32 %v1927, %v568
    %v1960 = vadd.f32 %v1928, %v571
    %v1961 = vadd.f32 %v1929, %v573
    %v1962 = vadd.f32 %v1930, %v576
    %v1963 = vadd.f32 %v1931, %v578
    %v1964 = vadd.f32 %v1932, %v581
    %v1965 = vadd.f32 %v1933, %v583
    %v1966 = vadd.f32 %v1934, %v586
    %v1967 = vadd.f32 %v1935, %v588
    %v1968 = vadd.f32 %v1936, %v591
    %v1969 = vadd.f32 %v1937, %v593
    %v1970 = vmul.f32 %v1938, %v1874
    %v1971 = vmul.f32 %v1939, %v1875
    %v1972 = vmul.f32 %v1940, %v1876
    %v1973 = vmul.f32 %v1941, %v1877
    %v1974 = vmul.f32 %v1942, %v1878
    %v1975 = vmul.f32 %v1943, %v1879
    %v1976 = vmul.f32 %v1944, %v1880
    %v1977 = vmul.f32 %v1945, %v1881
    %v1978 = vmul.f32 %v1946, %v1882
    %v1979 = vmul.f32 %v1947, %v1883
    %v1980 = vmul.f32 %v1948, %v1884
    %v1981 = vmul.f32 %v1949, %v1885
    %v1982 = vmul.f32 %v1950, %v1886
    %v1983 = vmul.f32 %v1951, %v1887
    %v1984 = vmul.f32 %v1952, %v1888
    %v1985 = vmul.f32 %v1953, %v1889
    %v1986 = vmul.f32 %v1954, %v1890
    %v1987 = vmul.f32 %v1955, %v1891
    %v1988 = vmul.f32 %v1956, %v1892
    %v1989 = vmul.f32 %v1957, %v1893
    %v1990 = vmul.f32 %v1958, %v1894
    %v1991 = vmul.f32 %v1959, %v1895
    %v1992 = vmul.f32 %v1960, %v1896
    %v1993 = vmul.f32 %v1961, %v1897
    %v1994 = vmul.f32 %v1962, %v1898
    %v1995 = vmul.f32 %v1963, %v1899
    %v1996 = vmul.f32 %v1964, %v1900
    %v1997 = vmul.f32 %v1965, %v1901
    %v1998 = vmul.f32 %v1966, %v1902
    %v1999 = vmul.f32 %v1967, %v1903
    %v2000 = vmul.f32 %v1968, %v1904
    %v2001 = vmul.f32 %v1969, %v1905
    %v2002 = vsel %vm887, %v1970, 0.0
    %v2003 = vrot.slane %v2002, 4
    %v2004 = vadd.f32 %v2002, %v2003
    %v2005 = vrot.slane %v2004, 2
    %v2006 = vadd.f32 %v2004, %v2005
    %v2007 = vrot.slane %v2006, 1
    %v2008 = vadd.f32 %v2006, %v2007
    %v2009 = vsel %vm887, %v1971, 0.0
    %v2010 = vrot.slane %v2009, 4
    %v2011 = vadd.f32 %v2009, %v2010
    %v2012 = vrot.slane %v2011, 2
    %v2013 = vadd.f32 %v2011, %v2012
    %v2014 = vrot.slane %v2013, 1
    %v2015 = vadd.f32 %v2013, %v2014
    %v2016 = vsel %vm887, %v1972, 0.0
    %v2017 = vrot.slane %v2016, 4
    %v2018 = vadd.f32 %v2016, %v2017
    %v2019 = vrot.slane %v2018, 2
    %v2020 = vadd.f32 %v2018, %v2019
    %v2021 = vrot.slane %v2020, 1
    %v2022 = vadd.f32 %v2020, %v2021
    %v2023 = vsel %vm887, %v1973, 0.0
    %v2024 = vrot.slane %v2023, 4
    %v2025 = vadd.f32 %v2023, %v2024
    %v2026 = vrot.slane %v2025, 2
    %v2027 = vadd.f32 %v2025, %v2026
    %v2028 = vrot.slane %v2027, 1
    %v2029 = vadd.f32 %v2027, %v2028
    %v2030 = vsel %vm887, %v1974, 0.0
    %v2031 = vrot.slane %v2030, 4
    %v2032 = vadd.f32 %v2030, %v2031
    %v2033 = vrot.slane %v2032, 2
    %v2034 = vadd.f32 %v2032, %v2033
    %v2035 = vrot.slane %v2034, 1
    %v2036 = vadd.f32 %v2034, %v2035
    %v2037 = vsel %vm887, %v1975, 0.0
    %v2038 = vrot.slane %v2037, 4
    %v2039 = vadd.f32 %v2037, %v2038
    %v2040 = vrot.slane %v2039, 2
    %v2041 = vadd.f32 %v2039, %v2040
    %v2042 = vrot.slane %v2041, 1
    %v2043 = vadd.f32 %v2041, %v2042
    %v2044 = vsel %vm887, %v1976, 0.0
    %v2045 = vrot.slane %v2044, 4
    %v2046 = vadd.f32 %v2044, %v2045
    %v2047 = vrot.slane %v2046, 2
    %v2048 = vadd.f32 %v2046, %v2047
    %v2049 = vrot.slane %v2048, 1
    %v2050 = vadd.f32 %v2048, %v2049
    %v2051 = vsel %vm887, %v1977, 0.0
    %v2052 = vrot.slane %v2051, 4
    %v2053 = vadd.f32 %v2051, %v2052
    %v2054 = vrot.slane %v2053, 2
    %v2055 = vadd.f32 %v2053, %v2054
    %v2056 = vrot.slane %v2055, 1
    %v2057 = vadd.f32 %v2055, %v2056
    %v2058 = vsel %vm887, %v1978, 0.0
    %v2059 = vrot.slane %v2058, 4
    %v2060 = vadd.f32 %v2058, %v2059
    %v2061 = vrot.slane %v2060, 2
    %v2062 = vadd.f32 %v2060, %v2061
    %v2063 = vrot.slane %v2062, 1
    %v2064 = vadd.f32 %v2062, %v2063
    %v2065 = vsel %vm887, %v1979, 0.0
    %v2066 = vrot.slane %v2065, 4
    %v2067 = vadd.f32 %v2065, %v2066
    %v2068 = vrot.slane %v2067, 2
    %v2069 = vadd.f32 %v2067, %v2068
    %v2070 = vrot.slane %v2069, 1
    %v2071 = vadd.f32 %v2069, %v2070
    %v2072 = vsel %vm887, %v1980, 0.0
    %v2073 = vrot.slane %v2072, 4
    %v2074 = vadd.f32 %v2072, %v2073
    %v2075 = vrot.slane %v2074, 2
    %v2076 = vadd.f32 %v2074, %v2075
    %v2077 = vrot.slane %v2076, 1
    %v2078 = vadd.f32 %v2076, %v2077
    %v2079 = vsel %vm887, %v1981, 0.0
    %v2080 = vrot.slane %v2079, 4
    %v2081 = vadd.f32 %v2079, %v2080
    %v2082 = vrot.slane %v2081, 2
    %v2083 = vadd.f32 %v2081, %v2082
    %v2084 = vrot.slane %v2083, 1
    %v2085 = vadd.f32 %v2083, %v2084
    %v2086 = vsel %vm887, %v1982, 0.0
    %v2087 = vrot.slane %v2086, 4
    %v2088 = vadd.f32 %v2086, %v2087
    %v2089 = vrot.slane %v2088, 2
    %v2090 = vadd.f32 %v2088, %v2089
    %v2091 = vrot.slane %v2090, 1
    %v2092 = vadd.f32 %v2090, %v2091
    %v2093 = vsel %vm887, %v1983, 0.0
    %v2094 = vrot.slane %v2093, 4
    %v2095 = vadd.f32 %v2093, %v2094
    %v2096 = vrot.slane %v2095, 2
    %v2097 = vadd.f32 %v2095, %v2096
    %v2098 = vrot.slane %v2097, 1
    %v2099 = vadd.f32 %v2097, %v2098
    %v2100 = vsel %vm887, %v1984, 0.0
    %v2101 = vrot.slane %v2100, 4
    %v2102 = vadd.f32 %v2100, %v2101
    %v2103 = vrot.slane %v2102, 2
    %v2104 = vadd.f32 %v2102, %v2103
    %v2105 = vrot.slane %v2104, 1
    %v2106 = vadd.f32 %v2104, %v2105
    %v2107 = vsel %vm887, %v1985, 0.0
    %v2108 = vrot.slane %v2107, 4
    %v2109 = vadd.f32 %v2107, %v2108
    %v2110 = vrot.slane %v2109, 2
    %v2111 = vadd.f32 %v2109, %v2110
    %v2112 = vrot.slane %v2111, 1
    %v2113 = vadd.f32 %v2111, %v2112
    %v2114 = vsel %vm887, %v1986, 0.0
    %v2115 = vrot.slane %v2114, 4
    %v2116 = vadd.f32 %v2114, %v2115
    %v2117 = vrot.slane %v2116, 2
    %v2118 = vadd.f32 %v2116, %v2117
    %v2119 = vrot.slane %v2118, 1
    %v2120 = vadd.f32 %v2118, %v2119
    %v2121 = vsel %vm887, %v1987, 0.0
    %v2122 = vrot.slane %v2121, 4
    %v2123 = vadd.f32 %v2121, %v2122
    %v2124 = vrot.slane %v2123, 2
    %v2125 = vadd.f32 %v2123, %v2124
    %v2126 = vrot.slane %v2125, 1
    %v2127 = vadd.f32 %v2125, %v2126
    %v2128 = vsel %vm887, %v1988, 0.0
    %v2129 = vrot.slane %v2128, 4
    %v2130 = vadd.f32 %v2128, %v2129
    %v2131 = vrot.slane %v2130, 2
    %v2132 = vadd.f32 %v2130, %v2131
    %v2133 = vrot.slane %v2132, 1
    %v2134 = vadd.f32 %v2132, %v2133
    %v2135 = vsel %vm887, %v1989, 0.0
    %v2136 = vrot.slane %v2135, 4
    %v2137 = vadd.f32 %v2135, %v2136
    %v2138 = vrot.slane %v2137, 2
    %v2139 = vadd.f32 %v2137, %v2138
    %v2140 = vrot.slane %v2139, 1
    %v2141 = vadd.f32 %v2139, %v2140
    %v2142 = vsel %vm887, %v1990, 0.0
    %v2143 = vrot.slane %v2142, 4
    %v2144 = vadd.f32 %v2142, %v2143
    %v2145 = vrot.slane %v2144, 2
    %v2146 = vadd.f32 %v2144, %v2145
    %v2147 = vrot.slane %v2146, 1
    %v2148 = vadd.f32 %v2146, %v2147
    %v2149 = vsel %vm887, %v1991, 0.0
    %v2150 = vrot.slane %v2149, 4
    %v2151 = vadd.f32 %v2149, %v2150
    %v2152 = vrot.slane %v2151, 2
    %v2153 = vadd.f32 %v2151, %v2152
    %v2154 = vrot.slane %v2153, 1
    %v2155 = vadd.f32 %v2153, %v2154
    %v2156 = vsel %vm887, %v1992, 0.0
    %v2157 = vrot.slane %v2156, 4
    %v2158 = vadd.f32 %v2156, %v2157
    %v2159 = vrot.slane %v2158, 2
    %v2160 = vadd.f32 %v2158, %v2159
    %v2161 = vrot.slane %v2160, 1
    %v2162 = vadd.f32 %v2160, %v2161
    %v2163 = vsel %vm887, %v1993, 0.0
    %v2164 = vrot.slane %v2163, 4
    %v2165 = vadd.f32 %v2163, %v2164
    %v2166 = vrot.slane %v2165, 2
    %v2167 = vadd.f32 %v2165, %v2166
    %v2168 = vrot.slane %v2167, 1
    %v2169 = vadd.f32 %v2167, %v2168
    %v2170 = vsel %vm887, %v1994, 0.0
    %v2171 = vrot.slane %v2170, 4
    %v2172 = vadd.f32 %v2170, %v2171
    %v2173 = vrot.slane %v2172, 2
    %v2174 = vadd.f32 %v2172, %v2173
    %v2175 = vrot.slane %v2174, 1
    %v2176 = vadd.f32 %v2174, %v2175
    %v2177 = vsel %vm887, %v1995, 0.0
    %v2178 = vrot.slane %v2177, 4
    %v2179 = vadd.f32 %v2177, %v2178
    %v2180 = vrot.slane %v2179, 2
    %v2181 = vadd.f32 %v2179, %v2180
    %v2182 = vrot.slane %v2181, 1
    %v2183 = vadd.f32 %v2181, %v2182
    %v2184 = vsel %vm887, %v1996, 0.0
    %v2185 = vrot.slane %v2184, 4
    %v2186 = vadd.f32 %v2184, %v2185
    %v2187 = vrot.slane %v2186, 2
    %v2188 = vadd.f32 %v2186, %v2187
    %v2189 = vrot.slane %v2188, 1
    %v2190 = vadd.f32 %v2188, %v2189
    %v2191 = vsel %vm887, %v1997, 0.0
    %v2192 = vrot.slane %v2191, 4
    %v2193 = vadd.f32 %v2191, %v2192
    %v2194 = vrot.slane %v2193, 2
    %v2195 = vadd.f32 %v2193, %v2194
    %v2196 = vrot.slane %v2195, 1
    %v2197 = vadd.f32 %v2195, %v2196
    %v2198 = vsel %vm887, %v1998, 0.0
    %v2199 = vrot.slane %v2198, 4
    %v2200 = vadd.f32 %v2198, %v2199
    %v2201 = vrot.slane %v2200, 2
    %v2202 = vadd.f32 %v2200, %v2201
    %v2203 = vrot.slane %v2202, 1
    %v2204 = vadd.f32 %v2202, %v2203
    %v2205 = vsel %vm887, %v1999, 0.0
    %v2206 = vrot.slane %v2205, 4
    %v2207 = vadd.f32 %v2205, %v2206
    %v2208 = vrot.slane %v2207, 2
    %v2209 = vadd.f32 %v2207, %v2208
    %v2210 = vrot.slane %v2209, 1
    %v2211 = vadd.f32 %v2209, %v2210
    %v2212 = vsel %vm887, %v2000, 0.0
    %v2213 = vrot.slane %v2212, 4
    %v2214 = vadd.f32 %v2212, %v2213
    %v2215 = vrot.slane %v2214, 2
    %v2216 = vadd.f32 %v2214, %v2215
    %v2217 = vrot.slane %v2216, 1
    %v2218 = vadd.f32 %v2216, %v2217
    %v2219 = vsel %vm887, %v2001, 0.0
    %v2220 = vrot.slane %v2219, 4
    %v2221 = vadd.f32 %v2219, %v2220
    %v2222 = vrot.slane %v2221, 2
    %v2223 = vadd.f32 %v2221, %v2222
    %v2224 = vrot.slane %v2223, 1
    %v2225 = vadd.f32 %v2223, %v2224
    %v2226 = vpack.c.bf16 %v2008, %v2008
    %v2227 = vpack.c.bf16 %v2015, %v2015
    %v2228 = vpack.c.bf16 %v2022, %v2022
    %v2229 = vpack.c.bf16 %v2029, %v2029
    %v2230 = vpack.c.bf16 %v2036, %v2036
    %v2231 = vpack.c.bf16 %v2043, %v2043
    %v2232 = vpack.c.bf16 %v2050, %v2050
    %v2233 = vpack.c.bf16 %v2057, %v2057
    %v2234 = vpack.c.bf16 %v2064, %v2064
    %v2235 = vpack.c.bf16 %v2071, %v2071
    %v2236 = vpack.c.bf16 %v2078, %v2078
    %v2237 = vpack.c.bf16 %v2085, %v2085
    %v2238 = vpack.c.bf16 %v2092, %v2092
    %v2239 = vpack.c.bf16 %v2099, %v2099
    %v2240 = vpack.c.bf16 %v2106, %v2106
    %v2241 = vpack.c.bf16 %v2113, %v2113
    %v2242 = vpack.c.bf16 %v2120, %v2120
    %v2243 = vpack.c.bf16 %v2127, %v2127
    %v2244 = vpack.c.bf16 %v2134, %v2134
    %v2245 = vpack.c.bf16 %v2141, %v2141
    %v2246 = vpack.c.bf16 %v2148, %v2148
    %v2247 = vpack.c.bf16 %v2155, %v2155
    %v2248 = vpack.c.bf16 %v2162, %v2162
    %v2249 = vpack.c.bf16 %v2169, %v2169
    %v2250 = vpack.c.bf16 %v2176, %v2176
    %v2251 = vpack.c.bf16 %v2183, %v2183
    %v2252 = vpack.c.bf16 %v2190, %v2190
    %v2253 = vpack.c.bf16 %v2197, %v2197
    %v2254 = vpack.c.bf16 %v2204, %v2204
    %v2255 = vpack.c.bf16 %v2211, %v2211
    %v2256 = vpack.c.bf16 %v2218, %v2218
    %v2257 = vpack.c.bf16 %v2225, %v2225
    %v2258 = vld [vmem:[%s15] sm:$0xf]
    %v2259 = vld [vmem:[%s15 + $0x4] sm:$0xf]
    %v2260 = vld [vmem:[%s15 + $0x8] sm:$0xf]
    %v2261 = vld [vmem:[%s15 + $0xc] sm:$0xf]
    %v2262 = vld [vmem:[%s16] sm:$0x1]
    %v2264 = vperm.slane %v2262, 0
    %v2298 = vunpack.c.l.b16 %v2226
    %v2299 = vunpack.c.l.b16 %v2227
    %v2300 = vunpack.c.l.b16 %v2228
    %v2301 = vunpack.c.l.b16 %v2229
    %v2302 = vunpack.c.l.b16 %v2230
    %v2303 = vunpack.c.l.b16 %v2231
    %v2304 = vunpack.c.l.b16 %v2232
    %v2305 = vunpack.c.l.b16 %v2233
    %v2306 = vunpack.c.l.b16 %v2234
    %v2307 = vunpack.c.l.b16 %v2235
    %v2308 = vunpack.c.l.b16 %v2236
    %v2309 = vunpack.c.l.b16 %v2237
    %v2310 = vunpack.c.l.b16 %v2238
    %v2311 = vunpack.c.l.b16 %v2239
    %v2312 = vunpack.c.l.b16 %v2240
    %v2313 = vunpack.c.l.b16 %v2241
    %v2314 = vunpack.c.l.b16 %v2242
    %v2315 = vunpack.c.l.b16 %v2243
    %v2316 = vunpack.c.l.b16 %v2244
    %v2317 = vunpack.c.l.b16 %v2245
    %v2318 = vunpack.c.l.b16 %v2246
    %v2319 = vunpack.c.l.b16 %v2247
    %v2320 = vunpack.c.l.b16 %v2248
    %v2321 = vunpack.c.l.b16 %v2249
    %v2322 = vunpack.c.l.b16 %v2250
    %v2323 = vunpack.c.l.b16 %v2251
    %v2324 = vunpack.c.l.b16 %v2252
    %v2325 = vunpack.c.l.b16 %v2253
    %v2326 = vunpack.c.l.b16 %v2254
    %v2327 = vunpack.c.l.b16 %v2255
    %v2328 = vunpack.c.l.b16 %v2256
    %v2329 = vunpack.c.l.b16 %v2257
    %vm2330 = vcmask 1041409
    %v2331 = vsel %vm2330, %v2299, %v2298
    %vm2332 = vcmask 1042434
    %v2333 = vsel %vm2332, %v2300, %v2331
    %vm2334 = vcmask 1043459
    %v2335 = vsel %vm2334, %v2301, %v2333
    %vm2336 = vcmask 1044484
    %v2337 = vsel %vm2336, %v2302, %v2335
    %vm2338 = vcmask 1045509
    %v2339 = vsel %vm2338, %v2303, %v2337
    %vm2340 = vcmask 1046534
    %v2341 = vsel %vm2340, %v2304, %v2339
    %vm2342 = vcmask 1047559
    %v2343 = vsel %vm2342, %v2305, %v2341
    %v2344 = vsel %vm2330, %v2307, %v2306
    %v2345 = vsel %vm2332, %v2308, %v2344
    %v2346 = vsel %vm2334, %v2309, %v2345
    %v2347 = vsel %vm2336, %v2310, %v2346
    %v2348 = vsel %vm2338, %v2311, %v2347
    %v2349 = vsel %vm2340, %v2312, %v2348
    %v2350 = vsel %vm2342, %v2313, %v2349
    %v2351 = vsel %vm2330, %v2315, %v2314
    %v2352 = vsel %vm2332, %v2316, %v2351
    %v2353 = vsel %vm2334, %v2317, %v2352
    %v2354 = vsel %vm2336, %v2318, %v2353
    %v2355 = vsel %vm2338, %v2319, %v2354
    %v2356 = vsel %vm2340, %v2320, %v2355
    %v2357 = vsel %vm2342, %v2321, %v2356
    %v2358 = vsel %vm2330, %v2323, %v2322
    %v2359 = vsel %vm2332, %v2324, %v2358
    %v2360 = vsel %vm2334, %v2325, %v2359
    %v2361 = vsel %vm2336, %v2326, %v2360
    %v2362 = vsel %vm2338, %v2327, %v2361
    %v2363 = vsel %vm2340, %v2328, %v2362
    %v2364 = vsel %vm2342, %v2329, %v2363
    %v2365 = vpack.c.b16 %v2350, %v2343
    %v2366 = vpack.c.b16 %v2364, %v2357
    %v2371 = vunpack.c.l.b16 %v2258
    %v2372 = vunpack.c.l.b16 %v2259
    %v2373 = vunpack.c.l.b16 %v2260
    %v2374 = vunpack.c.l.b16 %v2261
    %v2375 = vpack.c.b16 %v2372, %v2371
    %v2376 = vpack.c.b16 %v2374, %v2373
    %v2380 = vsel %vm887, %v2365, 0
    %v2383 = vsel %vm887, %v2366, 0
    %2385 = vmatpush.bf16.msra.mxu0 0
    %2386 = vmatpush.bf16.msra.mxu0 0
    %2387 = vmatpush.bf16.msra.mxu0 0
    %2388 = vmatpush.bf16.msra.mxu0 0
    %2389 = vmatpush.bf16.msra.mxu0 0
    %2390 = vmatpush.bf16.msra.mxu0 0
    %2391 = vmatpush.bf16.msra.mxu0 %v2376
    %2392 = vmatpush.bf16.msra.mxu0 %v2375
    %2393 = vmatmul.bf16.gmra.mxu0 %v2380
    %v2394 = vpop.f32.mrf.mxu0
    %v2395 = vadd.f32 %v2264, %v2394
    %v2396 = vpop.f32.mrf.mxu0
    %v2397 = vadd.f32 %v2264, %v2396
    %2398 = vmatmul.bf16.gmra.mxu0 %v2383
    %v2399 = vpop.f32.mrf.mxu0
    %v2400 = vadd.f32 %v2264, %v2399
    %v2401 = vpop.f32.mrf.mxu0
    %v2402 = vadd.f32 %v2264, %v2401
    %2403 = vdwg.mxu0
    %v2404 = vld [vmem:[%s4] sm:$0xff]
    %v2405 = vld [vmem:[%s4 + $0x8] sm:$0xff]
    %v2406 = vld [vmem:[%s4 + $0x10] sm:$0xff]
    %v2407 = vld [vmem:[%s4 + $0x18] sm:$0xff]
    %v2408 = vadd.f32 %v2395, %v2404
    %v2409 = vadd.f32 %v2397, %v2405
    %v2410 = vadd.f32 %v2400, %v2406
    %v2411 = vadd.f32 %v2402, %v2407
    %2412 = vst.msk [vmem:[#allocation2] sm:$0xff] %vm457, %v2408
    %2413 = vst.msk [vmem:[#allocation2 + $0x8] sm:$0xff] %vm457, %v2409
    %2414 = vst.msk [vmem:[#allocation2 + $0x10] sm:$0xff] %vm457, %v2410
    %2415 = vst.msk [vmem:[#allocation2 + $0x18] sm:$0xff] %vm457, %v2411
    %v2416 = vld [vmem:[%s17] sm:$0xf]
    %v2417 = vld [vmem:[%s17 + $0x4] sm:$0xf]
    %v2418 = vld [vmem:[%s17 + $0x8] sm:$0xf]
    %v2419 = vld [vmem:[%s17 + $0xc] sm:$0xf]
    %v2420 = vld [vmem:[%s18] sm:$0x1]
    %v2422 = vperm.slane %v2420, 0
    %v2428 = vunpack.c.l.b16 %v2416
    %v2429 = vunpack.c.l.b16 %v2417
    %v2430 = vunpack.c.l.b16 %v2418
    %v2431 = vunpack.c.l.b16 %v2419
    %v2432 = vpack.c.b16 %v2429, %v2428
    %v2433 = vpack.c.b16 %v2431, %v2430
    %2436 = vmatpush.bf16.msra.mxu0 0
    %2437 = vmatpush.bf16.msra.mxu0 0
    %2438 = vmatpush.bf16.msra.mxu0 0
    %2439 = vmatpush.bf16.msra.mxu0 0
    %2440 = vmatpush.bf16.msra.mxu0 0
    %2441 = vmatpush.bf16.msra.mxu0 0
    %2442 = vmatpush.bf16.msra.mxu0 %v2433
    %2443 = vmatpush.bf16.msra.mxu0 %v2432
    %2444 = vmatmul.bf16.gmra.mxu0 %v2380
    %v2445 = vpop.f32.mrf.mxu0
    %v2446 = vadd.f32 %v2422, %v2445
    %v2447 = vpop.f32.mrf.mxu0
    %v2448 = vadd.f32 %v2422, %v2447
    %2449 = vmatmul.bf16.gmra.mxu0 %v2383
    %v2450 = vpop.f32.mrf.mxu0
    %v2451 = vadd.f32 %v2422, %v2450
    %v2452 = vpop.f32.mrf.mxu0
    %v2453 = vadd.f32 %v2422, %v2452
    %2454 = vdwg.mxu0
    %vm2455 = vcmask 195584
    %2456 = vst.msk [vmem:[#allocation4] sm:$0xff] %vm2455, %v2446
    %2457 = vst.msk [vmem:[#allocation4 + $0x8] sm:$0xff] %vm2455, %v2448
    %2458 = vst.msk [vmem:[#allocation4 + $0x10] sm:$0xff] %vm2455, %v2451
    %2459 = vst.msk [vmem:[#allocation4 + $0x18] sm:$0xff] %vm2455, %v2453
    // Predicated region
    $region78: #{_lambda_.11} parent=1 // pred_check
      _
    $region79: #{_lambda_.11} parent=1 // pred_check_branch
      %2461 = sbr.rel (0) target = $region81
    $region80: #{_lambda_.11} parent=1 // pred_region
      %2463 = vsyncadd [#allocation3], 0
      %s2464 = sshll.u32 [#allocation2], 4
      %s2465 = int_to_ptr.vmem [resolvable:$true] %s2464
      %s2466 = sshll.u32 %s19, 4
      %s2467 = int_to_ptr.hbm [resolvable:$true] %s2466
      %2472 = dma.vmem_to_hbm [thread:$0]  %s2465, 512, %s2467, [#allocation3], 128, 128, 8
    $region81: #{_lambda_.11} parent=1 // pred_fallthru
      _
    // Predicated region
    $region82: #{_lambda_.11} parent=1 // pred_check
      _
    $region83: #{_lambda_.11} parent=1 // pred_check_branch
      %2474 = sbr.rel (0) target = $region85
    $region84: #{_lambda_.11} parent=1 // pred_region
      %2476 = vsyncadd [#allocation5], 0
      %s2477 = sshll.u32 [#allocation4], 4
      %s2478 = int_to_ptr.vmem [resolvable:$true] %s2477
      %s2479 = sshll.u32 %s20, 4
      %s2480 = int_to_ptr.hbm [resolvable:$true] %s2479
      %2485 = dma.vmem_to_hbm [thread:$0]  %s2478, 512, %s2480, [#allocation5], 128, 128, 8
    $region85: #{_lambda_.11} parent=1 // pred_fallthru
      _
    // Predicated region
    $region86: #{_lambda_.11} parent=1 // pred_check
      _
    $region87: #{_lambda_.11} parent=1 // pred_check_branch
      %2487 = sbr.rel (0) target = $region89
    $region88: #{_lambda_.11} parent=1 // pred_region
      %2489 = dma.done [#allocation3], 512
    $region89: #{_lambda_.11} parent=1 // pred_fallthru
      _
    // Predicated region
    $region90: #{_lambda_.11} parent=1 // pred_check
      _
    $region91: #{_lambda_.11} parent=1 // pred_check_branch
      %2491 = sbr.rel (0) target = $region93
    $region92: #{_lambda_.11} parent=1 // pred_region
      %2493 = dma.done [#allocation5], 512
    $region93: #{_lambda_.11} parent=1 // pred_fallthru
      _
    %2494 = vsyncpa [#allocation3], 1
    %2495 = vsyncpa [#allocation5], 1

</llo_original>
